<compile_context>
chip_gen: v7x
topology: tpu7x:2x2x1
jax: 0.10.0
libtpu: 0.0.40
codegen_flags: <defaults>
</compile_context>

<pallas_src>
import functools

import jax
import jax.numpy as jnp
from jax.experimental import pallas as pl
from jax.experimental.pallas import tpu as pltpu

H = 50            # logical hidden size (module default)
HP = 128          # lane-padded hidden size: one gate == one 128-lane slab
OFF = 64          # lane offset where layer-1 state lives (disjoint from layer-0's [0, H))
INPUT_SIZE = 1

assert H <= OFF and OFF + H <= HP, "layer-0 / layer-1 lane bands must not overlap"


def _lstm_kernel(x_ref,        # (seq*Bp, 1)    time-major, batch padded to Bp
                 wih0_ref,     # (1, 4*HP)      layer-0 input weights (input_size == 1)
                 b0_ref,       # (1, 4*HP)      layer-0 bias (b_ih + b_hh folded)
                 whh0_ref,     # (HP, 4*HP)     layer-0 recurrent weights
                 w1_ref,       # (HP, 4*HP)     layer-1 combined weights:
                 #                rows [0,H)      = W_ih1 (reads h0 lanes),
                 #                rows [OFF,OFF+H)= W_hh1 (reads h1 lanes),
                 #                gate cols at lane offset OFF inside each slab.
                 b1_ref,       # (1, 4*HP)      layer-1 bias (folded), cols at offset OFF
                 wfc_ref,      # (1, HP)        fc weight, lanes [OFF, OFF+H)
                 bfc_ref,      # (1, 1)
                 out_ref,      # (Bp, 1)
                 xg_s,         # scratch (seq*Bp, 4*HP): hoisted layer-0 input proj
                 *, seq, Bp, Hp):
    f32 = jnp.float32

    # Hoisted layer-0 input projection: input_size == 1, so x @ W_ih0 is a pure
    # broadcast multiply (VPU) computed once for all timesteps; bias folded in.
    xg_s[...] = x_ref[...] * wih0_ref[...] + b0_ref[...]

    # Hoist the layer-1 bias broadcast out of the unrolled loop.
    b1b = jnp.broadcast_to(b1_ref[...], (Bp, 4 * Hp))

    def gates_to_hc(g, c):
        # torch gate order [i, f, g, o]; each slice is exactly one 128-lane slab,
        # so slicing is free (no masked loads / lane shifts).
        i = jax.nn.sigmoid(g[:, 0 * Hp:1 * Hp])
        f = jax.nn.sigmoid(g[:, 1 * Hp:2 * Hp])
        gg = jnp.tanh(g[:, 2 * Hp:3 * Hp])
        o = jax.nn.sigmoid(g[:, 3 * Hp:4 * Hp])
        c_new = f * c + i * gg
        h_new = o * jnp.tanh(c_new)
        return h_new, c_new

    # h/c start at zero (matches torch.zeros in the module's forward).
    h0 = jnp.zeros((Bp, Hp), f32)
    c0 = jnp.zeros((Bp, Hp), f32)
    h1 = jnp.zeros((Bp, Hp), f32)   # real state occupies lanes [OFF, OFF+H)
    c1 = jnp.zeros((Bp, Hp), f32)

    # Fully unrolled recurrence (seq is small & static): the scheduler sees the
    # whole dataflow graph and can overlap layer-1(t) with layer-0(t+1).
    for t in range(seq):
        # Layer 0: only the recurrent matmul remains on the serial critical path.
        g0 = xg_s[t * Bp:(t + 1) * Bp, :] + jnp.dot(
            h0, whh0_ref[...], preferred_element_type=f32)
        h0, c0 = gates_to_hc(g0, c0)

        # Layer 1: h0 lives in lanes [0, H) and h1 in lanes [OFF, OFF+H), so the
        # "concatenation" is a free elementwise add and the fused matmul
        # contracts over K=128 (not 256): half the MXU pushes / weight VMEM.
        g1 = jnp.dot(h0 + h1, w1_ref[...], preferred_element_type=f32) + b1b
        h1, c1 = gates_to_hc(g1, c1)

    # Final Linear(H, 1): VPU multiply + lane reduction instead of an N=1 matmul.
    out_ref[...] = (jnp.sum(h1 * wfc_ref[...], axis=1, keepdims=True)
                    + bfc_ref[...])


@jax.jit
def lstm_model_forward(x, padded_params):
    """x: (batch, seq, 1) float32 -> (batch, 1) float32 (eval-mode semantics)."""
    batch, seq, input_size = x.shape
    assert input_size == INPUT_SIZE
    Bp = ((batch + 7) // 8) * 8          # pad batch up to a full sublane
    Hp = HP

    xt = jnp.transpose(x, (1, 0, 2))     # time-major (seq, batch, 1)
    xt = jnp.pad(xt, ((0, 0), (0, Bp - batch), (0, 0)))
    x2 = xt.reshape(seq * Bp, input_size)

    vmem = pl.BlockSpec(memory_space=pltpu.MemorySpace.VMEM)
    kernel = functools.partial(_lstm_kernel, seq=seq, Bp=Bp, Hp=Hp)
    out = pl.pallas_call(
        kernel,
        out_shape=jax.ShapeDtypeStruct((Bp, 1), jnp.float32),
        in_specs=[vmem] * 8,
        out_specs=vmem,
        scratch_shapes=[pltpu.VMEM((seq * Bp, 4 * Hp), jnp.float32)],
    )(x2,
      padded_params["wih0"], padded_params["b0"], padded_params["whh0"],
      padded_params["w1"], padded_params["b1"],
      padded_params["wfc"], padded_params["bfc"])
    return out[:batch]


def init_params(key, input_size=INPUT_SIZE, hidden_size=H):
    """Uniform(-1/sqrt(H), 1/sqrt(H)) init mirroring torch defaults.
    Weights stored pre-transposed (in_features, 4H) so the kernel does x @ W;
    per-layer biases b_ih + b_hh are folded into a single (1, 4H) bias."""
    Hh = hidden_size
    bound = 1.0 / float(Hh) ** 0.5
    ks = jax.random.split(key, 10)

    def u(k, shape):
        return jax.random.uniform(k, shape, jnp.float32, -bound, bound)

    return {
        "wih0": u(ks[0], (input_size, 4 * Hh)),
        "whh0": u(ks[1], (Hh, 4 * Hh)),
        "b0":   u(ks[2], (1, 4 * Hh)) + u(ks[3], (1, 4 * Hh)),
        "wih1": u(ks[4], (Hh, 4 * Hh)),
        "whh1": u(ks[5], (Hh, 4 * Hh)),
        "b1":   u(ks[6], (1, 4 * Hh)) + u(ks[7], (1, 4 * Hh)),
        "wfc":  u(ks[8], (Hh, 1)),
        "bfc":  u(ks[9], (1, 1)),
    }


def _pad_gate_cols(w, hidden, hp, lane_off=0):
    """(in_dim, 4*hidden) -> (in_dim, 4*hp): gate k's columns land at
    [k*hp + lane_off, k*hp + lane_off + hidden) of its own 128-lane slab."""
    out = jnp.zeros((w.shape[0], 4 * hp), jnp.float32)
    for k in range(4):
        out = out.at[:, k * hp + lane_off:k * hp + lane_off + hidden].set(
            w[:, k * hidden:(k + 1) * hidden])
    return out


def _place_rows(w, rows, row_off=0):
    out = jnp.zeros((rows, w.shape[1]), jnp.float32)
    return out.at[row_off:row_off + w.shape[0], :].set(w)


def prepare_padded_params(params, hidden=H, hp=HP, off=OFF):
    """Lane-pad hidden 50 -> 128; layer-1 state is placed in lanes [off, off+H)
    so layer-0 and layer-1 states share one 128-lane vector without overlap and
    the layer-1 weights fuse into a single (HP, 4*HP) matrix (K=128 contraction).
    Zero weight/bias pads keep all padded h/c lanes exactly zero."""
    wih0 = _pad_gate_cols(params["wih0"], hidden, hp)                     # (1, 4HP)
    whh0 = _place_rows(_pad_gate_cols(params["whh0"], hidden, hp), hp)    # (HP, 4HP)
    b0 = _pad_gate_cols(params["b0"], hidden, hp)                         # (1, 4HP)

    # Layer 1: gate columns at lane offset `off` inside each slab; W_ih1 rows read
    # h0 (lanes [0,H) -> rows [0,H)), W_hh1 rows read h1 (lanes [off,off+H)).
    wih1 = _place_rows(_pad_gate_cols(params["wih1"], hidden, hp, off), hp, 0)
    whh1 = _place_rows(_pad_gate_cols(params["whh1"], hidden, hp, off), hp, off)
    w1 = wih1 + whh1                                                      # (HP, 4HP)
    b1 = _pad_gate_cols(params["b1"], hidden, hp, off)                    # (1, 4HP)

    wfc = jnp.zeros((1, hp), jnp.float32).at[0, off:off + hidden].set(params["wfc"][:, 0])
    return {"wih0": wih0, "whh0": whh0, "b0": b0,
            "w1": w1, "b1": b1, "wfc": wfc, "bfc": params["bfc"]}


def _reference_forward(x, params, hidden=H):
    """Pure-JAX eval-mode reference matching torch.nn.LSTM + Linear semantics."""
    def cell(x_t, h, c, wih, whh, b):
        g = x_t @ wih + h @ whh + b
        i = jax.nn.sigmoid(g[:, 0 * hidden:1 * hidden])
        f = jax.nn.sigmoid(g[:, 1 * hidden:2 * hidden])
        gg = jnp.tanh(g[:, 2 * hidden:3 * hidden])
        o = jax.nn.sigmoid(g[:, 3 * hidden:4 * hidden])
        c = f * c + i * gg
        h = o * jnp.tanh(c)
        return h, c

    batch, seq, _ = x.shape
    h0 = c0 = h1 = c1 = jnp.zeros((batch, hidden), jnp.float32)
    for t in range(seq):
        h0, c0 = cell(x[:, t, :], h0, c0, params["wih0"], params["whh0"], params["b0"])
        h1, c1 = cell(h0, h1, c1, params["wih1"], params["whh1"], params["b1"])
    return h1 @ params["wfc"] + params["bfc"]


if __name__ == "__main__":
    key = jax.random.PRNGKey(0)
    k_param, k_x = jax.random.split(key)

    batch, seq = 2, 8
    params = init_params(k_param)
    padded = prepare_padded_params(params)
    x = jax.random.normal(k_x, (batch, seq, INPUT_SIZE), jnp.float32)

    out = lstm_model_forward(x, padded)
    out = jax.block_until_ready(out)
    assert out.shape == (batch, 1), out.shape

    ref = _reference_forward(x, params)
    assert jnp.allclose(out, ref, atol=1e-4, rtol=1e-3), (out, ref)
    print("KERNEL_OK")
</pallas_src>

<mosaic_0001>
module attributes {stable_mosaic.version = 11 : i64} {
  func.func @_lstm_kernel(%arg0: memref<64x1xf32, #tpu.memory_space<vmem>>, %arg1: memref<1x512xf32, #tpu.memory_space<vmem>>, %arg2: memref<1x512xf32, #tpu.memory_space<vmem>>, %arg3: memref<128x512xf32, #tpu.memory_space<vmem>>, %arg4: memref<128x512xf32, #tpu.memory_space<vmem>>, %arg5: memref<1x512xf32, #tpu.memory_space<vmem>>, %arg6: memref<1x128xf32, #tpu.memory_space<vmem>>, %arg7: memref<1x1xf32, #tpu.memory_space<vmem>>, %arg8: memref<8x1xf32, #tpu.memory_space<vmem>>, %arg9: memref<64x512xf32, #tpu.memory_space<vmem>>) attributes {dimension_semantics = [], scalar_prefetch = 0 : i64, scratch_operands = 1 : i64, tpu.core_type = #tpu.core_type<tc>} {
    %c0 = arith.constant 0 : index
    %c0_0 = arith.constant 0 : index
    %0 = vector.load %arg0[%c0, %c0_0] : memref<64x1xf32, #tpu.memory_space<vmem>>, vector<64x1xf32>
    %c0_1 = arith.constant 0 : index
    %c0_2 = arith.constant 0 : index
    %1 = vector.load %arg1[%c0_1, %c0_2] : memref<1x512xf32, #tpu.memory_space<vmem>>, vector<1x512xf32>
    %2 = vector.broadcast %0 : vector<64x1xf32> to vector<64x512xf32>
    %3 = vector.broadcast %1 : vector<1x512xf32> to vector<64x512xf32>
    %4 = arith.mulf %2, %3 : vector<64x512xf32>
    %c0_3 = arith.constant 0 : index
    %c0_4 = arith.constant 0 : index
    %5 = vector.load %arg2[%c0_3, %c0_4] : memref<1x512xf32, #tpu.memory_space<vmem>>, vector<1x512xf32>
    %6 = vector.broadcast %5 : vector<1x512xf32> to vector<64x512xf32>
    %7 = arith.addf %4, %6 : vector<64x512xf32>
    %c0_5 = arith.constant 0 : index
    %c0_6 = arith.constant 0 : index
    %8 = vector.load %arg9[%c0_5, %c0_6] : memref<64x512xf32, #tpu.memory_space<vmem>>, vector<64x512xf32>
    tpu.vector_store %arg9[%c0_5, %c0_6], %7 {strides = array<i32>} : memref<64x512xf32, #tpu.memory_space<vmem>>, vector<64x512xf32>,
    %c0_7 = arith.constant 0 : index
    %c0_8 = arith.constant 0 : index
    %9 = vector.load %arg5[%c0_7, %c0_8] : memref<1x512xf32, #tpu.memory_space<vmem>>, vector<1x512xf32>
    %10 = vector.shape_cast %9 : vector<1x512xf32> to vector<1x512xf32>
    %11 = vector.broadcast %10 : vector<1x512xf32> to vector<8x512xf32>
    %cst = arith.constant 0.000000e+00 : f32
    %12 = vector.broadcast %cst : f32 to vector<8x128xf32>
    %cst_9 = arith.constant 0.000000e+00 : f32
    %13 = vector.broadcast %cst_9 : f32 to vector<8x128xf32>
    %cst_10 = arith.constant 0.000000e+00 : f32
    %14 = vector.broadcast %cst_10 : f32 to vector<8x128xf32>
    %cst_11 = arith.constant 0.000000e+00 : f32
    %15 = vector.broadcast %cst_11 : f32 to vector<8x128xf32>
    %c0_12 = arith.constant 0 : index
    %c0_13 = arith.constant 0 : index
    %16 = vector.load %arg9[%c0_12, %c0_13] : memref<64x512xf32, #tpu.memory_space<vmem>>, vector<8x512xf32>
    %c0_14 = arith.constant 0 : index
    %c0_15 = arith.constant 0 : index
    %17 = vector.load %arg3[%c0_14, %c0_15] : memref<128x512xf32, #tpu.memory_space<vmem>>, vector<128x512xf32>
    %cst_16 = arith.constant dense<0.000000e+00> : vector<8x512xf32>
    %18 = tpu.matmul %12, %17, %cst_16 {dimension_numbers = #tpu.dot_dimension_numbers<[1], [0], [0], [1], [0, 0, 1, 1], [], []>} : vector<8x128xf32>, vector<128x512xf32>, vector<8x512xf32> -> vector<8x512xf32>
    %19 = arith.addf %16, %18 : vector<8x512xf32>
    %20 = vector.extract_strided_slice %19 {offsets = [0, 0], sizes = [8, 128], strides = [1, 1]} : vector<8x512xf32> to vector<8x128xf32>
    %21 = arith.negf %20 : vector<8x128xf32>
    %22 = math.exp %21 : vector<8x128xf32>
    %cst_17 = arith.constant 1.000000e+00 : f32
    %23 = vector.broadcast %cst_17 : f32 to vector<8x128xf32>
    %24 = arith.addf %23, %22 : vector<8x128xf32>
    %25 = arith.divf %23, %24 : vector<8x128xf32>
    %26 = vector.extract_strided_slice %19 {offsets = [0, 128], sizes = [8, 128], strides = [1, 1]} : vector<8x512xf32> to vector<8x128xf32>
    %27 = arith.negf %26 : vector<8x128xf32>
    %28 = math.exp %27 : vector<8x128xf32>
    %cst_18 = arith.constant 1.000000e+00 : f32
    %29 = vector.broadcast %cst_18 : f32 to vector<8x128xf32>
    %30 = arith.addf %29, %28 : vector<8x128xf32>
    %31 = arith.divf %29, %30 : vector<8x128xf32>
    %32 = vector.extract_strided_slice %19 {offsets = [0, 256], sizes = [8, 128], strides = [1, 1]} : vector<8x512xf32> to vector<8x128xf32>
    %33 = math.tanh %32 : vector<8x128xf32>
    %34 = vector.extract_strided_slice %19 {offsets = [0, 384], sizes = [8, 128], strides = [1, 1]} : vector<8x512xf32> to vector<8x128xf32>
    %35 = arith.negf %34 : vector<8x128xf32>
    %36 = math.exp %35 : vector<8x128xf32>
    %cst_19 = arith.constant 1.000000e+00 : f32
    %37 = vector.broadcast %cst_19 : f32 to vector<8x128xf32>
    %38 = arith.addf %37, %36 : vector<8x128xf32>
    %39 = arith.divf %37, %38 : vector<8x128xf32>
    %40 = arith.mulf %31, %13 : vector<8x128xf32>
    %41 = arith.mulf %25, %33 : vector<8x128xf32>
    %42 = arith.addf %40, %41 : vector<8x128xf32>
    %43 = math.tanh %42 : vector<8x128xf32>
    %44 = arith.mulf %39, %43 : vector<8x128xf32>
    %45 = arith.addf %44, %14 : vector<8x128xf32>
    %c0_20 = arith.constant 0 : index
    %c0_21 = arith.constant 0 : index
    %46 = vector.load %arg4[%c0_20, %c0_21] : memref<128x512xf32, #tpu.memory_space<vmem>>, vector<128x512xf32>
    %cst_22 = arith.constant dense<0.000000e+00> : vector<8x512xf32>
    %47 = tpu.matmul %45, %46, %cst_22 {dimension_numbers = #tpu.dot_dimension_numbers<[1], [0], [0], [1], [0, 0, 1, 1], [], []>} : vector<8x128xf32>, vector<128x512xf32>, vector<8x512xf32> -> vector<8x512xf32>
    %48 = arith.addf %47, %11 : vector<8x512xf32>
    %49 = vector.extract_strided_slice %48 {offsets = [0, 0], sizes = [8, 128], strides = [1, 1]} : vector<8x512xf32> to vector<8x128xf32>
    %50 = arith.negf %49 : vector<8x128xf32>
    %51 = math.exp %50 : vector<8x128xf32>
    %cst_23 = arith.constant 1.000000e+00 : f32
    %52 = vector.broadcast %cst_23 : f32 to vector<8x128xf32>
    %53 = arith.addf %52, %51 : vector<8x128xf32>
    %54 = arith.divf %52, %53 : vector<8x128xf32>
    %55 = vector.extract_strided_slice %48 {offsets = [0, 128], sizes = [8, 128], strides = [1, 1]} : vector<8x512xf32> to vector<8x128xf32>
    %56 = arith.negf %55 : vector<8x128xf32>
    %57 = math.exp %56 : vector<8x128xf32>
    %cst_24 = arith.constant 1.000000e+00 : f32
    %58 = vector.broadcast %cst_24 : f32 to vector<8x128xf32>
    %59 = arith.addf %58, %57 : vector<8x128xf32>
    %60 = arith.divf %58, %59 : vector<8x128xf32>
    %61 = vector.extract_strided_slice %48 {offsets = [0, 256], sizes = [8, 128], strides = [1, 1]} : vector<8x512xf32> to vector<8x128xf32>
    %62 = math.tanh %61 : vector<8x128xf32>
    %63 = vector.extract_strided_slice %48 {offsets = [0, 384], sizes = [8, 128], strides = [1, 1]} : vector<8x512xf32> to vector<8x128xf32>
    %64 = arith.negf %63 : vector<8x128xf32>
    %65 = math.exp %64 : vector<8x128xf32>
    %cst_25 = arith.constant 1.000000e+00 : f32
    %66 = vector.broadcast %cst_25 : f32 to vector<8x128xf32>
    %67 = arith.addf %66, %65 : vector<8x128xf32>
    %68 = arith.divf %66, %67 : vector<8x128xf32>
    %69 = arith.mulf %60, %15 : vector<8x128xf32>
    %70 = arith.mulf %54, %62 : vector<8x128xf32>
    %71 = arith.addf %69, %70 : vector<8x128xf32>
    %72 = math.tanh %71 : vector<8x128xf32>
    %73 = arith.mulf %68, %72 : vector<8x128xf32>
    %c8 = arith.constant 8 : index
    %c0_26 = arith.constant 0 : index
    %74 = vector.load %arg9[%c8, %c0_26] : memref<64x512xf32, #tpu.memory_space<vmem>>, vector<8x512xf32>
    %c0_27 = arith.constant 0 : index
    %c0_28 = arith.constant 0 : index
    %75 = vector.load %arg3[%c0_27, %c0_28] : memref<128x512xf32, #tpu.memory_space<vmem>>, vector<128x512xf32>
    %cst_29 = arith.constant dense<0.000000e+00> : vector<8x512xf32>
    %76 = tpu.matmul %44, %75, %cst_29 {dimension_numbers = #tpu.dot_dimension_numbers<[1], [0], [0], [1], [0, 0, 1, 1], [], []>} : vector<8x128xf32>, vector<128x512xf32>, vector<8x512xf32> -> vector<8x512xf32>
    %77 = arith.addf %74, %76 : vector<8x512xf32>
    %78 = vector.extract_strided_slice %77 {offsets = [0, 0], sizes = [8, 128], strides = [1, 1]} : vector<8x512xf32> to vector<8x128xf32>
    %79 = arith.negf %78 : vector<8x128xf32>
    %80 = math.exp %79 : vector<8x128xf32>
    %cst_30 = arith.constant 1.000000e+00 : f32
    %81 = vector.broadcast %cst_30 : f32 to vector<8x128xf32>
    %82 = arith.addf %81, %80 : vector<8x128xf32>
    %83 = arith.divf %81, %82 : vector<8x128xf32>
    %84 = vector.extract_strided_slice %77 {offsets = [0, 128], sizes = [8, 128], strides = [1, 1]} : vector<8x512xf32> to vector<8x128xf32>
    %85 = arith.negf %84 : vector<8x128xf32>
    %86 = math.exp %85 : vector<8x128xf32>
    %cst_31 = arith.constant 1.000000e+00 : f32
    %87 = vector.broadcast %cst_31 : f32 to vector<8x128xf32>
    %88 = arith.addf %87, %86 : vector<8x128xf32>
    %89 = arith.divf %87, %88 : vector<8x128xf32>
    %90 = vector.extract_strided_slice %77 {offsets = [0, 256], sizes = [8, 128], strides = [1, 1]} : vector<8x512xf32> to vector<8x128xf32>
    %91 = math.tanh %90 : vector<8x128xf32>
    %92 = vector.extract_strided_slice %77 {offsets = [0, 384], sizes = [8, 128], strides = [1, 1]} : vector<8x512xf32> to vector<8x128xf32>
    %93 = arith.negf %92 : vector<8x128xf32>
    %94 = math.exp %93 : vector<8x128xf32>
    %cst_32 = arith.constant 1.000000e+00 : f32
    %95 = vector.broadcast %cst_32 : f32 to vector<8x128xf32>
    %96 = arith.addf %95, %94 : vector<8x128xf32>
    %97 = arith.divf %95, %96 : vector<8x128xf32>
    %98 = arith.mulf %89, %42 : vector<8x128xf32>
    %99 = arith.mulf %83, %91 : vector<8x128xf32>
    %100 = arith.addf %98, %99 : vector<8x128xf32>
    %101 = math.tanh %100 : vector<8x128xf32>
    %102 = arith.mulf %97, %101 : vector<8x128xf32>
    %103 = arith.addf %102, %73 : vector<8x128xf32>
    %c0_33 = arith.constant 0 : index
    %c0_34 = arith.constant 0 : index
    %104 = vector.load %arg4[%c0_33, %c0_34] : memref<128x512xf32, #tpu.memory_space<vmem>>, vector<128x512xf32>
    %cst_35 = arith.constant dense<0.000000e+00> : vector<8x512xf32>
    %105 = tpu.matmul %103, %104, %cst_35 {dimension_numbers = #tpu.dot_dimension_numbers<[1], [0], [0], [1], [0, 0, 1, 1], [], []>} : vector<8x128xf32>, vector<128x512xf32>, vector<8x512xf32> -> vector<8x512xf32>
    %106 = arith.addf %105, %11 : vector<8x512xf32>
    %107 = vector.extract_strided_slice %106 {offsets = [0, 0], sizes = [8, 128], strides = [1, 1]} : vector<8x512xf32> to vector<8x128xf32>
    %108 = arith.negf %107 : vector<8x128xf32>
    %109 = math.exp %108 : vector<8x128xf32>
    %cst_36 = arith.constant 1.000000e+00 : f32
    %110 = vector.broadcast %cst_36 : f32 to vector<8x128xf32>
    %111 = arith.addf %110, %109 : vector<8x128xf32>
    %112 = arith.divf %110, %111 : vector<8x128xf32>
    %113 = vector.extract_strided_slice %106 {offsets = [0, 128], sizes = [8, 128], strides = [1, 1]} : vector<8x512xf32> to vector<8x128xf32>
    %114 = arith.negf %113 : vector<8x128xf32>
    %115 = math.exp %114 : vector<8x128xf32>
    %cst_37 = arith.constant 1.000000e+00 : f32
    %116 = vector.broadcast %cst_37 : f32 to vector<8x128xf32>
    %117 = arith.addf %116, %115 : vector<8x128xf32>
    %118 = arith.divf %116, %117 : vector<8x128xf32>
    %119 = vector.extract_strided_slice %106 {offsets = [0, 256], sizes = [8, 128], strides = [1, 1]} : vector<8x512xf32> to vector<8x128xf32>
    %120 = math.tanh %119 : vector<8x128xf32>
    %121 = vector.extract_strided_slice %106 {offsets = [0, 384], sizes = [8, 128], strides = [1, 1]} : vector<8x512xf32> to vector<8x128xf32>
    %122 = arith.negf %121 : vector<8x128xf32>
    %123 = math.exp %122 : vector<8x128xf32>
    %cst_38 = arith.constant 1.000000e+00 : f32
    %124 = vector.broadcast %cst_38 : f32 to vector<8x128xf32>
    %125 = arith.addf %124, %123 : vector<8x128xf32>
    %126 = arith.divf %124, %125 : vector<8x128xf32>
    %127 = arith.mulf %118, %71 : vector<8x128xf32>
    %128 = arith.mulf %112, %120 : vector<8x128xf32>
    %129 = arith.addf %127, %128 : vector<8x128xf32>
    %130 = math.tanh %129 : vector<8x128xf32>
    %131 = arith.mulf %126, %130 : vector<8x128xf32>
    %c16 = arith.constant 16 : index
    %c0_39 = arith.constant 0 : index
    %132 = vector.load %arg9[%c16, %c0_39] : memref<64x512xf32, #tpu.memory_space<vmem>>, vector<8x512xf32>
    %c0_40 = arith.constant 0 : index
    %c0_41 = arith.constant 0 : index
    %133 = vector.load %arg3[%c0_40, %c0_41] : memref<128x512xf32, #tpu.memory_space<vmem>>, vector<128x512xf32>
    %cst_42 = arith.constant dense<0.000000e+00> : vector<8x512xf32>
    %134 = tpu.matmul %102, %133, %cst_42 {dimension_numbers = #tpu.dot_dimension_numbers<[1], [0], [0], [1], [0, 0, 1, 1], [], []>} : vector<8x128xf32>, vector<128x512xf32>, vector<8x512xf32> -> vector<8x512xf32>
    %135 = arith.addf %132, %134 : vector<8x512xf32>
    %136 = vector.extract_strided_slice %135 {offsets = [0, 0], sizes = [8, 128], strides = [1, 1]} : vector<8x512xf32> to vector<8x128xf32>
    %137 = arith.negf %136 : vector<8x128xf32>
    %138 = math.exp %137 : vector<8x128xf32>
    %cst_43 = arith.constant 1.000000e+00 : f32
    %139 = vector.broadcast %cst_43 : f32 to vector<8x128xf32>
    %140 = arith.addf %139, %138 : vector<8x128xf32>
    %141 = arith.divf %139, %140 : vector<8x128xf32>
    %142 = vector.extract_strided_slice %135 {offsets = [0, 128], sizes = [8, 128], strides = [1, 1]} : vector<8x512xf32> to vector<8x128xf32>
    %143 = arith.negf %142 : vector<8x128xf32>
    %144 = math.exp %143 : vector<8x128xf32>
    %cst_44 = arith.constant 1.000000e+00 : f32
    %145 = vector.broadcast %cst_44 : f32 to vector<8x128xf32>
    %146 = arith.addf %145, %144 : vector<8x128xf32>
    %147 = arith.divf %145, %146 : vector<8x128xf32>
    %148 = vector.extract_strided_slice %135 {offsets = [0, 256], sizes = [8, 128], strides = [1, 1]} : vector<8x512xf32> to vector<8x128xf32>
    %149 = math.tanh %148 : vector<8x128xf32>
    %150 = vector.extract_strided_slice %135 {offsets = [0, 384], sizes = [8, 128], strides = [1, 1]} : vector<8x512xf32> to vector<8x128xf32>
    %151 = arith.negf %150 : vector<8x128xf32>
    %152 = math.exp %151 : vector<8x128xf32>
    %cst_45 = arith.constant 1.000000e+00 : f32
    %153 = vector.broadcast %cst_45 : f32 to vector<8x128xf32>
    %154 = arith.addf %153, %152 : vector<8x128xf32>
    %155 = arith.divf %153, %154 : vector<8x128xf32>
    %156 = arith.mulf %147, %100 : vector<8x128xf32>
    %157 = arith.mulf %141, %149 : vector<8x128xf32>
    %158 = arith.addf %156, %157 : vector<8x128xf32>
    %159 = math.tanh %158 : vector<8x128xf32>
    %160 = arith.mulf %155, %159 : vector<8x128xf32>
    %161 = arith.addf %160, %131 : vector<8x128xf32>
    %c0_46 = arith.constant 0 : index
    %c0_47 = arith.constant 0 : index
    %162 = vector.load %arg4[%c0_46, %c0_47] : memref<128x512xf32, #tpu.memory_space<vmem>>, vector<128x512xf32>
    %cst_48 = arith.constant dense<0.000000e+00> : vector<8x512xf32>
    %163 = tpu.matmul %161, %162, %cst_48 {dimension_numbers = #tpu.dot_dimension_numbers<[1], [0], [0], [1], [0, 0, 1, 1], [], []>} : vector<8x128xf32>, vector<128x512xf32>, vector<8x512xf32> -> vector<8x512xf32>
    %164 = arith.addf %163, %11 : vector<8x512xf32>
    %165 = vector.extract_strided_slice %164 {offsets = [0, 0], sizes = [8, 128], strides = [1, 1]} : vector<8x512xf32> to vector<8x128xf32>
    %166 = arith.negf %165 : vector<8x128xf32>
    %167 = math.exp %166 : vector<8x128xf32>
    %cst_49 = arith.constant 1.000000e+00 : f32
    %168 = vector.broadcast %cst_49 : f32 to vector<8x128xf32>
    %169 = arith.addf %168, %167 : vector<8x128xf32>
    %170 = arith.divf %168, %169 : vector<8x128xf32>
    %171 = vector.extract_strided_slice %164 {offsets = [0, 128], sizes = [8, 128], strides = [1, 1]} : vector<8x512xf32> to vector<8x128xf32>
    %172 = arith.negf %171 : vector<8x128xf32>
    %173 = math.exp %172 : vector<8x128xf32>
    %cst_50 = arith.constant 1.000000e+00 : f32
    %174 = vector.broadcast %cst_50 : f32 to vector<8x128xf32>
    %175 = arith.addf %174, %173 : vector<8x128xf32>
    %176 = arith.divf %174, %175 : vector<8x128xf32>
    %177 = vector.extract_strided_slice %164 {offsets = [0, 256], sizes = [8, 128], strides = [1, 1]} : vector<8x512xf32> to vector<8x128xf32>
    %178 = math.tanh %177 : vector<8x128xf32>
    %179 = vector.extract_strided_slice %164 {offsets = [0, 384], sizes = [8, 128], strides = [1, 1]} : vector<8x512xf32> to vector<8x128xf32>
    %180 = arith.negf %179 : vector<8x128xf32>
    %181 = math.exp %180 : vector<8x128xf32>
    %cst_51 = arith.constant 1.000000e+00 : f32
    %182 = vector.broadcast %cst_51 : f32 to vector<8x128xf32>
    %183 = arith.addf %182, %181 : vector<8x128xf32>
    %184 = arith.divf %182, %183 : vector<8x128xf32>
    %185 = arith.mulf %176, %129 : vector<8x128xf32>
    %186 = arith.mulf %170, %178 : vector<8x128xf32>
    %187 = arith.addf %185, %186 : vector<8x128xf32>
    %188 = math.tanh %187 : vector<8x128xf32>
    %189 = arith.mulf %184, %188 : vector<8x128xf32>
    %c24 = arith.constant 24 : index
    %c0_52 = arith.constant 0 : index
    %190 = vector.load %arg9[%c24, %c0_52] : memref<64x512xf32, #tpu.memory_space<vmem>>, vector<8x512xf32>
    %c0_53 = arith.constant 0 : index
    %c0_54 = arith.constant 0 : index
    %191 = vector.load %arg3[%c0_53, %c0_54] : memref<128x512xf32, #tpu.memory_space<vmem>>, vector<128x512xf32>
    %cst_55 = arith.constant dense<0.000000e+00> : vector<8x512xf32>
    %192 = tpu.matmul %160, %191, %cst_55 {dimension_numbers = #tpu.dot_dimension_numbers<[1], [0], [0], [1], [0, 0, 1, 1], [], []>} : vector<8x128xf32>, vector<128x512xf32>, vector<8x512xf32> -> vector<8x512xf32>
    %193 = arith.addf %190, %192 : vector<8x512xf32>
    %194 = vector.extract_strided_slice %193 {offsets = [0, 0], sizes = [8, 128], strides = [1, 1]} : vector<8x512xf32> to vector<8x128xf32>
    %195 = arith.negf %194 : vector<8x128xf32>
    %196 = math.exp %195 : vector<8x128xf32>
    %cst_56 = arith.constant 1.000000e+00 : f32
    %197 = vector.broadcast %cst_56 : f32 to vector<8x128xf32>
    %198 = arith.addf %197, %196 : vector<8x128xf32>
    %199 = arith.divf %197, %198 : vector<8x128xf32>
    %200 = vector.extract_strided_slice %193 {offsets = [0, 128], sizes = [8, 128], strides = [1, 1]} : vector<8x512xf32> to vector<8x128xf32>
    %201 = arith.negf %200 : vector<8x128xf32>
    %202 = math.exp %201 : vector<8x128xf32>
    %cst_57 = arith.constant 1.000000e+00 : f32
    %203 = vector.broadcast %cst_57 : f32 to vector<8x128xf32>
    %204 = arith.addf %203, %202 : vector<8x128xf32>
    %205 = arith.divf %203, %204 : vector<8x128xf32>
    %206 = vector.extract_strided_slice %193 {offsets = [0, 256], sizes = [8, 128], strides = [1, 1]} : vector<8x512xf32> to vector<8x128xf32>
    %207 = math.tanh %206 : vector<8x128xf32>
    %208 = vector.extract_strided_slice %193 {offsets = [0, 384], sizes = [8, 128], strides = [1, 1]} : vector<8x512xf32> to vector<8x128xf32>
    %209 = arith.negf %208 : vector<8x128xf32>
    %210 = math.exp %209 : vector<8x128xf32>
    %cst_58 = arith.constant 1.000000e+00 : f32
    %211 = vector.broadcast %cst_58 : f32 to vector<8x128xf32>
    %212 = arith.addf %211, %210 : vector<8x128xf32>
    %213 = arith.divf %211, %212 : vector<8x128xf32>
    %214 = arith.mulf %205, %158 : vector<8x128xf32>
    %215 = arith.mulf %199, %207 : vector<8x128xf32>
    %216 = arith.addf %214, %215 : vector<8x128xf32>
    %217 = math.tanh %216 : vector<8x128xf32>
    %218 = arith.mulf %213, %217 : vector<8x128xf32>
    %219 = arith.addf %218, %189 : vector<8x128xf32>
    %c0_59 = arith.constant 0 : index
    %c0_60 = arith.constant 0 : index
    %220 = vector.load %arg4[%c0_59, %c0_60] : memref<128x512xf32, #tpu.memory_space<vmem>>, vector<128x512xf32>
    %cst_61 = arith.constant dense<0.000000e+00> : vector<8x512xf32>
    %221 = tpu.matmul %219, %220, %cst_61 {dimension_numbers = #tpu.dot_dimension_numbers<[1], [0], [0], [1], [0, 0, 1, 1], [], []>} : vector<8x128xf32>, vector<128x512xf32>, vector<8x512xf32> -> vector<8x512xf32>
    %222 = arith.addf %221, %11 : vector<8x512xf32>
    %223 = vector.extract_strided_slice %222 {offsets = [0, 0], sizes = [8, 128], strides = [1, 1]} : vector<8x512xf32> to vector<8x128xf32>
    %224 = arith.negf %223 : vector<8x128xf32>
    %225 = math.exp %224 : vector<8x128xf32>
    %cst_62 = arith.constant 1.000000e+00 : f32
    %226 = vector.broadcast %cst_62 : f32 to vector<8x128xf32>
    %227 = arith.addf %226, %225 : vector<8x128xf32>
    %228 = arith.divf %226, %227 : vector<8x128xf32>
    %229 = vector.extract_strided_slice %222 {offsets = [0, 128], sizes = [8, 128], strides = [1, 1]} : vector<8x512xf32> to vector<8x128xf32>
    %230 = arith.negf %229 : vector<8x128xf32>
    %231 = math.exp %230 : vector<8x128xf32>
    %cst_63 = arith.constant 1.000000e+00 : f32
    %232 = vector.broadcast %cst_63 : f32 to vector<8x128xf32>
    %233 = arith.addf %232, %231 : vector<8x128xf32>
    %234 = arith.divf %232, %233 : vector<8x128xf32>
    %235 = vector.extract_strided_slice %222 {offsets = [0, 256], sizes = [8, 128], strides = [1, 1]} : vector<8x512xf32> to vector<8x128xf32>
    %236 = math.tanh %235 : vector<8x128xf32>
    %237 = vector.extract_strided_slice %222 {offsets = [0, 384], sizes = [8, 128], strides = [1, 1]} : vector<8x512xf32> to vector<8x128xf32>
    %238 = arith.negf %237 : vector<8x128xf32>
    %239 = math.exp %238 : vector<8x128xf32>
    %cst_64 = arith.constant 1.000000e+00 : f32
    %240 = vector.broadcast %cst_64 : f32 to vector<8x128xf32>
    %241 = arith.addf %240, %239 : vector<8x128xf32>
    %242 = arith.divf %240, %241 : vector<8x128xf32>
    %243 = arith.mulf %234, %187 : vector<8x128xf32>
    %244 = arith.mulf %228, %236 : vector<8x128xf32>
    %245 = arith.addf %243, %244 : vector<8x128xf32>
    %246 = math.tanh %245 : vector<8x128xf32>
    %247 = arith.mulf %242, %246 : vector<8x128xf32>
    %c32 = arith.constant 32 : index
    %c0_65 = arith.constant 0 : index
    %248 = vector.load %arg9[%c32, %c0_65] : memref<64x512xf32, #tpu.memory_space<vmem>>, vector<8x512xf32>
    %c0_66 = arith.constant 0 : index
    %c0_67 = arith.constant 0 : index
    %249 = vector.load %arg3[%c0_66, %c0_67] : memref<128x512xf32, #tpu.memory_space<vmem>>, vector<128x512xf32>
    %cst_68 = arith.constant dense<0.000000e+00> : vector<8x512xf32>
    %250 = tpu.matmul %218, %249, %cst_68 {dimension_numbers = #tpu.dot_dimension_numbers<[1], [0], [0], [1], [0, 0, 1, 1], [], []>} : vector<8x128xf32>, vector<128x512xf32>, vector<8x512xf32> -> vector<8x512xf32>
    %251 = arith.addf %248, %250 : vector<8x512xf32>
    %252 = vector.extract_strided_slice %251 {offsets = [0, 0], sizes = [8, 128], strides = [1, 1]} : vector<8x512xf32> to vector<8x128xf32>
    %253 = arith.negf %252 : vector<8x128xf32>
    %254 = math.exp %253 : vector<8x128xf32>
    %cst_69 = arith.constant 1.000000e+00 : f32
    %255 = vector.broadcast %cst_69 : f32 to vector<8x128xf32>
    %256 = arith.addf %255, %254 : vector<8x128xf32>
    %257 = arith.divf %255, %256 : vector<8x128xf32>
    %258 = vector.extract_strided_slice %251 {offsets = [0, 128], sizes = [8, 128], strides = [1, 1]} : vector<8x512xf32> to vector<8x128xf32>
    %259 = arith.negf %258 : vector<8x128xf32>
    %260 = math.exp %259 : vector<8x128xf32>
    %cst_70 = arith.constant 1.000000e+00 : f32
    %261 = vector.broadcast %cst_70 : f32 to vector<8x128xf32>
    %262 = arith.addf %261, %260 : vector<8x128xf32>
    %263 = arith.divf %261, %262 : vector<8x128xf32>
    %264 = vector.extract_strided_slice %251 {offsets = [0, 256], sizes = [8, 128], strides = [1, 1]} : vector<8x512xf32> to vector<8x128xf32>
    %265 = math.tanh %264 : vector<8x128xf32>
    %266 = vector.extract_strided_slice %251 {offsets = [0, 384], sizes = [8, 128], strides = [1, 1]} : vector<8x512xf32> to vector<8x128xf32>
    %267 = arith.negf %266 : vector<8x128xf32>
    %268 = math.exp %267 : vector<8x128xf32>
    %cst_71 = arith.constant 1.000000e+00 : f32
    %269 = vector.broadcast %cst_71 : f32 to vector<8x128xf32>
    %270 = arith.addf %269, %268 : vector<8x128xf32>
    %271 = arith.divf %269, %270 : vector<8x128xf32>
    %272 = arith.mulf %263, %216 : vector<8x128xf32>
    %273 = arith.mulf %257, %265 : vector<8x128xf32>
    %274 = arith.addf %272, %273 : vector<8x128xf32>
    %275 = math.tanh %274 : vector<8x128xf32>
    %276 = arith.mulf %271, %275 : vector<8x128xf32>
    %277 = arith.addf %276, %247 : vector<8x128xf32>
    %c0_72 = arith.constant 0 : index
    %c0_73 = arith.constant 0 : index
    %278 = vector.load %arg4[%c0_72, %c0_73] : memref<128x512xf32, #tpu.memory_space<vmem>>, vector<128x512xf32>
    %cst_74 = arith.constant dense<0.000000e+00> : vector<8x512xf32>
    %279 = tpu.matmul %277, %278, %cst_74 {dimension_numbers = #tpu.dot_dimension_numbers<[1], [0], [0], [1], [0, 0, 1, 1], [], []>} : vector<8x128xf32>, vector<128x512xf32>, vector<8x512xf32> -> vector<8x512xf32>
    %280 = arith.addf %279, %11 : vector<8x512xf32>
    %281 = vector.extract_strided_slice %280 {offsets = [0, 0], sizes = [8, 128], strides = [1, 1]} : vector<8x512xf32> to vector<8x128xf32>
    %282 = arith.negf %281 : vector<8x128xf32>
    %283 = math.exp %282 : vector<8x128xf32>
    %cst_75 = arith.constant 1.000000e+00 : f32
    %284 = vector.broadcast %cst_75 : f32 to vector<8x128xf32>
    %285 = arith.addf %284, %283 : vector<8x128xf32>
    %286 = arith.divf %284, %285 : vector<8x128xf32>
    %287 = vector.extract_strided_slice %280 {offsets = [0, 128], sizes = [8, 128], strides = [1, 1]} : vector<8x512xf32> to vector<8x128xf32>
    %288 = arith.negf %287 : vector<8x128xf32>
    %289 = math.exp %288 : vector<8x128xf32>
    %cst_76 = arith.constant 1.000000e+00 : f32
    %290 = vector.broadcast %cst_76 : f32 to vector<8x128xf32>
    %291 = arith.addf %290, %289 : vector<8x128xf32>
    %292 = arith.divf %290, %291 : vector<8x128xf32>
    %293 = vector.extract_strided_slice %280 {offsets = [0, 256], sizes = [8, 128], strides = [1, 1]} : vector<8x512xf32> to vector<8x128xf32>
    %294 = math.tanh %293 : vector<8x128xf32>
    %295 = vector.extract_strided_slice %280 {offsets = [0, 384], sizes = [8, 128], strides = [1, 1]} : vector<8x512xf32> to vector<8x128xf32>
    %296 = arith.negf %295 : vector<8x128xf32>
    %297 = math.exp %296 : vector<8x128xf32>
    %cst_77 = arith.constant 1.000000e+00 : f32
    %298 = vector.broadcast %cst_77 : f32 to vector<8x128xf32>
    %299 = arith.addf %298, %297 : vector<8x128xf32>
    %300 = arith.divf %298, %299 : vector<8x128xf32>
    %301 = arith.mulf %292, %245 : vector<8x128xf32>
    %302 = arith.mulf %286, %294 : vector<8x128xf32>
    %303 = arith.addf %301, %302 : vector<8x128xf32>
    %304 = math.tanh %303 : vector<8x128xf32>
    %305 = arith.mulf %300, %304 : vector<8x128xf32>
    %c40 = arith.constant 40 : index
    %c0_78 = arith.constant 0 : index
    %306 = vector.load %arg9[%c40, %c0_78] : memref<64x512xf32, #tpu.memory_space<vmem>>, vector<8x512xf32>
    %c0_79 = arith.constant 0 : index
    %c0_80 = arith.constant 0 : index
    %307 = vector.load %arg3[%c0_79, %c0_80] : memref<128x512xf32, #tpu.memory_space<vmem>>, vector<128x512xf32>
    %cst_81 = arith.constant dense<0.000000e+00> : vector<8x512xf32>
    %308 = tpu.matmul %276, %307, %cst_81 {dimension_numbers = #tpu.dot_dimension_numbers<[1], [0], [0], [1], [0, 0, 1, 1], [], []>} : vector<8x128xf32>, vector<128x512xf32>, vector<8x512xf32> -> vector<8x512xf32>
    %309 = arith.addf %306, %308 : vector<8x512xf32>
    %310 = vector.extract_strided_slice %309 {offsets = [0, 0], sizes = [8, 128], strides = [1, 1]} : vector<8x512xf32> to vector<8x128xf32>
    %311 = arith.negf %310 : vector<8x128xf32>
    %312 = math.exp %311 : vector<8x128xf32>
    %cst_82 = arith.constant 1.000000e+00 : f32
    %313 = vector.broadcast %cst_82 : f32 to vector<8x128xf32>
    %314 = arith.addf %313, %312 : vector<8x128xf32>
    %315 = arith.divf %313, %314 : vector<8x128xf32>
    %316 = vector.extract_strided_slice %309 {offsets = [0, 128], sizes = [8, 128], strides = [1, 1]} : vector<8x512xf32> to vector<8x128xf32>
    %317 = arith.negf %316 : vector<8x128xf32>
    %318 = math.exp %317 : vector<8x128xf32>
    %cst_83 = arith.constant 1.000000e+00 : f32
    %319 = vector.broadcast %cst_83 : f32 to vector<8x128xf32>
    %320 = arith.addf %319, %318 : vector<8x128xf32>
    %321 = arith.divf %319, %320 : vector<8x128xf32>
    %322 = vector.extract_strided_slice %309 {offsets = [0, 256], sizes = [8, 128], strides = [1, 1]} : vector<8x512xf32> to vector<8x128xf32>
    %323 = math.tanh %322 : vector<8x128xf32>
    %324 = vector.extract_strided_slice %309 {offsets = [0, 384], sizes = [8, 128], strides = [1, 1]} : vector<8x512xf32> to vector<8x128xf32>
    %325 = arith.negf %324 : vector<8x128xf32>
    %326 = math.exp %325 : vector<8x128xf32>
    %cst_84 = arith.constant 1.000000e+00 : f32
    %327 = vector.broadcast %cst_84 : f32 to vector<8x128xf32>
    %328 = arith.addf %327, %326 : vector<8x128xf32>
    %329 = arith.divf %327, %328 : vector<8x128xf32>
    %330 = arith.mulf %321, %274 : vector<8x128xf32>
    %331 = arith.mulf %315, %323 : vector<8x128xf32>
    %332 = arith.addf %330, %331 : vector<8x128xf32>
    %333 = math.tanh %332 : vector<8x128xf32>
    %334 = arith.mulf %329, %333 : vector<8x128xf32>
    %335 = arith.addf %334, %305 : vector<8x128xf32>
    %c0_85 = arith.constant 0 : index
    %c0_86 = arith.constant 0 : index
    %336 = vector.load %arg4[%c0_85, %c0_86] : memref<128x512xf32, #tpu.memory_space<vmem>>, vector<128x512xf32>
    %cst_87 = arith.constant dense<0.000000e+00> : vector<8x512xf32>
    %337 = tpu.matmul %335, %336, %cst_87 {dimension_numbers = #tpu.dot_dimension_numbers<[1], [0], [0], [1], [0, 0, 1, 1], [], []>} : vector<8x128xf32>, vector<128x512xf32>, vector<8x512xf32> -> vector<8x512xf32>
    %338 = arith.addf %337, %11 : vector<8x512xf32>
    %339 = vector.extract_strided_slice %338 {offsets = [0, 0], sizes = [8, 128], strides = [1, 1]} : vector<8x512xf32> to vector<8x128xf32>
    %340 = arith.negf %339 : vector<8x128xf32>
    %341 = math.exp %340 : vector<8x128xf32>
    %cst_88 = arith.constant 1.000000e+00 : f32
    %342 = vector.broadcast %cst_88 : f32 to vector<8x128xf32>
    %343 = arith.addf %342, %341 : vector<8x128xf32>
    %344 = arith.divf %342, %343 : vector<8x128xf32>
    %345 = vector.extract_strided_slice %338 {offsets = [0, 128], sizes = [8, 128], strides = [1, 1]} : vector<8x512xf32> to vector<8x128xf32>
    %346 = arith.negf %345 : vector<8x128xf32>
    %347 = math.exp %346 : vector<8x128xf32>
    %cst_89 = arith.constant 1.000000e+00 : f32
    %348 = vector.broadcast %cst_89 : f32 to vector<8x128xf32>
    %349 = arith.addf %348, %347 : vector<8x128xf32>
    %350 = arith.divf %348, %349 : vector<8x128xf32>
    %351 = vector.extract_strided_slice %338 {offsets = [0, 256], sizes = [8, 128], strides = [1, 1]} : vector<8x512xf32> to vector<8x128xf32>
    %352 = math.tanh %351 : vector<8x128xf32>
    %353 = vector.extract_strided_slice %338 {offsets = [0, 384], sizes = [8, 128], strides = [1, 1]} : vector<8x512xf32> to vector<8x128xf32>
    %354 = arith.negf %353 : vector<8x128xf32>
    %355 = math.exp %354 : vector<8x128xf32>
    %cst_90 = arith.constant 1.000000e+00 : f32
    %356 = vector.broadcast %cst_90 : f32 to vector<8x128xf32>
    %357 = arith.addf %356, %355 : vector<8x128xf32>
    %358 = arith.divf %356, %357 : vector<8x128xf32>
    %359 = arith.mulf %350, %303 : vector<8x128xf32>
    %360 = arith.mulf %344, %352 : vector<8x128xf32>
    %361 = arith.addf %359, %360 : vector<8x128xf32>
    %362 = math.tanh %361 : vector<8x128xf32>
    %363 = arith.mulf %358, %362 : vector<8x128xf32>
    %c48 = arith.constant 48 : index
    %c0_91 = arith.constant 0 : index
    %364 = vector.load %arg9[%c48, %c0_91] : memref<64x512xf32, #tpu.memory_space<vmem>>, vector<8x512xf32>
    %c0_92 = arith.constant 0 : index
    %c0_93 = arith.constant 0 : index
    %365 = vector.load %arg3[%c0_92, %c0_93] : memref<128x512xf32, #tpu.memory_space<vmem>>, vector<128x512xf32>
    %cst_94 = arith.constant dense<0.000000e+00> : vector<8x512xf32>
    %366 = tpu.matmul %334, %365, %cst_94 {dimension_numbers = #tpu.dot_dimension_numbers<[1], [0], [0], [1], [0, 0, 1, 1], [], []>} : vector<8x128xf32>, vector<128x512xf32>, vector<8x512xf32> -> vector<8x512xf32>
    %367 = arith.addf %364, %366 : vector<8x512xf32>
    %368 = vector.extract_strided_slice %367 {offsets = [0, 0], sizes = [8, 128], strides = [1, 1]} : vector<8x512xf32> to vector<8x128xf32>
    %369 = arith.negf %368 : vector<8x128xf32>
    %370 = math.exp %369 : vector<8x128xf32>
    %cst_95 = arith.constant 1.000000e+00 : f32
    %371 = vector.broadcast %cst_95 : f32 to vector<8x128xf32>
    %372 = arith.addf %371, %370 : vector<8x128xf32>
    %373 = arith.divf %371, %372 : vector<8x128xf32>
    %374 = vector.extract_strided_slice %367 {offsets = [0, 128], sizes = [8, 128], strides = [1, 1]} : vector<8x512xf32> to vector<8x128xf32>
    %375 = arith.negf %374 : vector<8x128xf32>
    %376 = math.exp %375 : vector<8x128xf32>
    %cst_96 = arith.constant 1.000000e+00 : f32
    %377 = vector.broadcast %cst_96 : f32 to vector<8x128xf32>
    %378 = arith.addf %377, %376 : vector<8x128xf32>
    %379 = arith.divf %377, %378 : vector<8x128xf32>
    %380 = vector.extract_strided_slice %367 {offsets = [0, 256], sizes = [8, 128], strides = [1, 1]} : vector<8x512xf32> to vector<8x128xf32>
    %381 = math.tanh %380 : vector<8x128xf32>
    %382 = vector.extract_strided_slice %367 {offsets = [0, 384], sizes = [8, 128], strides = [1, 1]} : vector<8x512xf32> to vector<8x128xf32>
    %383 = arith.negf %382 : vector<8x128xf32>
    %384 = math.exp %383 : vector<8x128xf32>
    %cst_97 = arith.constant 1.000000e+00 : f32
    %385 = vector.broadcast %cst_97 : f32 to vector<8x128xf32>
    %386 = arith.addf %385, %384 : vector<8x128xf32>
    %387 = arith.divf %385, %386 : vector<8x128xf32>
    %388 = arith.mulf %379, %332 : vector<8x128xf32>
    %389 = arith.mulf %373, %381 : vector<8x128xf32>
    %390 = arith.addf %388, %389 : vector<8x128xf32>
    %391 = math.tanh %390 : vector<8x128xf32>
    %392 = arith.mulf %387, %391 : vector<8x128xf32>
    %393 = arith.addf %392, %363 : vector<8x128xf32>
    %c0_98 = arith.constant 0 : index
    %c0_99 = arith.constant 0 : index
    %394 = vector.load %arg4[%c0_98, %c0_99] : memref<128x512xf32, #tpu.memory_space<vmem>>, vector<128x512xf32>
    %cst_100 = arith.constant dense<0.000000e+00> : vector<8x512xf32>
    %395 = tpu.matmul %393, %394, %cst_100 {dimension_numbers = #tpu.dot_dimension_numbers<[1], [0], [0], [1], [0, 0, 1, 1], [], []>} : vector<8x128xf32>, vector<128x512xf32>, vector<8x512xf32> -> vector<8x512xf32>
    %396 = arith.addf %395, %11 : vector<8x512xf32>
    %397 = vector.extract_strided_slice %396 {offsets = [0, 0], sizes = [8, 128], strides = [1, 1]} : vector<8x512xf32> to vector<8x128xf32>
    %398 = arith.negf %397 : vector<8x128xf32>
    %399 = math.exp %398 : vector<8x128xf32>
    %cst_101 = arith.constant 1.000000e+00 : f32
    %400 = vector.broadcast %cst_101 : f32 to vector<8x128xf32>
    %401 = arith.addf %400, %399 : vector<8x128xf32>
    %402 = arith.divf %400, %401 : vector<8x128xf32>
    %403 = vector.extract_strided_slice %396 {offsets = [0, 128], sizes = [8, 128], strides = [1, 1]} : vector<8x512xf32> to vector<8x128xf32>
    %404 = arith.negf %403 : vector<8x128xf32>
    %405 = math.exp %404 : vector<8x128xf32>
    %cst_102 = arith.constant 1.000000e+00 : f32
    %406 = vector.broadcast %cst_102 : f32 to vector<8x128xf32>
    %407 = arith.addf %406, %405 : vector<8x128xf32>
    %408 = arith.divf %406, %407 : vector<8x128xf32>
    %409 = vector.extract_strided_slice %396 {offsets = [0, 256], sizes = [8, 128], strides = [1, 1]} : vector<8x512xf32> to vector<8x128xf32>
    %410 = math.tanh %409 : vector<8x128xf32>
    %411 = vector.extract_strided_slice %396 {offsets = [0, 384], sizes = [8, 128], strides = [1, 1]} : vector<8x512xf32> to vector<8x128xf32>
    %412 = arith.negf %411 : vector<8x128xf32>
    %413 = math.exp %412 : vector<8x128xf32>
    %cst_103 = arith.constant 1.000000e+00 : f32
    %414 = vector.broadcast %cst_103 : f32 to vector<8x128xf32>
    %415 = arith.addf %414, %413 : vector<8x128xf32>
    %416 = arith.divf %414, %415 : vector<8x128xf32>
    %417 = arith.mulf %408, %361 : vector<8x128xf32>
    %418 = arith.mulf %402, %410 : vector<8x128xf32>
    %419 = arith.addf %417, %418 : vector<8x128xf32>
    %420 = math.tanh %419 : vector<8x128xf32>
    %421 = arith.mulf %416, %420 : vector<8x128xf32>
    %c56 = arith.constant 56 : index
    %c0_104 = arith.constant 0 : index
    %422 = vector.load %arg9[%c56, %c0_104] : memref<64x512xf32, #tpu.memory_space<vmem>>, vector<8x512xf32>
    %c0_105 = arith.constant 0 : index
    %c0_106 = arith.constant 0 : index
    %423 = vector.load %arg3[%c0_105, %c0_106] : memref<128x512xf32, #tpu.memory_space<vmem>>, vector<128x512xf32>
    %cst_107 = arith.constant dense<0.000000e+00> : vector<8x512xf32>
    %424 = tpu.matmul %392, %423, %cst_107 {dimension_numbers = #tpu.dot_dimension_numbers<[1], [0], [0], [1], [0, 0, 1, 1], [], []>} : vector<8x128xf32>, vector<128x512xf32>, vector<8x512xf32> -> vector<8x512xf32>
    %425 = arith.addf %422, %424 : vector<8x512xf32>
    %426 = vector.extract_strided_slice %425 {offsets = [0, 0], sizes = [8, 128], strides = [1, 1]} : vector<8x512xf32> to vector<8x128xf32>
    %427 = arith.negf %426 : vector<8x128xf32>
    %428 = math.exp %427 : vector<8x128xf32>
    %cst_108 = arith.constant 1.000000e+00 : f32
    %429 = vector.broadcast %cst_108 : f32 to vector<8x128xf32>
    %430 = arith.addf %429, %428 : vector<8x128xf32>
    %431 = arith.divf %429, %430 : vector<8x128xf32>
    %432 = vector.extract_strided_slice %425 {offsets = [0, 128], sizes = [8, 128], strides = [1, 1]} : vector<8x512xf32> to vector<8x128xf32>
    %433 = arith.negf %432 : vector<8x128xf32>
    %434 = math.exp %433 : vector<8x128xf32>
    %cst_109 = arith.constant 1.000000e+00 : f32
    %435 = vector.broadcast %cst_109 : f32 to vector<8x128xf32>
    %436 = arith.addf %435, %434 : vector<8x128xf32>
    %437 = arith.divf %435, %436 : vector<8x128xf32>
    %438 = vector.extract_strided_slice %425 {offsets = [0, 256], sizes = [8, 128], strides = [1, 1]} : vector<8x512xf32> to vector<8x128xf32>
    %439 = math.tanh %438 : vector<8x128xf32>
    %440 = vector.extract_strided_slice %425 {offsets = [0, 384], sizes = [8, 128], strides = [1, 1]} : vector<8x512xf32> to vector<8x128xf32>
    %441 = arith.negf %440 : vector<8x128xf32>
    %442 = math.exp %441 : vector<8x128xf32>
    %cst_110 = arith.constant 1.000000e+00 : f32
    %443 = vector.broadcast %cst_110 : f32 to vector<8x128xf32>
    %444 = arith.addf %443, %442 : vector<8x128xf32>
    %445 = arith.divf %443, %444 : vector<8x128xf32>
    %446 = arith.mulf %437, %390 : vector<8x128xf32>
    %447 = arith.mulf %431, %439 : vector<8x128xf32>
    %448 = arith.addf %446, %447 : vector<8x128xf32>
    %449 = math.tanh %448 : vector<8x128xf32>
    %450 = arith.mulf %445, %449 : vector<8x128xf32>
    %451 = arith.addf %450, %421 : vector<8x128xf32>
    %c0_111 = arith.constant 0 : index
    %c0_112 = arith.constant 0 : index
    %452 = vector.load %arg4[%c0_111, %c0_112] : memref<128x512xf32, #tpu.memory_space<vmem>>, vector<128x512xf32>
    %cst_113 = arith.constant dense<0.000000e+00> : vector<8x512xf32>
    %453 = tpu.matmul %451, %452, %cst_113 {dimension_numbers = #tpu.dot_dimension_numbers<[1], [0], [0], [1], [0, 0, 1, 1], [], []>} : vector<8x128xf32>, vector<128x512xf32>, vector<8x512xf32> -> vector<8x512xf32>
    %454 = arith.addf %453, %11 : vector<8x512xf32>
    %455 = vector.extract_strided_slice %454 {offsets = [0, 0], sizes = [8, 128], strides = [1, 1]} : vector<8x512xf32> to vector<8x128xf32>
    %456 = arith.negf %455 : vector<8x128xf32>
    %457 = math.exp %456 : vector<8x128xf32>
    %cst_114 = arith.constant 1.000000e+00 : f32
    %458 = vector.broadcast %cst_114 : f32 to vector<8x128xf32>
    %459 = arith.addf %458, %457 : vector<8x128xf32>
    %460 = arith.divf %458, %459 : vector<8x128xf32>
    %461 = vector.extract_strided_slice %454 {offsets = [0, 128], sizes = [8, 128], strides = [1, 1]} : vector<8x512xf32> to vector<8x128xf32>
    %462 = arith.negf %461 : vector<8x128xf32>
    %463 = math.exp %462 : vector<8x128xf32>
    %cst_115 = arith.constant 1.000000e+00 : f32
    %464 = vector.broadcast %cst_115 : f32 to vector<8x128xf32>
    %465 = arith.addf %464, %463 : vector<8x128xf32>
    %466 = arith.divf %464, %465 : vector<8x128xf32>
    %467 = vector.extract_strided_slice %454 {offsets = [0, 256], sizes = [8, 128], strides = [1, 1]} : vector<8x512xf32> to vector<8x128xf32>
    %468 = math.tanh %467 : vector<8x128xf32>
    %469 = vector.extract_strided_slice %454 {offsets = [0, 384], sizes = [8, 128], strides = [1, 1]} : vector<8x512xf32> to vector<8x128xf32>
    %470 = arith.negf %469 : vector<8x128xf32>
    %471 = math.exp %470 : vector<8x128xf32>
    %cst_116 = arith.constant 1.000000e+00 : f32
    %472 = vector.broadcast %cst_116 : f32 to vector<8x128xf32>
    %473 = arith.addf %472, %471 : vector<8x128xf32>
    %474 = arith.divf %472, %473 : vector<8x128xf32>
    %475 = arith.mulf %466, %419 : vector<8x128xf32>
    %476 = arith.mulf %460, %468 : vector<8x128xf32>
    %477 = arith.addf %475, %476 : vector<8x128xf32>
    %478 = math.tanh %477 : vector<8x128xf32>
    %479 = arith.mulf %474, %478 : vector<8x128xf32>
    %c0_117 = arith.constant 0 : index
    %c0_118 = arith.constant 0 : index
    %480 = vector.load %arg6[%c0_117, %c0_118] : memref<1x128xf32, #tpu.memory_space<vmem>>, vector<1x128xf32>
    %481 = vector.broadcast %480 : vector<1x128xf32> to vector<8x128xf32>
    %482 = arith.mulf %479, %481 : vector<8x128xf32>
    %cst_119 = arith.constant dense<0.000000e+00> : vector<8xf32>
    %483 = vector.multi_reduction <add>, %482, %cst_119 [1] : vector<8x128xf32> to vector<8xf32>
    %484 = vector.shape_cast %483 : vector<8xf32> to vector<8x1xf32>
    %c0_120 = arith.constant 0 : index
    %c0_121 = arith.constant 0 : index
    %485 = vector.load %arg7[%c0_120, %c0_121] : memref<1x1xf32, #tpu.memory_space<vmem>>, vector<1x1xf32>
    %486 = vector.broadcast %485 : vector<1x1xf32> to vector<8x1xf32>
    %487 = arith.addf %484, %486 : vector<8x1xf32>
    %c0_122 = arith.constant 0 : index
    %c0_123 = arith.constant 0 : index
    %488 = vector.load %arg8[%c0_122, %c0_123] : memref<8x1xf32, #tpu.memory_space<vmem>>, vector<8x1xf32>
    tpu.vector_store %arg8[%c0_122, %c0_123], %487 {strides = array<i32>} : memref<8x1xf32, #tpu.memory_space<vmem>>, vector<8x1xf32>,
    return
  }
}

</mosaic_0001>

<llo_original>
// kernel: lstm_model_forward.1
$region0: #{lstm_model_forward.1}
  #allocation0 [shape = 'u32[]', space=smem, size = 0x4, offset = 0x4, fixed_abs, tag = 'smem constant byte address 0x4 - core index']
  #allocation1 [shape = 'u32[144,128]{1,0:T(1,128)}', space=vmem, size = 0x12000, scoped, tag = 'internal scratch']
  #allocation2 [shape = 'f32[64,512]{1,0:T(8,128)}', space=vmem, size = 0x20000, scoped, tag = 'scratch operand']
  #allocation3 [shape = 'f32[1,1]{1,0:T(1,128)S(1)}', space=vmem, size = 0x200, scoped, tag = 'scoped memory for lstm_model_forward.1']
  %s0 = inlined_call_operand.vmem [shape: f32[64,1], index: 0, kind: input, shape index: {}]
  %s1 = inlined_call_operand.vmem [shape: f32[1,512], index: 1, kind: input, shape index: {}]
  %s2 = inlined_call_operand.vmem [shape: f32[1,512], index: 2, kind: input, shape index: {}]
  %s3 = inlined_call_operand.hbm [shape: f32[128,512], index: 3, kind: input, shape index: {}]
  %s4 = inlined_call_operand.hbm [shape: f32[128,512], index: 4, kind: input, shape index: {}]
  %s5 = inlined_call_operand.vmem [shape: f32[1,512], index: 5, kind: input, shape index: {}]
  %s6 = inlined_call_operand.vmem [shape: f32[1,128], index: 6, kind: input, shape index: {}]
  %s7 = inlined_call_operand.<no memory space> [shape: f32[1,1], index: 7, kind: input, shape index: {}]
  %s8 = inlined_call_operand.vmem [shape: f32[8,1], index: 8, kind: output, shape index: {}]
  %s9 = sld [smem:[#allocation0]]
  $region50: #{lstm_model_forward.1} parent=0
    _
  %s11 = ssub.s32 1, %s9
  %s12 = scalar_select 0, %s11, %s9
  %v13 = vstv %s7
  %14 = vst [vmem:[#allocation3] sm:$0x1] %v13
  $region1: #{lstm_model_forward.1} parent=0
    #allocation4 [shape = 'u8[262144]{0}', space=vmem, size = 0x40000, scoped, tag = 'input window, operand 3, single buffered']
    #allocation5 [shape = 's32[1]{0}', space=sflag, size = 0x4, scoped, tag = 'scoped memory for lstm_model_forward.1']
    #allocation6 [shape = 'u8[262144]{0}', space=vmem, size = 0x40000, scoped, tag = 'input window, operand 4, single buffered']
    #allocation7 [shape = 's32[1]{0}', space=sflag, size = 0x4, scoped, tag = 'scoped memory for lstm_model_forward.1']
    %15 = vsyncpa [#allocation5], 0
    %16 = vsyncpa [#allocation7], 0
    // Predicated region
    $region2: #{lstm_model_forward.1} parent=1 // pred_check
      _
    $region3: #{lstm_model_forward.1} parent=1 // pred_check_branch
      %18 = sbr.rel (0) target = $region5
    $region4: #{lstm_model_forward.1} parent=1 // pred_region
      _
    $region5: #{lstm_model_forward.1} parent=1 // pred_fallthru
      _
    // Predicated region
    $region6: #{lstm_model_forward.1} parent=1 // pred_check
      _
    $region7: #{lstm_model_forward.1} parent=1 // pred_check_branch
      %20 = sbr.rel (0) target = $region9
    $region8: #{lstm_model_forward.1} parent=1 // pred_region
      _
    $region9: #{lstm_model_forward.1} parent=1 // pred_fallthru
      _
    // Predicated region
    $region10: #{lstm_model_forward.1} parent=1 // pred_check
      _
    $region11: #{lstm_model_forward.1} parent=1 // pred_check_branch
      %22 = sbr.rel (0) target = $region13
    $region12: #{lstm_model_forward.1} parent=1 // pred_region
      _
    $region13: #{lstm_model_forward.1} parent=1 // pred_fallthru
      _
    // Predicated region
    $region14: #{lstm_model_forward.1} parent=1 // pred_check
      _
    $region15: #{lstm_model_forward.1} parent=1 // pred_check_branch
      %24 = sbr.rel (0) target = $region17
    $region16: #{lstm_model_forward.1} parent=1 // pred_region
      %s26 = ssub.s32 8192, 8192
      %27 = vsyncadd [#allocation5], %s26
      %s28 = sshll.u32 [#allocation4], 4
      %s29 = int_to_ptr.vmem [resolvable:$true] %s28
      %34 = dma.hbm_to_vmem [thread:$0]  %s3, 8192, %s29, [#allocation5], 512, 512, 32
    $region17: #{lstm_model_forward.1} parent=1 // pred_fallthru
      _
    // Predicated region
    $region18: #{lstm_model_forward.1} parent=1 // pred_check
      _
    $region19: #{lstm_model_forward.1} parent=1 // pred_check_branch
      %36 = sbr.rel (0) target = $region21
    $region20: #{lstm_model_forward.1} parent=1 // pred_region
      %s38 = ssub.s32 8192, 8192
      %39 = vsyncadd [#allocation7], %s38
      %s40 = sshll.u32 [#allocation6], 4
      %s41 = int_to_ptr.vmem [resolvable:$true] %s40
      %46 = dma.hbm_to_vmem [thread:$0]  %s4, 8192, %s41, [#allocation7], 512, 512, 32
    $region21: #{lstm_model_forward.1} parent=1 // pred_fallthru
      _
    // Predicated region
    $region22: #{lstm_model_forward.1} parent=1 // pred_check
      _
    $region23: #{lstm_model_forward.1} parent=1 // pred_check_branch
      %48 = sbr.rel (0) target = $region25
    $region24: #{lstm_model_forward.1} parent=1 // pred_region
      _
    $region25: #{lstm_model_forward.1} parent=1 // pred_fallthru
      _
    // Predicated region
    $region26: #{lstm_model_forward.1} parent=1 // pred_check
      _
    $region27: #{lstm_model_forward.1} parent=1 // pred_check_branch
      %50 = sbr.rel (0) target = $region29
    $region28: #{lstm_model_forward.1} parent=1 // pred_region
      _
    $region29: #{lstm_model_forward.1} parent=1 // pred_fallthru
      _
    // Predicated region
    $region30: #{lstm_model_forward.1} parent=1 // pred_check
      _
    $region31: #{lstm_model_forward.1} parent=1 // pred_check_branch
      %52 = sbr.rel (0) target = $region33
    $region32: #{lstm_model_forward.1} parent=1 // pred_region
      _
    $region33: #{lstm_model_forward.1} parent=1 // pred_fallthru
      _
    // Predicated region
    $region34: #{lstm_model_forward.1} parent=1 // pred_check
      _
    $region35: #{lstm_model_forward.1} parent=1 // pred_check_branch
      %54 = sbr.rel (0) target = $region37
    $region36: #{lstm_model_forward.1} parent=1 // pred_region
      %55 = dma.done [#allocation5], 8192
    $region37: #{lstm_model_forward.1} parent=1 // pred_fallthru
      _
    // Predicated region
    $region38: #{lstm_model_forward.1} parent=1 // pred_check
      _
    $region39: #{lstm_model_forward.1} parent=1 // pred_check_branch
      %57 = sbr.rel (0) target = $region41
    $region40: #{lstm_model_forward.1} parent=1 // pred_region
      %58 = dma.done [#allocation7], 8192
    $region41: #{lstm_model_forward.1} parent=1 // pred_fallthru
      _
    %v59 = vld [vmem:[%s0] sm:$0xff]
    %v60 = vld [vmem:[%s0 + $0x8] sm:$0xff]
    %v61 = vld [vmem:[%s0 + $0x10] sm:$0xff]
    %v62 = vld [vmem:[%s0 + $0x18] sm:$0xff]
    %v63 = vld [vmem:[%s0 + $0x20] sm:$0xff]
    %v64 = vld [vmem:[%s0 + $0x28] sm:$0xff]
    %v65 = vld [vmem:[%s0 + $0x30] sm:$0xff]
    %v66 = vld [vmem:[%s0 + $0x38] sm:$0xff]
    %v67 = vld [vmem:[%s1] sm:$0xf]
    %69 = vset.pattern.permute.xlu0 0
    %70 = vperm.xlu0 %69, %v59
    %v71 = vpop.permute.xlu0 %70
    %74 = vset.pattern.permute.xlu0 0
    %75 = vperm.xlu0 %74, %v60
    %v76 = vpop.permute.xlu0 %75
    %79 = vset.pattern.permute.xlu0 0
    %80 = vperm.xlu0 %79, %v61
    %v81 = vpop.permute.xlu0 %80
    %84 = vset.pattern.permute.xlu0 0
    %85 = vperm.xlu0 %84, %v62
    %v86 = vpop.permute.xlu0 %85
    %89 = vset.pattern.permute.xlu0 0
    %90 = vperm.xlu0 %89, %v63
    %v91 = vpop.permute.xlu0 %90
    %94 = vset.pattern.permute.xlu0 0
    %95 = vperm.xlu0 %94, %v64
    %v96 = vpop.permute.xlu0 %95
    %99 = vset.pattern.permute.xlu0 0
    %100 = vperm.xlu0 %99, %v65
    %v101 = vpop.permute.xlu0 %100
    %104 = vset.pattern.permute.xlu0 0
    %105 = vperm.xlu0 %104, %v66
    %v106 = vpop.permute.xlu0 %105
    %v109 = vlaneseq
    %v110 = vshrl.u32 %v109, 7
    %v111 = vsub.s32 0, %v110
    %v112 = vrot.slane %v67, %v111
    %v113 = vlaneseq
    %v114 = vshrl.u32 %v113, 7
    %v115 = vsub.s32 1, %v114
    %v116 = vrot.slane %v67, %v115
    %v117 = vlaneseq
    %v118 = vshrl.u32 %v117, 7
    %v119 = vsub.s32 2, %v118
    %v120 = vrot.slane %v67, %v119
    %v121 = vlaneseq
    %v122 = vshrl.u32 %v121, 7
    %v123 = vsub.s32 3, %v122
    %v124 = vrot.slane %v67, %v123
    %v129 = vmul.f32 %v71, %v112
    %v130 = vmul.f32 %v71, %v116
    %v131 = vmul.f32 %v71, %v120
    %v132 = vmul.f32 %v71, %v124
    %v133 = vmul.f32 %v76, %v112
    %v134 = vmul.f32 %v76, %v116
    %v135 = vmul.f32 %v76, %v120
    %v136 = vmul.f32 %v76, %v124
    %v137 = vmul.f32 %v81, %v112
    %v138 = vmul.f32 %v81, %v116
    %v139 = vmul.f32 %v81, %v120
    %v140 = vmul.f32 %v81, %v124
    %v141 = vmul.f32 %v86, %v112
    %v142 = vmul.f32 %v86, %v116
    %v143 = vmul.f32 %v86, %v120
    %v144 = vmul.f32 %v86, %v124
    %v145 = vmul.f32 %v91, %v112
    %v146 = vmul.f32 %v91, %v116
    %v147 = vmul.f32 %v91, %v120
    %v148 = vmul.f32 %v91, %v124
    %v149 = vmul.f32 %v96, %v112
    %v150 = vmul.f32 %v96, %v116
    %v151 = vmul.f32 %v96, %v120
    %v152 = vmul.f32 %v96, %v124
    %v153 = vmul.f32 %v101, %v112
    %v154 = vmul.f32 %v101, %v116
    %v155 = vmul.f32 %v101, %v120
    %v156 = vmul.f32 %v101, %v124
    %v157 = vmul.f32 %v106, %v112
    %v158 = vmul.f32 %v106, %v116
    %v159 = vmul.f32 %v106, %v120
    %v160 = vmul.f32 %v106, %v124
    %v161 = vld [vmem:[%s2] sm:$0xf]
    %v163 = vlaneseq
    %v164 = vshrl.u32 %v163, 7
    %v165 = vsub.s32 0, %v164
    %v166 = vrot.slane %v161, %v165
    %v167 = vlaneseq
    %v168 = vshrl.u32 %v167, 7
    %v169 = vsub.s32 1, %v168
    %v170 = vrot.slane %v161, %v169
    %v171 = vlaneseq
    %v172 = vshrl.u32 %v171, 7
    %v173 = vsub.s32 2, %v172
    %v174 = vrot.slane %v161, %v173
    %v175 = vlaneseq
    %v176 = vshrl.u32 %v175, 7
    %v177 = vsub.s32 3, %v176
    %v178 = vrot.slane %v161, %v177
    %v183 = vadd.f32 %v129, %v166
    %v184 = vadd.f32 %v130, %v170
    %v185 = vadd.f32 %v131, %v174
    %v186 = vadd.f32 %v132, %v178
    %v187 = vadd.f32 %v133, %v166
    %v188 = vadd.f32 %v134, %v170
    %v189 = vadd.f32 %v135, %v174
    %v190 = vadd.f32 %v136, %v178
    %v191 = vadd.f32 %v137, %v166
    %v192 = vadd.f32 %v138, %v170
    %v193 = vadd.f32 %v139, %v174
    %v194 = vadd.f32 %v140, %v178
    %v195 = vadd.f32 %v141, %v166
    %v196 = vadd.f32 %v142, %v170
    %v197 = vadd.f32 %v143, %v174
    %v198 = vadd.f32 %v144, %v178
    %v199 = vadd.f32 %v145, %v166
    %v200 = vadd.f32 %v146, %v170
    %v201 = vadd.f32 %v147, %v174
    %v202 = vadd.f32 %v148, %v178
    %v203 = vadd.f32 %v149, %v166
    %v204 = vadd.f32 %v150, %v170
    %v205 = vadd.f32 %v151, %v174
    %v206 = vadd.f32 %v152, %v178
    %v207 = vadd.f32 %v153, %v166
    %v208 = vadd.f32 %v154, %v170
    %v209 = vadd.f32 %v155, %v174
    %v210 = vadd.f32 %v156, %v178
    %v211 = vadd.f32 %v157, %v166
    %v212 = vadd.f32 %v158, %v170
    %v213 = vadd.f32 %v159, %v174
    %v214 = vadd.f32 %v160, %v178
    %215 = vst [vmem:[#allocation2] sm:$0xff] %v183
    %216 = vst [vmem:[#allocation2 + $0x8] sm:$0xff] %v184
    %217 = vst [vmem:[#allocation2 + $0x10] sm:$0xff] %v185
    %218 = vst [vmem:[#allocation2 + $0x18] sm:$0xff] %v186
    %219 = vst [vmem:[#allocation2 + $0x20] sm:$0xff] %v187
    %220 = vst [vmem:[#allocation2 + $0x28] sm:$0xff] %v188
    %221 = vst [vmem:[#allocation2 + $0x30] sm:$0xff] %v189
    %222 = vst [vmem:[#allocation2 + $0x38] sm:$0xff] %v190
    %223 = vst [vmem:[#allocation2 + $0x40] sm:$0xff] %v191
    %224 = vst [vmem:[#allocation2 + $0x48] sm:$0xff] %v192
    %225 = vst [vmem:[#allocation2 + $0x50] sm:$0xff] %v193
    %226 = vst [vmem:[#allocation2 + $0x58] sm:$0xff] %v194
    %227 = vst [vmem:[#allocation2 + $0x60] sm:$0xff] %v195
    %228 = vst [vmem:[#allocation2 + $0x68] sm:$0xff] %v196
    %229 = vst [vmem:[#allocation2 + $0x70] sm:$0xff] %v197
    %230 = vst [vmem:[#allocation2 + $0x78] sm:$0xff] %v198
    %231 = vst [vmem:[#allocation2 + $0x80] sm:$0xff] %v199
    %232 = vst [vmem:[#allocation2 + $0x88] sm:$0xff] %v200
    %233 = vst [vmem:[#allocation2 + $0x90] sm:$0xff] %v201
    %234 = vst [vmem:[#allocation2 + $0x98] sm:$0xff] %v202
    %235 = vst [vmem:[#allocation2 + $0xa0] sm:$0xff] %v203
    %236 = vst [vmem:[#allocation2 + $0xa8] sm:$0xff] %v204
    %237 = vst [vmem:[#allocation2 + $0xb0] sm:$0xff] %v205
    %238 = vst [vmem:[#allocation2 + $0xb8] sm:$0xff] %v206
    %239 = vst [vmem:[#allocation2 + $0xc0] sm:$0xff] %v207
    %240 = vst [vmem:[#allocation2 + $0xc8] sm:$0xff] %v208
    %241 = vst [vmem:[#allocation2 + $0xd0] sm:$0xff] %v209
    %242 = vst [vmem:[#allocation2 + $0xd8] sm:$0xff] %v210
    %243 = vst [vmem:[#allocation2 + $0xe0] sm:$0xff] %v211
    %244 = vst [vmem:[#allocation2 + $0xe8] sm:$0xff] %v212
    %245 = vst [vmem:[#allocation2 + $0xf0] sm:$0xff] %v213
    %246 = vst [vmem:[#allocation2 + $0xf8] sm:$0xff] %v214
    %v247 = vld [vmem:[%s5] sm:$0xf]
    %v249 = vlaneseq
    %v250 = vshrl.u32 %v249, 7
    %v251 = vsub.s32 0, %v250
    %v252 = vrot.slane %v247, %v251
    %v253 = vlaneseq
    %v254 = vshrl.u32 %v253, 7
    %v255 = vsub.s32 1, %v254
    %v256 = vrot.slane %v247, %v255
    %v257 = vlaneseq
    %v258 = vshrl.u32 %v257, 7
    %v259 = vsub.s32 2, %v258
    %v260 = vrot.slane %v247, %v259
    %v261 = vlaneseq
    %v262 = vshrl.u32 %v261, 7
    %v263 = vsub.s32 3, %v262
    %v264 = vrot.slane %v247, %v263
    %v269 = vld [vmem:[#allocation2] sm:$0xff]
    %v270 = vld [vmem:[#allocation2 + $0x8] sm:$0xff]
    %v271 = vld [vmem:[#allocation2 + $0x10] sm:$0xff]
    %v272 = vld [vmem:[#allocation2 + $0x18] sm:$0xff]
    %v273 = vld [vmem:[#allocation4] sm:$0xff]
    %v274 = vld [vmem:[#allocation4 + $0x8] sm:$0xff]
    %v275 = vld [vmem:[#allocation4 + $0x10] sm:$0xff]
    %v276 = vld [vmem:[#allocation4 + $0x18] sm:$0xff]
    %v277 = vld [vmem:[#allocation4 + $0x20] sm:$0xff]
    %v278 = vld [vmem:[#allocation4 + $0x28] sm:$0xff]
    %v279 = vld [vmem:[#allocation4 + $0x30] sm:$0xff]
    %v280 = vld [vmem:[#allocation4 + $0x38] sm:$0xff]
    %v281 = vld [vmem:[#allocation4 + $0x40] sm:$0xff]
    %v282 = vld [vmem:[#allocation4 + $0x48] sm:$0xff]
    %v283 = vld [vmem:[#allocation4 + $0x50] sm:$0xff]
    %v284 = vld [vmem:[#allocation4 + $0x58] sm:$0xff]
    %v285 = vld [vmem:[#allocation4 + $0x60] sm:$0xff]
    %v286 = vld [vmem:[#allocation4 + $0x68] sm:$0xff]
    %v287 = vld [vmem:[#allocation4 + $0x70] sm:$0xff]
    %v288 = vld [vmem:[#allocation4 + $0x78] sm:$0xff]
    %v289 = vld [vmem:[#allocation4 + $0x80] sm:$0xff]
    %v290 = vld [vmem:[#allocation4 + $0x88] sm:$0xff]
    %v291 = vld [vmem:[#allocation4 + $0x90] sm:$0xff]
    %v292 = vld [vmem:[#allocation4 + $0x98] sm:$0xff]
    %v293 = vld [vmem:[#allocation4 + $0xa0] sm:$0xff]
    %v294 = vld [vmem:[#allocation4 + $0xa8] sm:$0xff]
    %v295 = vld [vmem:[#allocation4 + $0xb0] sm:$0xff]
    %v296 = vld [vmem:[#allocation4 + $0xb8] sm:$0xff]
    %v297 = vld [vmem:[#allocation4 + $0xc0] sm:$0xff]
    %v298 = vld [vmem:[#allocation4 + $0xc8] sm:$0xff]
    %v299 = vld [vmem:[#allocation4 + $0xd0] sm:$0xff]
    %v300 = vld [vmem:[#allocation4 + $0xd8] sm:$0xff]
    %v301 = vld [vmem:[#allocation4 + $0xe0] sm:$0xff]
    %v302 = vld [vmem:[#allocation4 + $0xe8] sm:$0xff]
    %v303 = vld [vmem:[#allocation4 + $0xf0] sm:$0xff]
    %v304 = vld [vmem:[#allocation4 + $0xf8] sm:$0xff]
    %v305 = vld [vmem:[#allocation4 + $0x100] sm:$0xff]
    %v306 = vld [vmem:[#allocation4 + $0x108] sm:$0xff]
    %v307 = vld [vmem:[#allocation4 + $0x110] sm:$0xff]
    %v308 = vld [vmem:[#allocation4 + $0x118] sm:$0xff]
    %v309 = vld [vmem:[#allocation4 + $0x120] sm:$0xff]
    %v310 = vld [vmem:[#allocation4 + $0x128] sm:$0xff]
    %v311 = vld [vmem:[#allocation4 + $0x130] sm:$0xff]
    %v312 = vld [vmem:[#allocation4 + $0x138] sm:$0xff]
    %v313 = vld [vmem:[#allocation4 + $0x140] sm:$0xff]
    %v314 = vld [vmem:[#allocation4 + $0x148] sm:$0xff]
    %v315 = vld [vmem:[#allocation4 + $0x150] sm:$0xff]
    %v316 = vld [vmem:[#allocation4 + $0x158] sm:$0xff]
    %v317 = vld [vmem:[#allocation4 + $0x160] sm:$0xff]
    %v318 = vld [vmem:[#allocation4 + $0x168] sm:$0xff]
    %v319 = vld [vmem:[#allocation4 + $0x170] sm:$0xff]
    %v320 = vld [vmem:[#allocation4 + $0x178] sm:$0xff]
    %v321 = vld [vmem:[#allocation4 + $0x180] sm:$0xff]
    %v322 = vld [vmem:[#allocation4 + $0x188] sm:$0xff]
    %v323 = vld [vmem:[#allocation4 + $0x190] sm:$0xff]
    %v324 = vld [vmem:[#allocation4 + $0x198] sm:$0xff]
    %v325 = vld [vmem:[#allocation4 + $0x1a0] sm:$0xff]
    %v326 = vld [vmem:[#allocation4 + $0x1a8] sm:$0xff]
    %v327 = vld [vmem:[#allocation4 + $0x1b0] sm:$0xff]
    %v328 = vld [vmem:[#allocation4 + $0x1b8] sm:$0xff]
    %v329 = vld [vmem:[#allocation4 + $0x1c0] sm:$0xff]
    %v330 = vld [vmem:[#allocation4 + $0x1c8] sm:$0xff]
    %v331 = vld [vmem:[#allocation4 + $0x1d0] sm:$0xff]
    %v332 = vld [vmem:[#allocation4 + $0x1d8] sm:$0xff]
    %v333 = vld [vmem:[#allocation4 + $0x1e0] sm:$0xff]
    %v334 = vld [vmem:[#allocation4 + $0x1e8] sm:$0xff]
    %v335 = vld [vmem:[#allocation4 + $0x1f0] sm:$0xff]
    %v336 = vld [vmem:[#allocation4 + $0x1f8] sm:$0xff]
    %337 = vmatprep.subr.mxu0 %v274
    %338 = vmatpush1.msra.mxu0 %v273
    %339 = vmatprep.subr.mxu0 %v278
    %340 = vmatpush1.msra.mxu0 %v277
    %341 = vmatprep.subr.mxu0 %v282
    %342 = vmatpush1.msra.mxu0 %v281
    %343 = vmatprep.subr.mxu0 %v286
    %344 = vmatpush1.msra.mxu0 %v285
    %345 = vmatprep.subr.mxu0 %v290
    %346 = vmatpush1.msra.mxu0 %v289
    %347 = vmatprep.subr.mxu0 %v294
    %348 = vmatpush1.msra.mxu0 %v293
    %349 = vmatprep.subr.mxu0 %v298
    %350 = vmatpush1.msra.mxu0 %v297
    %351 = vmatprep.subr.mxu0 %v302
    %352 = vmatpush1.msra.mxu0 %v301
    %353 = vmatprep.subr.mxu0 %v306
    %354 = vmatpush1.msra.mxu0 %v305
    %355 = vmatprep.subr.mxu0 %v310
    %356 = vmatpush1.msra.mxu0 %v309
    %357 = vmatprep.subr.mxu0 %v314
    %358 = vmatpush1.msra.mxu0 %v313
    %359 = vmatprep.subr.mxu0 %v318
    %360 = vmatpush1.msra.mxu0 %v317
    %361 = vmatprep.subr.mxu0 %v322
    %362 = vmatpush1.msra.mxu0 %v321
    %363 = vmatprep.subr.mxu0 %v326
    %364 = vmatpush1.msra.mxu0 %v325
    %365 = vmatprep.subr.mxu0 %v330
    %366 = vmatpush1.msra.mxu0 %v329
    %367 = vmatprep.subr.mxu0 %v334
    %368 = vmatpush1.msra.mxu0 %v333
    %369 = vmatprep.subr.mxu0 0.0
    %370 = vmatpush1.msra.mxu0 0.0
    %371 = vmatprep.subr.mxu0 0.0
    %372 = vmatpush1.msra.mxu0 0.0
    %373 = vmatprep.subr.mxu0 0.0
    %374 = vmatpush1.msra.mxu0 0.0
    %375 = vmatprep.subr.mxu0 0.0
    %376 = vmatpush1.msra.mxu0 0.0
    %377 = vmatprep.subr.mxu0 0.0
    %378 = vmatpush1.msra.mxu0 0.0
    %379 = vmatprep.subr.mxu0 0.0
    %380 = vmatpush1.msra.mxu0 0.0
    %381 = vmatprep.subr.mxu0 0.0
    %382 = vmatpush1.msra.mxu0 0.0
    %383 = vmatprep.subr.mxu0 0.0
    %384 = vmatpush1.msra.mxu0 0.0
    %385 = vmatprep.subr.mxu0 0.0
    %386 = vmatpush1.msra.mxu0 0.0
    %387 = vmatprep.subr.mxu0 0.0
    %388 = vmatpush1.msra.mxu0 0.0
    %389 = vmatprep.subr.mxu0 0.0
    %390 = vmatpush1.msra.mxu0 0.0
    %391 = vmatprep.subr.mxu0 0.0
    %392 = vmatpush1.msra.mxu0 0.0
    %393 = vmatprep.subr.mxu0 0.0
    %394 = vmatpush1.msra.mxu0 0.0
    %395 = vmatprep.subr.mxu0 0.0
    %396 = vmatpush1.msra.mxu0 0.0
    %397 = vmatprep.subr.mxu0 0.0
    %398 = vmatpush1.msra.mxu0 0.0
    %399 = vmatprep.subr.mxu0 0.0
    %400 = vmatpush1.msra.mxu0 0.0
    %401 = vmatprep.mubr.f32.mxu0 0.0
    %402 = vmatmul.mubr.f32.gmra.mrb[0].mxu0 0.0
    %v403 = vpop.f32.mrb[0].mxu0
    %v404 = vadd.f32 0.0, %v403
    %v405 = vpop.f32.mrb[0].mxu0
    %v406 = vadd.f32 0.0, %v405
    %407 = vdwg.mxu0
    %408 = vmatprep.subr.mxu0 %v276
    %409 = vmatpush1.msra.mxu0 %v275
    %410 = vmatprep.subr.mxu0 %v280
    %411 = vmatpush1.msra.mxu0 %v279
    %412 = vmatprep.subr.mxu0 %v284
    %413 = vmatpush1.msra.mxu0 %v283
    %414 = vmatprep.subr.mxu0 %v288
    %415 = vmatpush1.msra.mxu0 %v287
    %416 = vmatprep.subr.mxu0 %v292
    %417 = vmatpush1.msra.mxu0 %v291
    %418 = vmatprep.subr.mxu0 %v296
    %419 = vmatpush1.msra.mxu0 %v295
    %420 = vmatprep.subr.mxu0 %v300
    %421 = vmatpush1.msra.mxu0 %v299
    %422 = vmatprep.subr.mxu0 %v304
    %423 = vmatpush1.msra.mxu0 %v303
    %424 = vmatprep.subr.mxu0 %v308
    %425 = vmatpush1.msra.mxu0 %v307
    %426 = vmatprep.subr.mxu0 %v312
    %427 = vmatpush1.msra.mxu0 %v311
    %428 = vmatprep.subr.mxu0 %v316
    %429 = vmatpush1.msra.mxu0 %v315
    %430 = vmatprep.subr.mxu0 %v320
    %431 = vmatpush1.msra.mxu0 %v319
    %432 = vmatprep.subr.mxu0 %v324
    %433 = vmatpush1.msra.mxu0 %v323
    %434 = vmatprep.subr.mxu0 %v328
    %435 = vmatpush1.msra.mxu0 %v327
    %436 = vmatprep.subr.mxu0 %v332
    %437 = vmatpush1.msra.mxu0 %v331
    %438 = vmatprep.subr.mxu0 %v336
    %439 = vmatpush1.msra.mxu0 %v335
    %440 = vmatprep.subr.mxu0 0.0
    %441 = vmatpush1.msra.mxu0 0.0
    %442 = vmatprep.subr.mxu0 0.0
    %443 = vmatpush1.msra.mxu0 0.0
    %444 = vmatprep.subr.mxu0 0.0
    %445 = vmatpush1.msra.mxu0 0.0
    %446 = vmatprep.subr.mxu0 0.0
    %447 = vmatpush1.msra.mxu0 0.0
    %448 = vmatprep.subr.mxu0 0.0
    %449 = vmatpush1.msra.mxu0 0.0
    %450 = vmatprep.subr.mxu0 0.0
    %451 = vmatpush1.msra.mxu0 0.0
    %452 = vmatprep.subr.mxu0 0.0
    %453 = vmatpush1.msra.mxu0 0.0
    %454 = vmatprep.subr.mxu0 0.0
    %455 = vmatpush1.msra.mxu0 0.0
    %456 = vmatprep.subr.mxu0 0.0
    %457 = vmatpush1.msra.mxu0 0.0
    %458 = vmatprep.subr.mxu0 0.0
    %459 = vmatpush1.msra.mxu0 0.0
    %460 = vmatprep.subr.mxu0 0.0
    %461 = vmatpush1.msra.mxu0 0.0
    %462 = vmatprep.subr.mxu0 0.0
    %463 = vmatpush1.msra.mxu0 0.0
    %464 = vmatprep.subr.mxu0 0.0
    %465 = vmatpush1.msra.mxu0 0.0
    %466 = vmatprep.subr.mxu0 0.0
    %467 = vmatpush1.msra.mxu0 0.0
    %468 = vmatprep.subr.mxu0 0.0
    %469 = vmatpush1.msra.mxu0 0.0
    %470 = vmatprep.subr.mxu0 0.0
    %471 = vmatpush1.msra.mxu0 0.0
    %472 = vmatprep.mubr.f32.mxu0 0.0
    %473 = vmatmul.mubr.f32.gmra.mrb[0].mxu0 0.0
    %v474 = vpop.f32.mrb[0].mxu0
    %v475 = vadd.f32 0.0, %v474
    %v476 = vpop.f32.mrb[0].mxu0
    %v477 = vadd.f32 0.0, %v476
    %478 = vdwg.mxu0
    %v479 = vadd.f32 %v269, %v404
    %v480 = vadd.f32 %v270, %v406
    %v481 = vadd.f32 %v271, %v475
    %v482 = vadd.f32 %v272, %v477
    %v483 = vxor.u32 %v479, 2147483648
    %v484 = vmul.f32 %v483, 1.442695
    %v485 = vpow.pop %v484
    %v486 = vadd.f32 %v485, 1.0
    %v487 = vrcp.pop %v486
    %v488 = vmul.f32 1.0, %v487
    %v489 = vxor.u32 %v480, 2147483648
    %v490 = vmul.f32 %v489, 1.442695
    %v491 = vpow.pop %v490
    %v492 = vadd.f32 %v491, 1.0
    %v493 = vrcp.pop %v492
    %v494 = vmul.f32 1.0, %v493
    %v495 = vtanh.pop %v481
    %v496 = vxor.u32 %v482, 2147483648
    %v497 = vmul.f32 %v496, 1.442695
    %v498 = vpow.pop %v497
    %v499 = vadd.f32 %v498, 1.0
    %v500 = vrcp.pop %v499
    %v501 = vmul.f32 1.0, %v500
    %v502 = vmul.f32 %v494, 0.0
    %v503 = vmul.f32 %v488, %v495
    %v504 = vadd.f32 %v502, %v503
    %v505 = vtanh.pop %v504
    %v506 = vmul.f32 %v501, %v505
    %v507 = vadd.f32 %v506, 0.0
    %v508 = vld [vmem:[#allocation6] sm:$0xff]
    %v509 = vld [vmem:[#allocation6 + $0x8] sm:$0xff]
    %v510 = vld [vmem:[#allocation6 + $0x10] sm:$0xff]
    %v511 = vld [vmem:[#allocation6 + $0x18] sm:$0xff]
    %v512 = vld [vmem:[#allocation6 + $0x20] sm:$0xff]
    %v513 = vld [vmem:[#allocation6 + $0x28] sm:$0xff]
    %v514 = vld [vmem:[#allocation6 + $0x30] sm:$0xff]
    %v515 = vld [vmem:[#allocation6 + $0x38] sm:$0xff]
    %v516 = vld [vmem:[#allocation6 + $0x40] sm:$0xff]
    %v517 = vld [vmem:[#allocation6 + $0x48] sm:$0xff]
    %v518 = vld [vmem:[#allocation6 + $0x50] sm:$0xff]
    %v519 = vld [vmem:[#allocation6 + $0x58] sm:$0xff]
    %v520 = vld [vmem:[#allocation6 + $0x60] sm:$0xff]
    %v521 = vld [vmem:[#allocation6 + $0x68] sm:$0xff]
    %v522 = vld [vmem:[#allocation6 + $0x70] sm:$0xff]
    %v523 = vld [vmem:[#allocation6 + $0x78] sm:$0xff]
    %v524 = vld [vmem:[#allocation6 + $0x80] sm:$0xff]
    %v525 = vld [vmem:[#allocation6 + $0x88] sm:$0xff]
    %v526 = vld [vmem:[#allocation6 + $0x90] sm:$0xff]
    %v527 = vld [vmem:[#allocation6 + $0x98] sm:$0xff]
    %v528 = vld [vmem:[#allocation6 + $0xa0] sm:$0xff]
    %v529 = vld [vmem:[#allocation6 + $0xa8] sm:$0xff]
    %v530 = vld [vmem:[#allocation6 + $0xb0] sm:$0xff]
    %v531 = vld [vmem:[#allocation6 + $0xb8] sm:$0xff]
    %v532 = vld [vmem:[#allocation6 + $0xc0] sm:$0xff]
    %v533 = vld [vmem:[#allocation6 + $0xc8] sm:$0xff]
    %v534 = vld [vmem:[#allocation6 + $0xd0] sm:$0xff]
    %v535 = vld [vmem:[#allocation6 + $0xd8] sm:$0xff]
    %v536 = vld [vmem:[#allocation6 + $0xe0] sm:$0xff]
    %v537 = vld [vmem:[#allocation6 + $0xe8] sm:$0xff]
    %v538 = vld [vmem:[#allocation6 + $0xf0] sm:$0xff]
    %v539 = vld [vmem:[#allocation6 + $0xf8] sm:$0xff]
    %v540 = vld [vmem:[#allocation6 + $0x100] sm:$0xff]
    %v541 = vld [vmem:[#allocation6 + $0x108] sm:$0xff]
    %v542 = vld [vmem:[#allocation6 + $0x110] sm:$0xff]
    %v543 = vld [vmem:[#allocation6 + $0x118] sm:$0xff]
    %v544 = vld [vmem:[#allocation6 + $0x120] sm:$0xff]
    %v545 = vld [vmem:[#allocation6 + $0x128] sm:$0xff]
    %v546 = vld [vmem:[#allocation6 + $0x130] sm:$0xff]
    %v547 = vld [vmem:[#allocation6 + $0x138] sm:$0xff]
    %v548 = vld [vmem:[#allocation6 + $0x140] sm:$0xff]
    %v549 = vld [vmem:[#allocation6 + $0x148] sm:$0xff]
    %v550 = vld [vmem:[#allocation6 + $0x150] sm:$0xff]
    %v551 = vld [vmem:[#allocation6 + $0x158] sm:$0xff]
    %v552 = vld [vmem:[#allocation6 + $0x160] sm:$0xff]
    %v553 = vld [vmem:[#allocation6 + $0x168] sm:$0xff]
    %v554 = vld [vmem:[#allocation6 + $0x170] sm:$0xff]
    %v555 = vld [vmem:[#allocation6 + $0x178] sm:$0xff]
    %v556 = vld [vmem:[#allocation6 + $0x180] sm:$0xff]
    %v557 = vld [vmem:[#allocation6 + $0x188] sm:$0xff]
    %v558 = vld [vmem:[#allocation6 + $0x190] sm:$0xff]
    %v559 = vld [vmem:[#allocation6 + $0x198] sm:$0xff]
    %v560 = vld [vmem:[#allocation6 + $0x1a0] sm:$0xff]
    %v561 = vld [vmem:[#allocation6 + $0x1a8] sm:$0xff]
    %v562 = vld [vmem:[#allocation6 + $0x1b0] sm:$0xff]
    %v563 = vld [vmem:[#allocation6 + $0x1b8] sm:$0xff]
    %v564 = vld [vmem:[#allocation6 + $0x1c0] sm:$0xff]
    %v565 = vld [vmem:[#allocation6 + $0x1c8] sm:$0xff]
    %v566 = vld [vmem:[#allocation6 + $0x1d0] sm:$0xff]
    %v567 = vld [vmem:[#allocation6 + $0x1d8] sm:$0xff]
    %v568 = vld [vmem:[#allocation6 + $0x1e0] sm:$0xff]
    %v569 = vld [vmem:[#allocation6 + $0x1e8] sm:$0xff]
    %v570 = vld [vmem:[#allocation6 + $0x1f0] sm:$0xff]
    %v571 = vld [vmem:[#allocation6 + $0x1f8] sm:$0xff]
    %572 = vmatprep.subr.mxu0 %v509
    %573 = vmatpush1.msra.mxu0 %v508
    %574 = vmatprep.subr.mxu0 %v513
    %575 = vmatpush1.msra.mxu0 %v512
    %576 = vmatprep.subr.mxu0 %v517
    %577 = vmatpush1.msra.mxu0 %v516
    %578 = vmatprep.subr.mxu0 %v521
    %579 = vmatpush1.msra.mxu0 %v520
    %580 = vmatprep.subr.mxu0 %v525
    %581 = vmatpush1.msra.mxu0 %v524
    %582 = vmatprep.subr.mxu0 %v529
    %583 = vmatpush1.msra.mxu0 %v528
    %584 = vmatprep.subr.mxu0 %v533
    %585 = vmatpush1.msra.mxu0 %v532
    %586 = vmatprep.subr.mxu0 %v537
    %587 = vmatpush1.msra.mxu0 %v536
    %588 = vmatprep.subr.mxu0 %v541
    %589 = vmatpush1.msra.mxu0 %v540
    %590 = vmatprep.subr.mxu0 %v545
    %591 = vmatpush1.msra.mxu0 %v544
    %592 = vmatprep.subr.mxu0 %v549
    %593 = vmatpush1.msra.mxu0 %v548
    %594 = vmatprep.subr.mxu0 %v553
    %595 = vmatpush1.msra.mxu0 %v552
    %596 = vmatprep.subr.mxu0 %v557
    %597 = vmatpush1.msra.mxu0 %v556
    %598 = vmatprep.subr.mxu0 %v561
    %599 = vmatpush1.msra.mxu0 %v560
    %600 = vmatprep.subr.mxu0 %v565
    %601 = vmatpush1.msra.mxu0 %v564
    %602 = vmatprep.subr.mxu0 %v569
    %603 = vmatpush1.msra.mxu0 %v568
    %604 = vmatprep.subr.mxu0 0.0
    %605 = vmatpush1.msra.mxu0 0.0
    %606 = vmatprep.subr.mxu0 0.0
    %607 = vmatpush1.msra.mxu0 0.0
    %608 = vmatprep.subr.mxu0 0.0
    %609 = vmatpush1.msra.mxu0 0.0
    %610 = vmatprep.subr.mxu0 0.0
    %611 = vmatpush1.msra.mxu0 0.0
    %612 = vmatprep.subr.mxu0 0.0
    %613 = vmatpush1.msra.mxu0 0.0
    %614 = vmatprep.subr.mxu0 0.0
    %615 = vmatpush1.msra.mxu0 0.0
    %616 = vmatprep.subr.mxu0 0.0
    %617 = vmatpush1.msra.mxu0 0.0
    %618 = vmatprep.subr.mxu0 0.0
    %619 = vmatpush1.msra.mxu0 0.0
    %620 = vmatprep.subr.mxu0 0.0
    %621 = vmatpush1.msra.mxu0 0.0
    %622 = vmatprep.subr.mxu0 0.0
    %623 = vmatpush1.msra.mxu0 0.0
    %624 = vmatprep.subr.mxu0 0.0
    %625 = vmatpush1.msra.mxu0 0.0
    %626 = vmatprep.subr.mxu0 0.0
    %627 = vmatpush1.msra.mxu0 0.0
    %628 = vmatprep.subr.mxu0 0.0
    %629 = vmatpush1.msra.mxu0 0.0
    %630 = vmatprep.subr.mxu0 0.0
    %631 = vmatpush1.msra.mxu0 0.0
    %632 = vmatprep.subr.mxu0 0.0
    %633 = vmatpush1.msra.mxu0 0.0
    %634 = vmatprep.subr.mxu0 0.0
    %635 = vmatpush1.msra.mxu0 0.0
    %636 = vmatprep.mubr.f32.mxu0 0.0
    %637 = vmatmul.mubr.f32.gmra.mrb[0].mxu0 %v507
    %v638 = vpop.f32.mrb[0].mxu0
    %v639 = vadd.f32 %v252, %v638
    %v640 = vpop.f32.mrb[0].mxu0
    %v641 = vadd.f32 %v256, %v640
    %642 = vdwg.mxu0
    %643 = vmatprep.subr.mxu0 %v511
    %644 = vmatpush1.msra.mxu0 %v510
    %645 = vmatprep.subr.mxu0 %v515
    %646 = vmatpush1.msra.mxu0 %v514
    %647 = vmatprep.subr.mxu0 %v519
    %648 = vmatpush1.msra.mxu0 %v518
    %649 = vmatprep.subr.mxu0 %v523
    %650 = vmatpush1.msra.mxu0 %v522
    %651 = vmatprep.subr.mxu0 %v527
    %652 = vmatpush1.msra.mxu0 %v526
    %653 = vmatprep.subr.mxu0 %v531
    %654 = vmatpush1.msra.mxu0 %v530
    %655 = vmatprep.subr.mxu0 %v535
    %656 = vmatpush1.msra.mxu0 %v534
    %657 = vmatprep.subr.mxu0 %v539
    %658 = vmatpush1.msra.mxu0 %v538
    %659 = vmatprep.subr.mxu0 %v543
    %660 = vmatpush1.msra.mxu0 %v542
    %661 = vmatprep.subr.mxu0 %v547
    %662 = vmatpush1.msra.mxu0 %v546
    %663 = vmatprep.subr.mxu0 %v551
    %664 = vmatpush1.msra.mxu0 %v550
    %665 = vmatprep.subr.mxu0 %v555
    %666 = vmatpush1.msra.mxu0 %v554
    %667 = vmatprep.subr.mxu0 %v559
    %668 = vmatpush1.msra.mxu0 %v558
    %669 = vmatprep.subr.mxu0 %v563
    %670 = vmatpush1.msra.mxu0 %v562
    %671 = vmatprep.subr.mxu0 %v567
    %672 = vmatpush1.msra.mxu0 %v566
    %673 = vmatprep.subr.mxu0 %v571
    %674 = vmatpush1.msra.mxu0 %v570
    %675 = vmatprep.subr.mxu0 0.0
    %676 = vmatpush1.msra.mxu0 0.0
    %677 = vmatprep.subr.mxu0 0.0
    %678 = vmatpush1.msra.mxu0 0.0
    %679 = vmatprep.subr.mxu0 0.0
    %680 = vmatpush1.msra.mxu0 0.0
    %681 = vmatprep.subr.mxu0 0.0
    %682 = vmatpush1.msra.mxu0 0.0
    %683 = vmatprep.subr.mxu0 0.0
    %684 = vmatpush1.msra.mxu0 0.0
    %685 = vmatprep.subr.mxu0 0.0
    %686 = vmatpush1.msra.mxu0 0.0
    %687 = vmatprep.subr.mxu0 0.0
    %688 = vmatpush1.msra.mxu0 0.0
    %689 = vmatprep.subr.mxu0 0.0
    %690 = vmatpush1.msra.mxu0 0.0
    %691 = vmatprep.subr.mxu0 0.0
    %692 = vmatpush1.msra.mxu0 0.0
    %693 = vmatprep.subr.mxu0 0.0
    %694 = vmatpush1.msra.mxu0 0.0
    %695 = vmatprep.subr.mxu0 0.0
    %696 = vmatpush1.msra.mxu0 0.0
    %697 = vmatprep.subr.mxu0 0.0
    %698 = vmatpush1.msra.mxu0 0.0
    %699 = vmatprep.subr.mxu0 0.0
    %700 = vmatpush1.msra.mxu0 0.0
    %701 = vmatprep.subr.mxu0 0.0
    %702 = vmatpush1.msra.mxu0 0.0
    %703 = vmatprep.subr.mxu0 0.0
    %704 = vmatpush1.msra.mxu0 0.0
    %705 = vmatprep.subr.mxu0 0.0
    %706 = vmatpush1.msra.mxu0 0.0
    %707 = vmatprep.mubr.f32.mxu0 0.0
    %708 = vmatmul.mubr.f32.gmra.mrb[0].mxu0 %v507
    %v709 = vpop.f32.mrb[0].mxu0
    %v710 = vadd.f32 %v260, %v709
    %v711 = vpop.f32.mrb[0].mxu0
    %v712 = vadd.f32 %v264, %v711
    %713 = vdwg.mxu0
    %v714 = vxor.u32 %v639, 2147483648
    %v715 = vmul.f32 %v714, 1.442695
    %v716 = vpow.pop %v715
    %v717 = vadd.f32 %v716, 1.0
    %v718 = vrcp.pop %v717
    %v719 = vmul.f32 1.0, %v718
    %v720 = vxor.u32 %v641, 2147483648
    %v721 = vmul.f32 %v720, 1.442695
    %v722 = vpow.pop %v721
    %v723 = vadd.f32 %v722, 1.0
    %v724 = vrcp.pop %v723
    %v725 = vmul.f32 1.0, %v724
    %v726 = vtanh.pop %v710
    %v727 = vxor.u32 %v712, 2147483648
    %v728 = vmul.f32 %v727, 1.442695
    %v729 = vpow.pop %v728
    %v730 = vadd.f32 %v729, 1.0
    %v731 = vrcp.pop %v730
    %v732 = vmul.f32 1.0, %v731
    %v733 = vmul.f32 %v725, 0.0
    %v734 = vmul.f32 %v719, %v726
    %v735 = vadd.f32 %v733, %v734
    %v736 = vtanh.pop %v735
    %v737 = vmul.f32 %v732, %v736
    %v738 = vld [vmem:[#allocation2 + $0x20] sm:$0xff]
    %v739 = vld [vmem:[#allocation2 + $0x28] sm:$0xff]
    %v740 = vld [vmem:[#allocation2 + $0x30] sm:$0xff]
    %v741 = vld [vmem:[#allocation2 + $0x38] sm:$0xff]
    %742 = vmatprep.subr.mxu0 %v274
    %743 = vmatpush1.msra.mxu0 %v273
    %744 = vmatprep.subr.mxu0 %v278
    %745 = vmatpush1.msra.mxu0 %v277
    %746 = vmatprep.subr.mxu0 %v282
    %747 = vmatpush1.msra.mxu0 %v281
    %748 = vmatprep.subr.mxu0 %v286
    %749 = vmatpush1.msra.mxu0 %v285
    %750 = vmatprep.subr.mxu0 %v290
    %751 = vmatpush1.msra.mxu0 %v289
    %752 = vmatprep.subr.mxu0 %v294
    %753 = vmatpush1.msra.mxu0 %v293
    %754 = vmatprep.subr.mxu0 %v298
    %755 = vmatpush1.msra.mxu0 %v297
    %756 = vmatprep.subr.mxu0 %v302
    %757 = vmatpush1.msra.mxu0 %v301
    %758 = vmatprep.subr.mxu0 %v306
    %759 = vmatpush1.msra.mxu0 %v305
    %760 = vmatprep.subr.mxu0 %v310
    %761 = vmatpush1.msra.mxu0 %v309
    %762 = vmatprep.subr.mxu0 %v314
    %763 = vmatpush1.msra.mxu0 %v313
    %764 = vmatprep.subr.mxu0 %v318
    %765 = vmatpush1.msra.mxu0 %v317
    %766 = vmatprep.subr.mxu0 %v322
    %767 = vmatpush1.msra.mxu0 %v321
    %768 = vmatprep.subr.mxu0 %v326
    %769 = vmatpush1.msra.mxu0 %v325
    %770 = vmatprep.subr.mxu0 %v330
    %771 = vmatpush1.msra.mxu0 %v329
    %772 = vmatprep.subr.mxu0 %v334
    %773 = vmatpush1.msra.mxu0 %v333
    %774 = vmatprep.subr.mxu0 0.0
    %775 = vmatpush1.msra.mxu0 0.0
    %776 = vmatprep.subr.mxu0 0.0
    %777 = vmatpush1.msra.mxu0 0.0
    %778 = vmatprep.subr.mxu0 0.0
    %779 = vmatpush1.msra.mxu0 0.0
    %780 = vmatprep.subr.mxu0 0.0
    %781 = vmatpush1.msra.mxu0 0.0
    %782 = vmatprep.subr.mxu0 0.0
    %783 = vmatpush1.msra.mxu0 0.0
    %784 = vmatprep.subr.mxu0 0.0
    %785 = vmatpush1.msra.mxu0 0.0
    %786 = vmatprep.subr.mxu0 0.0
    %787 = vmatpush1.msra.mxu0 0.0
    %788 = vmatprep.subr.mxu0 0.0
    %789 = vmatpush1.msra.mxu0 0.0
    %790 = vmatprep.subr.mxu0 0.0
    %791 = vmatpush1.msra.mxu0 0.0
    %792 = vmatprep.subr.mxu0 0.0
    %793 = vmatpush1.msra.mxu0 0.0
    %794 = vmatprep.subr.mxu0 0.0
    %795 = vmatpush1.msra.mxu0 0.0
    %796 = vmatprep.subr.mxu0 0.0
    %797 = vmatpush1.msra.mxu0 0.0
    %798 = vmatprep.subr.mxu0 0.0
    %799 = vmatpush1.msra.mxu0 0.0
    %800 = vmatprep.subr.mxu0 0.0
    %801 = vmatpush1.msra.mxu0 0.0
    %802 = vmatprep.subr.mxu0 0.0
    %803 = vmatpush1.msra.mxu0 0.0
    %804 = vmatprep.subr.mxu0 0.0
    %805 = vmatpush1.msra.mxu0 0.0
    %806 = vmatprep.mubr.f32.mxu0 0.0
    %807 = vmatmul.mubr.f32.gmra.mrb[0].mxu0 %v506
    %v808 = vpop.f32.mrb[0].mxu0
    %v809 = vadd.f32 0.0, %v808
    %v810 = vpop.f32.mrb[0].mxu0
    %v811 = vadd.f32 0.0, %v810
    %812 = vdwg.mxu0
    %813 = vmatprep.subr.mxu0 %v276
    %814 = vmatpush1.msra.mxu0 %v275
    %815 = vmatprep.subr.mxu0 %v280
    %816 = vmatpush1.msra.mxu0 %v279
    %817 = vmatprep.subr.mxu0 %v284
    %818 = vmatpush1.msra.mxu0 %v283
    %819 = vmatprep.subr.mxu0 %v288
    %820 = vmatpush1.msra.mxu0 %v287
    %821 = vmatprep.subr.mxu0 %v292
    %822 = vmatpush1.msra.mxu0 %v291
    %823 = vmatprep.subr.mxu0 %v296
    %824 = vmatpush1.msra.mxu0 %v295
    %825 = vmatprep.subr.mxu0 %v300
    %826 = vmatpush1.msra.mxu0 %v299
    %827 = vmatprep.subr.mxu0 %v304
    %828 = vmatpush1.msra.mxu0 %v303
    %829 = vmatprep.subr.mxu0 %v308
    %830 = vmatpush1.msra.mxu0 %v307
    %831 = vmatprep.subr.mxu0 %v312
    %832 = vmatpush1.msra.mxu0 %v311
    %833 = vmatprep.subr.mxu0 %v316
    %834 = vmatpush1.msra.mxu0 %v315
    %835 = vmatprep.subr.mxu0 %v320
    %836 = vmatpush1.msra.mxu0 %v319
    %837 = vmatprep.subr.mxu0 %v324
    %838 = vmatpush1.msra.mxu0 %v323
    %839 = vmatprep.subr.mxu0 %v328
    %840 = vmatpush1.msra.mxu0 %v327
    %841 = vmatprep.subr.mxu0 %v332
    %842 = vmatpush1.msra.mxu0 %v331
    %843 = vmatprep.subr.mxu0 %v336
    %844 = vmatpush1.msra.mxu0 %v335
    %845 = vmatprep.subr.mxu0 0.0
    %846 = vmatpush1.msra.mxu0 0.0
    %847 = vmatprep.subr.mxu0 0.0
    %848 = vmatpush1.msra.mxu0 0.0
    %849 = vmatprep.subr.mxu0 0.0
    %850 = vmatpush1.msra.mxu0 0.0
    %851 = vmatprep.subr.mxu0 0.0
    %852 = vmatpush1.msra.mxu0 0.0
    %853 = vmatprep.subr.mxu0 0.0
    %854 = vmatpush1.msra.mxu0 0.0
    %855 = vmatprep.subr.mxu0 0.0
    %856 = vmatpush1.msra.mxu0 0.0
    %857 = vmatprep.subr.mxu0 0.0
    %858 = vmatpush1.msra.mxu0 0.0
    %859 = vmatprep.subr.mxu0 0.0
    %860 = vmatpush1.msra.mxu0 0.0
    %861 = vmatprep.subr.mxu0 0.0
    %862 = vmatpush1.msra.mxu0 0.0
    %863 = vmatprep.subr.mxu0 0.0
    %864 = vmatpush1.msra.mxu0 0.0
    %865 = vmatprep.subr.mxu0 0.0
    %866 = vmatpush1.msra.mxu0 0.0
    %867 = vmatprep.subr.mxu0 0.0
    %868 = vmatpush1.msra.mxu0 0.0
    %869 = vmatprep.subr.mxu0 0.0
    %870 = vmatpush1.msra.mxu0 0.0
    %871 = vmatprep.subr.mxu0 0.0
    %872 = vmatpush1.msra.mxu0 0.0
    %873 = vmatprep.subr.mxu0 0.0
    %874 = vmatpush1.msra.mxu0 0.0
    %875 = vmatprep.subr.mxu0 0.0
    %876 = vmatpush1.msra.mxu0 0.0
    %877 = vmatprep.mubr.f32.mxu0 0.0
    %878 = vmatmul.mubr.f32.gmra.mrb[0].mxu0 %v506
    %v879 = vpop.f32.mrb[0].mxu0
    %v880 = vadd.f32 0.0, %v879
    %v881 = vpop.f32.mrb[0].mxu0
    %v882 = vadd.f32 0.0, %v881
    %883 = vdwg.mxu0
    %v884 = vadd.f32 %v738, %v809
    %v885 = vadd.f32 %v739, %v811
    %v886 = vadd.f32 %v740, %v880
    %v887 = vadd.f32 %v741, %v882
    %v888 = vxor.u32 %v884, 2147483648
    %v889 = vmul.f32 %v888, 1.442695
    %v890 = vpow.pop %v889
    %v891 = vadd.f32 %v890, 1.0
    %v892 = vrcp.pop %v891
    %v893 = vmul.f32 1.0, %v892
    %v894 = vxor.u32 %v885, 2147483648
    %v895 = vmul.f32 %v894, 1.442695
    %v896 = vpow.pop %v895
    %v897 = vadd.f32 %v896, 1.0
    %v898 = vrcp.pop %v897
    %v899 = vmul.f32 1.0, %v898
    %v900 = vtanh.pop %v886
    %v901 = vxor.u32 %v887, 2147483648
    %v902 = vmul.f32 %v901, 1.442695
    %v903 = vpow.pop %v902
    %v904 = vadd.f32 %v903, 1.0
    %v905 = vrcp.pop %v904
    %v906 = vmul.f32 1.0, %v905
    %v907 = vmul.f32 %v899, %v504
    %v908 = vmul.f32 %v893, %v900
    %v909 = vadd.f32 %v907, %v908
    %v910 = vtanh.pop %v909
    %v911 = vmul.f32 %v906, %v910
    %v912 = vadd.f32 %v911, %v737
    %913 = vmatprep.subr.mxu0 %v509
    %914 = vmatpush1.msra.mxu0 %v508
    %915 = vmatprep.subr.mxu0 %v513
    %916 = vmatpush1.msra.mxu0 %v512
    %917 = vmatprep.subr.mxu0 %v517
    %918 = vmatpush1.msra.mxu0 %v516
    %919 = vmatprep.subr.mxu0 %v521
    %920 = vmatpush1.msra.mxu0 %v520
    %921 = vmatprep.subr.mxu0 %v525
    %922 = vmatpush1.msra.mxu0 %v524
    %923 = vmatprep.subr.mxu0 %v529
    %924 = vmatpush1.msra.mxu0 %v528
    %925 = vmatprep.subr.mxu0 %v533
    %926 = vmatpush1.msra.mxu0 %v532
    %927 = vmatprep.subr.mxu0 %v537
    %928 = vmatpush1.msra.mxu0 %v536
    %929 = vmatprep.subr.mxu0 %v541
    %930 = vmatpush1.msra.mxu0 %v540
    %931 = vmatprep.subr.mxu0 %v545
    %932 = vmatpush1.msra.mxu0 %v544
    %933 = vmatprep.subr.mxu0 %v549
    %934 = vmatpush1.msra.mxu0 %v548
    %935 = vmatprep.subr.mxu0 %v553
    %936 = vmatpush1.msra.mxu0 %v552
    %937 = vmatprep.subr.mxu0 %v557
    %938 = vmatpush1.msra.mxu0 %v556
    %939 = vmatprep.subr.mxu0 %v561
    %940 = vmatpush1.msra.mxu0 %v560
    %941 = vmatprep.subr.mxu0 %v565
    %942 = vmatpush1.msra.mxu0 %v564
    %943 = vmatprep.subr.mxu0 %v569
    %944 = vmatpush1.msra.mxu0 %v568
    %945 = vmatprep.subr.mxu0 0.0
    %946 = vmatpush1.msra.mxu0 0.0
    %947 = vmatprep.subr.mxu0 0.0
    %948 = vmatpush1.msra.mxu0 0.0
    %949 = vmatprep.subr.mxu0 0.0
    %950 = vmatpush1.msra.mxu0 0.0
    %951 = vmatprep.subr.mxu0 0.0
    %952 = vmatpush1.msra.mxu0 0.0
    %953 = vmatprep.subr.mxu0 0.0
    %954 = vmatpush1.msra.mxu0 0.0
    %955 = vmatprep.subr.mxu0 0.0
    %956 = vmatpush1.msra.mxu0 0.0
    %957 = vmatprep.subr.mxu0 0.0
    %958 = vmatpush1.msra.mxu0 0.0
    %959 = vmatprep.subr.mxu0 0.0
    %960 = vmatpush1.msra.mxu0 0.0
    %961 = vmatprep.subr.mxu0 0.0
    %962 = vmatpush1.msra.mxu0 0.0
    %963 = vmatprep.subr.mxu0 0.0
    %964 = vmatpush1.msra.mxu0 0.0
    %965 = vmatprep.subr.mxu0 0.0
    %966 = vmatpush1.msra.mxu0 0.0
    %967 = vmatprep.subr.mxu0 0.0
    %968 = vmatpush1.msra.mxu0 0.0
    %969 = vmatprep.subr.mxu0 0.0
    %970 = vmatpush1.msra.mxu0 0.0
    %971 = vmatprep.subr.mxu0 0.0
    %972 = vmatpush1.msra.mxu0 0.0
    %973 = vmatprep.subr.mxu0 0.0
    %974 = vmatpush1.msra.mxu0 0.0
    %975 = vmatprep.subr.mxu0 0.0
    %976 = vmatpush1.msra.mxu0 0.0
    %977 = vmatprep.mubr.f32.mxu0 0.0
    %978 = vmatmul.mubr.f32.gmra.mrb[0].mxu0 %v912
    %v979 = vpop.f32.mrb[0].mxu0
    %v980 = vadd.f32 %v252, %v979
    %v981 = vpop.f32.mrb[0].mxu0
    %v982 = vadd.f32 %v256, %v981
    %983 = vdwg.mxu0
    %984 = vmatprep.subr.mxu0 %v511
    %985 = vmatpush1.msra.mxu0 %v510
    %986 = vmatprep.subr.mxu0 %v515
    %987 = vmatpush1.msra.mxu0 %v514
    %988 = vmatprep.subr.mxu0 %v519
    %989 = vmatpush1.msra.mxu0 %v518
    %990 = vmatprep.subr.mxu0 %v523
    %991 = vmatpush1.msra.mxu0 %v522
    %992 = vmatprep.subr.mxu0 %v527
    %993 = vmatpush1.msra.mxu0 %v526
    %994 = vmatprep.subr.mxu0 %v531
    %995 = vmatpush1.msra.mxu0 %v530
    %996 = vmatprep.subr.mxu0 %v535
    %997 = vmatpush1.msra.mxu0 %v534
    %998 = vmatprep.subr.mxu0 %v539
    %999 = vmatpush1.msra.mxu0 %v538
    %1000 = vmatprep.subr.mxu0 %v543
    %1001 = vmatpush1.msra.mxu0 %v542
    %1002 = vmatprep.subr.mxu0 %v547
    %1003 = vmatpush1.msra.mxu0 %v546
    %1004 = vmatprep.subr.mxu0 %v551
    %1005 = vmatpush1.msra.mxu0 %v550
    %1006 = vmatprep.subr.mxu0 %v555
    %1007 = vmatpush1.msra.mxu0 %v554
    %1008 = vmatprep.subr.mxu0 %v559
    %1009 = vmatpush1.msra.mxu0 %v558
    %1010 = vmatprep.subr.mxu0 %v563
    %1011 = vmatpush1.msra.mxu0 %v562
    %1012 = vmatprep.subr.mxu0 %v567
    %1013 = vmatpush1.msra.mxu0 %v566
    %1014 = vmatprep.subr.mxu0 %v571
    %1015 = vmatpush1.msra.mxu0 %v570
    %1016 = vmatprep.subr.mxu0 0.0
    %1017 = vmatpush1.msra.mxu0 0.0
    %1018 = vmatprep.subr.mxu0 0.0
    %1019 = vmatpush1.msra.mxu0 0.0
    %1020 = vmatprep.subr.mxu0 0.0
    %1021 = vmatpush1.msra.mxu0 0.0
    %1022 = vmatprep.subr.mxu0 0.0
    %1023 = vmatpush1.msra.mxu0 0.0
    %1024 = vmatprep.subr.mxu0 0.0
    %1025 = vmatpush1.msra.mxu0 0.0
    %1026 = vmatprep.subr.mxu0 0.0
    %1027 = vmatpush1.msra.mxu0 0.0
    %1028 = vmatprep.subr.mxu0 0.0
    %1029 = vmatpush1.msra.mxu0 0.0
    %1030 = vmatprep.subr.mxu0 0.0
    %1031 = vmatpush1.msra.mxu0 0.0
    %1032 = vmatprep.subr.mxu0 0.0
    %1033 = vmatpush1.msra.mxu0 0.0
    %1034 = vmatprep.subr.mxu0 0.0
    %1035 = vmatpush1.msra.mxu0 0.0
    %1036 = vmatprep.subr.mxu0 0.0
    %1037 = vmatpush1.msra.mxu0 0.0
    %1038 = vmatprep.subr.mxu0 0.0
    %1039 = vmatpush1.msra.mxu0 0.0
    %1040 = vmatprep.subr.mxu0 0.0
    %1041 = vmatpush1.msra.mxu0 0.0
    %1042 = vmatprep.subr.mxu0 0.0
    %1043 = vmatpush1.msra.mxu0 0.0
    %1044 = vmatprep.subr.mxu0 0.0
    %1045 = vmatpush1.msra.mxu0 0.0
    %1046 = vmatprep.subr.mxu0 0.0
    %1047 = vmatpush1.msra.mxu0 0.0
    %1048 = vmatprep.mubr.f32.mxu0 0.0
    %1049 = vmatmul.mubr.f32.gmra.mrb[0].mxu0 %v912
    %v1050 = vpop.f32.mrb[0].mxu0
    %v1051 = vadd.f32 %v260, %v1050
    %v1052 = vpop.f32.mrb[0].mxu0
    %v1053 = vadd.f32 %v264, %v1052
    %1054 = vdwg.mxu0
    %v1055 = vxor.u32 %v980, 2147483648
    %v1056 = vmul.f32 %v1055, 1.442695
    %v1057 = vpow.pop %v1056
    %v1058 = vadd.f32 %v1057, 1.0
    %v1059 = vrcp.pop %v1058
    %v1060 = vmul.f32 1.0, %v1059
    %v1061 = vxor.u32 %v982, 2147483648
    %v1062 = vmul.f32 %v1061, 1.442695
    %v1063 = vpow.pop %v1062
    %v1064 = vadd.f32 %v1063, 1.0
    %v1065 = vrcp.pop %v1064
    %v1066 = vmul.f32 1.0, %v1065
    %v1067 = vtanh.pop %v1051
    %v1068 = vxor.u32 %v1053, 2147483648
    %v1069 = vmul.f32 %v1068, 1.442695
    %v1070 = vpow.pop %v1069
    %v1071 = vadd.f32 %v1070, 1.0
    %v1072 = vrcp.pop %v1071
    %v1073 = vmul.f32 1.0, %v1072
    %v1074 = vmul.f32 %v1066, %v735
    %v1075 = vmul.f32 %v1060, %v1067
    %v1076 = vadd.f32 %v1074, %v1075
    %v1077 = vtanh.pop %v1076
    %v1078 = vmul.f32 %v1073, %v1077
    %v1079 = vld [vmem:[#allocation2 + $0x40] sm:$0xff]
    %v1080 = vld [vmem:[#allocation2 + $0x48] sm:$0xff]
    %v1081 = vld [vmem:[#allocation2 + $0x50] sm:$0xff]
    %v1082 = vld [vmem:[#allocation2 + $0x58] sm:$0xff]
    %1083 = vmatprep.subr.mxu0 %v274
    %1084 = vmatpush1.msra.mxu0 %v273
    %1085 = vmatprep.subr.mxu0 %v278
    %1086 = vmatpush1.msra.mxu0 %v277
    %1087 = vmatprep.subr.mxu0 %v282
    %1088 = vmatpush1.msra.mxu0 %v281
    %1089 = vmatprep.subr.mxu0 %v286
    %1090 = vmatpush1.msra.mxu0 %v285
    %1091 = vmatprep.subr.mxu0 %v290
    %1092 = vmatpush1.msra.mxu0 %v289
    %1093 = vmatprep.subr.mxu0 %v294
    %1094 = vmatpush1.msra.mxu0 %v293
    %1095 = vmatprep.subr.mxu0 %v298
    %1096 = vmatpush1.msra.mxu0 %v297
    %1097 = vmatprep.subr.mxu0 %v302
    %1098 = vmatpush1.msra.mxu0 %v301
    %1099 = vmatprep.subr.mxu0 %v306
    %1100 = vmatpush1.msra.mxu0 %v305
    %1101 = vmatprep.subr.mxu0 %v310
    %1102 = vmatpush1.msra.mxu0 %v309
    %1103 = vmatprep.subr.mxu0 %v314
    %1104 = vmatpush1.msra.mxu0 %v313
    %1105 = vmatprep.subr.mxu0 %v318
    %1106 = vmatpush1.msra.mxu0 %v317
    %1107 = vmatprep.subr.mxu0 %v322
    %1108 = vmatpush1.msra.mxu0 %v321
    %1109 = vmatprep.subr.mxu0 %v326
    %1110 = vmatpush1.msra.mxu0 %v325
    %1111 = vmatprep.subr.mxu0 %v330
    %1112 = vmatpush1.msra.mxu0 %v329
    %1113 = vmatprep.subr.mxu0 %v334
    %1114 = vmatpush1.msra.mxu0 %v333
    %1115 = vmatprep.subr.mxu0 0.0
    %1116 = vmatpush1.msra.mxu0 0.0
    %1117 = vmatprep.subr.mxu0 0.0
    %1118 = vmatpush1.msra.mxu0 0.0
    %1119 = vmatprep.subr.mxu0 0.0
    %1120 = vmatpush1.msra.mxu0 0.0
    %1121 = vmatprep.subr.mxu0 0.0
    %1122 = vmatpush1.msra.mxu0 0.0
    %1123 = vmatprep.subr.mxu0 0.0
    %1124 = vmatpush1.msra.mxu0 0.0
    %1125 = vmatprep.subr.mxu0 0.0
    %1126 = vmatpush1.msra.mxu0 0.0
    %1127 = vmatprep.subr.mxu0 0.0
    %1128 = vmatpush1.msra.mxu0 0.0
    %1129 = vmatprep.subr.mxu0 0.0
    %1130 = vmatpush1.msra.mxu0 0.0
    %1131 = vmatprep.subr.mxu0 0.0
    %1132 = vmatpush1.msra.mxu0 0.0
    %1133 = vmatprep.subr.mxu0 0.0
    %1134 = vmatpush1.msra.mxu0 0.0
    %1135 = vmatprep.subr.mxu0 0.0
    %1136 = vmatpush1.msra.mxu0 0.0
    %1137 = vmatprep.subr.mxu0 0.0
    %1138 = vmatpush1.msra.mxu0 0.0
    %1139 = vmatprep.subr.mxu0 0.0
    %1140 = vmatpush1.msra.mxu0 0.0
    %1141 = vmatprep.subr.mxu0 0.0
    %1142 = vmatpush1.msra.mxu0 0.0
    %1143 = vmatprep.subr.mxu0 0.0
    %1144 = vmatpush1.msra.mxu0 0.0
    %1145 = vmatprep.subr.mxu0 0.0
    %1146 = vmatpush1.msra.mxu0 0.0
    %1147 = vmatprep.mubr.f32.mxu0 0.0
    %1148 = vmatmul.mubr.f32.gmra.mrb[0].mxu0 %v911
    %v1149 = vpop.f32.mrb[0].mxu0
    %v1150 = vadd.f32 0.0, %v1149
    %v1151 = vpop.f32.mrb[0].mxu0
    %v1152 = vadd.f32 0.0, %v1151
    %1153 = vdwg.mxu0
    %1154 = vmatprep.subr.mxu0 %v276
    %1155 = vmatpush1.msra.mxu0 %v275
    %1156 = vmatprep.subr.mxu0 %v280
    %1157 = vmatpush1.msra.mxu0 %v279
    %1158 = vmatprep.subr.mxu0 %v284
    %1159 = vmatpush1.msra.mxu0 %v283
    %1160 = vmatprep.subr.mxu0 %v288
    %1161 = vmatpush1.msra.mxu0 %v287
    %1162 = vmatprep.subr.mxu0 %v292
    %1163 = vmatpush1.msra.mxu0 %v291
    %1164 = vmatprep.subr.mxu0 %v296
    %1165 = vmatpush1.msra.mxu0 %v295
    %1166 = vmatprep.subr.mxu0 %v300
    %1167 = vmatpush1.msra.mxu0 %v299
    %1168 = vmatprep.subr.mxu0 %v304
    %1169 = vmatpush1.msra.mxu0 %v303
    %1170 = vmatprep.subr.mxu0 %v308
    %1171 = vmatpush1.msra.mxu0 %v307
    %1172 = vmatprep.subr.mxu0 %v312
    %1173 = vmatpush1.msra.mxu0 %v311
    %1174 = vmatprep.subr.mxu0 %v316
    %1175 = vmatpush1.msra.mxu0 %v315
    %1176 = vmatprep.subr.mxu0 %v320
    %1177 = vmatpush1.msra.mxu0 %v319
    %1178 = vmatprep.subr.mxu0 %v324
    %1179 = vmatpush1.msra.mxu0 %v323
    %1180 = vmatprep.subr.mxu0 %v328
    %1181 = vmatpush1.msra.mxu0 %v327
    %1182 = vmatprep.subr.mxu0 %v332
    %1183 = vmatpush1.msra.mxu0 %v331
    %1184 = vmatprep.subr.mxu0 %v336
    %1185 = vmatpush1.msra.mxu0 %v335
    %1186 = vmatprep.subr.mxu0 0.0
    %1187 = vmatpush1.msra.mxu0 0.0
    %1188 = vmatprep.subr.mxu0 0.0
    %1189 = vmatpush1.msra.mxu0 0.0
    %1190 = vmatprep.subr.mxu0 0.0
    %1191 = vmatpush1.msra.mxu0 0.0
    %1192 = vmatprep.subr.mxu0 0.0
    %1193 = vmatpush1.msra.mxu0 0.0
    %1194 = vmatprep.subr.mxu0 0.0
    %1195 = vmatpush1.msra.mxu0 0.0
    %1196 = vmatprep.subr.mxu0 0.0
    %1197 = vmatpush1.msra.mxu0 0.0
    %1198 = vmatprep.subr.mxu0 0.0
    %1199 = vmatpush1.msra.mxu0 0.0
    %1200 = vmatprep.subr.mxu0 0.0
    %1201 = vmatpush1.msra.mxu0 0.0
    %1202 = vmatprep.subr.mxu0 0.0
    %1203 = vmatpush1.msra.mxu0 0.0
    %1204 = vmatprep.subr.mxu0 0.0
    %1205 = vmatpush1.msra.mxu0 0.0
    %1206 = vmatprep.subr.mxu0 0.0
    %1207 = vmatpush1.msra.mxu0 0.0
    %1208 = vmatprep.subr.mxu0 0.0
    %1209 = vmatpush1.msra.mxu0 0.0
    %1210 = vmatprep.subr.mxu0 0.0
    %1211 = vmatpush1.msra.mxu0 0.0
    %1212 = vmatprep.subr.mxu0 0.0
    %1213 = vmatpush1.msra.mxu0 0.0
    %1214 = vmatprep.subr.mxu0 0.0
    %1215 = vmatpush1.msra.mxu0 0.0
    %1216 = vmatprep.subr.mxu0 0.0
    %1217 = vmatpush1.msra.mxu0 0.0
    %1218 = vmatprep.mubr.f32.mxu0 0.0
    %1219 = vmatmul.mubr.f32.gmra.mrb[0].mxu0 %v911
    %v1220 = vpop.f32.mrb[0].mxu0
    %v1221 = vadd.f32 0.0, %v1220
    %v1222 = vpop.f32.mrb[0].mxu0
    %v1223 = vadd.f32 0.0, %v1222
    %1224 = vdwg.mxu0
    %v1225 = vadd.f32 %v1079, %v1150
    %v1226 = vadd.f32 %v1080, %v1152
    %v1227 = vadd.f32 %v1081, %v1221
    %v1228 = vadd.f32 %v1082, %v1223
    %v1229 = vxor.u32 %v1225, 2147483648
    %v1230 = vmul.f32 %v1229, 1.442695
    %v1231 = vpow.pop %v1230
    %v1232 = vadd.f32 %v1231, 1.0
    %v1233 = vrcp.pop %v1232
    %v1234 = vmul.f32 1.0, %v1233
    %v1235 = vxor.u32 %v1226, 2147483648
    %v1236 = vmul.f32 %v1235, 1.442695
    %v1237 = vpow.pop %v1236
    %v1238 = vadd.f32 %v1237, 1.0
    %v1239 = vrcp.pop %v1238
    %v1240 = vmul.f32 1.0, %v1239
    %v1241 = vtanh.pop %v1227
    %v1242 = vxor.u32 %v1228, 2147483648
    %v1243 = vmul.f32 %v1242, 1.442695
    %v1244 = vpow.pop %v1243
    %v1245 = vadd.f32 %v1244, 1.0
    %v1246 = vrcp.pop %v1245
    %v1247 = vmul.f32 1.0, %v1246
    %v1248 = vmul.f32 %v1240, %v909
    %v1249 = vmul.f32 %v1234, %v1241
    %v1250 = vadd.f32 %v1248, %v1249
    %v1251 = vtanh.pop %v1250
    %v1252 = vmul.f32 %v1247, %v1251
    %v1253 = vadd.f32 %v1252, %v1078
    %1254 = vmatprep.subr.mxu0 %v509
    %1255 = vmatpush1.msra.mxu0 %v508
    %1256 = vmatprep.subr.mxu0 %v513
    %1257 = vmatpush1.msra.mxu0 %v512
    %1258 = vmatprep.subr.mxu0 %v517
    %1259 = vmatpush1.msra.mxu0 %v516
    %1260 = vmatprep.subr.mxu0 %v521
    %1261 = vmatpush1.msra.mxu0 %v520
    %1262 = vmatprep.subr.mxu0 %v525
    %1263 = vmatpush1.msra.mxu0 %v524
    %1264 = vmatprep.subr.mxu0 %v529
    %1265 = vmatpush1.msra.mxu0 %v528
    %1266 = vmatprep.subr.mxu0 %v533
    %1267 = vmatpush1.msra.mxu0 %v532
    %1268 = vmatprep.subr.mxu0 %v537
    %1269 = vmatpush1.msra.mxu0 %v536
    %1270 = vmatprep.subr.mxu0 %v541
    %1271 = vmatpush1.msra.mxu0 %v540
    %1272 = vmatprep.subr.mxu0 %v545
    %1273 = vmatpush1.msra.mxu0 %v544
    %1274 = vmatprep.subr.mxu0 %v549
    %1275 = vmatpush1.msra.mxu0 %v548
    %1276 = vmatprep.subr.mxu0 %v553
    %1277 = vmatpush1.msra.mxu0 %v552
    %1278 = vmatprep.subr.mxu0 %v557
    %1279 = vmatpush1.msra.mxu0 %v556
    %1280 = vmatprep.subr.mxu0 %v561
    %1281 = vmatpush1.msra.mxu0 %v560
    %1282 = vmatprep.subr.mxu0 %v565
    %1283 = vmatpush1.msra.mxu0 %v564
    %1284 = vmatprep.subr.mxu0 %v569
    %1285 = vmatpush1.msra.mxu0 %v568
    %1286 = vmatprep.subr.mxu0 0.0
    %1287 = vmatpush1.msra.mxu0 0.0
    %1288 = vmatprep.subr.mxu0 0.0
    %1289 = vmatpush1.msra.mxu0 0.0
    %1290 = vmatprep.subr.mxu0 0.0
    %1291 = vmatpush1.msra.mxu0 0.0
    %1292 = vmatprep.subr.mxu0 0.0
    %1293 = vmatpush1.msra.mxu0 0.0
    %1294 = vmatprep.subr.mxu0 0.0
    %1295 = vmatpush1.msra.mxu0 0.0
    %1296 = vmatprep.subr.mxu0 0.0
    %1297 = vmatpush1.msra.mxu0 0.0
    %1298 = vmatprep.subr.mxu0 0.0
    %1299 = vmatpush1.msra.mxu0 0.0
    %1300 = vmatprep.subr.mxu0 0.0
    %1301 = vmatpush1.msra.mxu0 0.0
    %1302 = vmatprep.subr.mxu0 0.0
    %1303 = vmatpush1.msra.mxu0 0.0
    %1304 = vmatprep.subr.mxu0 0.0
    %1305 = vmatpush1.msra.mxu0 0.0
    %1306 = vmatprep.subr.mxu0 0.0
    %1307 = vmatpush1.msra.mxu0 0.0
    %1308 = vmatprep.subr.mxu0 0.0
    %1309 = vmatpush1.msra.mxu0 0.0
    %1310 = vmatprep.subr.mxu0 0.0
    %1311 = vmatpush1.msra.mxu0 0.0
    %1312 = vmatprep.subr.mxu0 0.0
    %1313 = vmatpush1.msra.mxu0 0.0
    %1314 = vmatprep.subr.mxu0 0.0
    %1315 = vmatpush1.msra.mxu0 0.0
    %1316 = vmatprep.subr.mxu0 0.0
    %1317 = vmatpush1.msra.mxu0 0.0
    %1318 = vmatprep.mubr.f32.mxu0 0.0
    %1319 = vmatmul.mubr.f32.gmra.mrb[0].mxu0 %v1253
    %v1320 = vpop.f32.mrb[0].mxu0
    %v1321 = vadd.f32 %v252, %v1320
    %v1322 = vpop.f32.mrb[0].mxu0
    %v1323 = vadd.f32 %v256, %v1322
    %1324 = vdwg.mxu0
    %1325 = vmatprep.subr.mxu0 %v511
    %1326 = vmatpush1.msra.mxu0 %v510
    %1327 = vmatprep.subr.mxu0 %v515
    %1328 = vmatpush1.msra.mxu0 %v514
    %1329 = vmatprep.subr.mxu0 %v519
    %1330 = vmatpush1.msra.mxu0 %v518
    %1331 = vmatprep.subr.mxu0 %v523
    %1332 = vmatpush1.msra.mxu0 %v522
    %1333 = vmatprep.subr.mxu0 %v527
    %1334 = vmatpush1.msra.mxu0 %v526
    %1335 = vmatprep.subr.mxu0 %v531
    %1336 = vmatpush1.msra.mxu0 %v530
    %1337 = vmatprep.subr.mxu0 %v535
    %1338 = vmatpush1.msra.mxu0 %v534
    %1339 = vmatprep.subr.mxu0 %v539
    %1340 = vmatpush1.msra.mxu0 %v538
    %1341 = vmatprep.subr.mxu0 %v543
    %1342 = vmatpush1.msra.mxu0 %v542
    %1343 = vmatprep.subr.mxu0 %v547
    %1344 = vmatpush1.msra.mxu0 %v546
    %1345 = vmatprep.subr.mxu0 %v551
    %1346 = vmatpush1.msra.mxu0 %v550
    %1347 = vmatprep.subr.mxu0 %v555
    %1348 = vmatpush1.msra.mxu0 %v554
    %1349 = vmatprep.subr.mxu0 %v559
    %1350 = vmatpush1.msra.mxu0 %v558
    %1351 = vmatprep.subr.mxu0 %v563
    %1352 = vmatpush1.msra.mxu0 %v562
    %1353 = vmatprep.subr.mxu0 %v567
    %1354 = vmatpush1.msra.mxu0 %v566
    %1355 = vmatprep.subr.mxu0 %v571
    %1356 = vmatpush1.msra.mxu0 %v570
    %1357 = vmatprep.subr.mxu0 0.0
    %1358 = vmatpush1.msra.mxu0 0.0
    %1359 = vmatprep.subr.mxu0 0.0
    %1360 = vmatpush1.msra.mxu0 0.0
    %1361 = vmatprep.subr.mxu0 0.0
    %1362 = vmatpush1.msra.mxu0 0.0
    %1363 = vmatprep.subr.mxu0 0.0
    %1364 = vmatpush1.msra.mxu0 0.0
    %1365 = vmatprep.subr.mxu0 0.0
    %1366 = vmatpush1.msra.mxu0 0.0
    %1367 = vmatprep.subr.mxu0 0.0
    %1368 = vmatpush1.msra.mxu0 0.0
    %1369 = vmatprep.subr.mxu0 0.0
    %1370 = vmatpush1.msra.mxu0 0.0
    %1371 = vmatprep.subr.mxu0 0.0
    %1372 = vmatpush1.msra.mxu0 0.0
    %1373 = vmatprep.subr.mxu0 0.0
    %1374 = vmatpush1.msra.mxu0 0.0
    %1375 = vmatprep.subr.mxu0 0.0
    %1376 = vmatpush1.msra.mxu0 0.0
    %1377 = vmatprep.subr.mxu0 0.0
    %1378 = vmatpush1.msra.mxu0 0.0
    %1379 = vmatprep.subr.mxu0 0.0
    %1380 = vmatpush1.msra.mxu0 0.0
    %1381 = vmatprep.subr.mxu0 0.0
    %1382 = vmatpush1.msra.mxu0 0.0
    %1383 = vmatprep.subr.mxu0 0.0
    %1384 = vmatpush1.msra.mxu0 0.0
    %1385 = vmatprep.subr.mxu0 0.0
    %1386 = vmatpush1.msra.mxu0 0.0
    %1387 = vmatprep.subr.mxu0 0.0
    %1388 = vmatpush1.msra.mxu0 0.0
    %1389 = vmatprep.mubr.f32.mxu0 0.0
    %1390 = vmatmul.mubr.f32.gmra.mrb[0].mxu0 %v1253
    %v1391 = vpop.f32.mrb[0].mxu0
    %v1392 = vadd.f32 %v260, %v1391
    %v1393 = vpop.f32.mrb[0].mxu0
    %v1394 = vadd.f32 %v264, %v1393
    %1395 = vdwg.mxu0
    %v1396 = vxor.u32 %v1321, 2147483648
    %v1397 = vmul.f32 %v1396, 1.442695
    %v1398 = vpow.pop %v1397
    %v1399 = vadd.f32 %v1398, 1.0
    %v1400 = vrcp.pop %v1399
    %v1401 = vmul.f32 1.0, %v1400
    %v1402 = vxor.u32 %v1323, 2147483648
    %v1403 = vmul.f32 %v1402, 1.442695
    %v1404 = vpow.pop %v1403
    %v1405 = vadd.f32 %v1404, 1.0
    %v1406 = vrcp.pop %v1405
    %v1407 = vmul.f32 1.0, %v1406
    %v1408 = vtanh.pop %v1392
    %v1409 = vxor.u32 %v1394, 2147483648
    %v1410 = vmul.f32 %v1409, 1.442695
    %v1411 = vpow.pop %v1410
    %v1412 = vadd.f32 %v1411, 1.0
    %v1413 = vrcp.pop %v1412
    %v1414 = vmul.f32 1.0, %v1413
    %v1415 = vmul.f32 %v1407, %v1076
    %v1416 = vmul.f32 %v1401, %v1408
    %v1417 = vadd.f32 %v1415, %v1416
    %v1418 = vtanh.pop %v1417
    %v1419 = vmul.f32 %v1414, %v1418
    %v1420 = vld [vmem:[#allocation2 + $0x60] sm:$0xff]
    %v1421 = vld [vmem:[#allocation2 + $0x68] sm:$0xff]
    %v1422 = vld [vmem:[#allocation2 + $0x70] sm:$0xff]
    %v1423 = vld [vmem:[#allocation2 + $0x78] sm:$0xff]
    %1424 = vmatprep.subr.mxu0 %v274
    %1425 = vmatpush1.msra.mxu0 %v273
    %1426 = vmatprep.subr.mxu0 %v278
    %1427 = vmatpush1.msra.mxu0 %v277
    %1428 = vmatprep.subr.mxu0 %v282
    %1429 = vmatpush1.msra.mxu0 %v281
    %1430 = vmatprep.subr.mxu0 %v286
    %1431 = vmatpush1.msra.mxu0 %v285
    %1432 = vmatprep.subr.mxu0 %v290
    %1433 = vmatpush1.msra.mxu0 %v289
    %1434 = vmatprep.subr.mxu0 %v294
    %1435 = vmatpush1.msra.mxu0 %v293
    %1436 = vmatprep.subr.mxu0 %v298
    %1437 = vmatpush1.msra.mxu0 %v297
    %1438 = vmatprep.subr.mxu0 %v302
    %1439 = vmatpush1.msra.mxu0 %v301
    %1440 = vmatprep.subr.mxu0 %v306
    %1441 = vmatpush1.msra.mxu0 %v305
    %1442 = vmatprep.subr.mxu0 %v310
    %1443 = vmatpush1.msra.mxu0 %v309
    %1444 = vmatprep.subr.mxu0 %v314
    %1445 = vmatpush1.msra.mxu0 %v313
    %1446 = vmatprep.subr.mxu0 %v318
    %1447 = vmatpush1.msra.mxu0 %v317
    %1448 = vmatprep.subr.mxu0 %v322
    %1449 = vmatpush1.msra.mxu0 %v321
    %1450 = vmatprep.subr.mxu0 %v326
    %1451 = vmatpush1.msra.mxu0 %v325
    %1452 = vmatprep.subr.mxu0 %v330
    %1453 = vmatpush1.msra.mxu0 %v329
    %1454 = vmatprep.subr.mxu0 %v334
    %1455 = vmatpush1.msra.mxu0 %v333
    %1456 = vmatprep.subr.mxu0 0.0
    %1457 = vmatpush1.msra.mxu0 0.0
    %1458 = vmatprep.subr.mxu0 0.0
    %1459 = vmatpush1.msra.mxu0 0.0
    %1460 = vmatprep.subr.mxu0 0.0
    %1461 = vmatpush1.msra.mxu0 0.0
    %1462 = vmatprep.subr.mxu0 0.0
    %1463 = vmatpush1.msra.mxu0 0.0
    %1464 = vmatprep.subr.mxu0 0.0
    %1465 = vmatpush1.msra.mxu0 0.0
    %1466 = vmatprep.subr.mxu0 0.0
    %1467 = vmatpush1.msra.mxu0 0.0
    %1468 = vmatprep.subr.mxu0 0.0
    %1469 = vmatpush1.msra.mxu0 0.0
    %1470 = vmatprep.subr.mxu0 0.0
    %1471 = vmatpush1.msra.mxu0 0.0
    %1472 = vmatprep.subr.mxu0 0.0
    %1473 = vmatpush1.msra.mxu0 0.0
    %1474 = vmatprep.subr.mxu0 0.0
    %1475 = vmatpush1.msra.mxu0 0.0
    %1476 = vmatprep.subr.mxu0 0.0
    %1477 = vmatpush1.msra.mxu0 0.0
    %1478 = vmatprep.subr.mxu0 0.0
    %1479 = vmatpush1.msra.mxu0 0.0
    %1480 = vmatprep.subr.mxu0 0.0
    %1481 = vmatpush1.msra.mxu0 0.0
    %1482 = vmatprep.subr.mxu0 0.0
    %1483 = vmatpush1.msra.mxu0 0.0
    %1484 = vmatprep.subr.mxu0 0.0
    %1485 = vmatpush1.msra.mxu0 0.0
    %1486 = vmatprep.subr.mxu0 0.0
    %1487 = vmatpush1.msra.mxu0 0.0
    %1488 = vmatprep.mubr.f32.mxu0 0.0
    %1489 = vmatmul.mubr.f32.gmra.mrb[0].mxu0 %v1252
    %v1490 = vpop.f32.mrb[0].mxu0
    %v1491 = vadd.f32 0.0, %v1490
    %v1492 = vpop.f32.mrb[0].mxu0
    %v1493 = vadd.f32 0.0, %v1492
    %1494 = vdwg.mxu0
    %1495 = vmatprep.subr.mxu0 %v276
    %1496 = vmatpush1.msra.mxu0 %v275
    %1497 = vmatprep.subr.mxu0 %v280
    %1498 = vmatpush1.msra.mxu0 %v279
    %1499 = vmatprep.subr.mxu0 %v284
    %1500 = vmatpush1.msra.mxu0 %v283
    %1501 = vmatprep.subr.mxu0 %v288
    %1502 = vmatpush1.msra.mxu0 %v287
    %1503 = vmatprep.subr.mxu0 %v292
    %1504 = vmatpush1.msra.mxu0 %v291
    %1505 = vmatprep.subr.mxu0 %v296
    %1506 = vmatpush1.msra.mxu0 %v295
    %1507 = vmatprep.subr.mxu0 %v300
    %1508 = vmatpush1.msra.mxu0 %v299
    %1509 = vmatprep.subr.mxu0 %v304
    %1510 = vmatpush1.msra.mxu0 %v303
    %1511 = vmatprep.subr.mxu0 %v308
    %1512 = vmatpush1.msra.mxu0 %v307
    %1513 = vmatprep.subr.mxu0 %v312
    %1514 = vmatpush1.msra.mxu0 %v311
    %1515 = vmatprep.subr.mxu0 %v316
    %1516 = vmatpush1.msra.mxu0 %v315
    %1517 = vmatprep.subr.mxu0 %v320
    %1518 = vmatpush1.msra.mxu0 %v319
    %1519 = vmatprep.subr.mxu0 %v324
    %1520 = vmatpush1.msra.mxu0 %v323
    %1521 = vmatprep.subr.mxu0 %v328
    %1522 = vmatpush1.msra.mxu0 %v327
    %1523 = vmatprep.subr.mxu0 %v332
    %1524 = vmatpush1.msra.mxu0 %v331
    %1525 = vmatprep.subr.mxu0 %v336
    %1526 = vmatpush1.msra.mxu0 %v335
    %1527 = vmatprep.subr.mxu0 0.0
    %1528 = vmatpush1.msra.mxu0 0.0
    %1529 = vmatprep.subr.mxu0 0.0
    %1530 = vmatpush1.msra.mxu0 0.0
    %1531 = vmatprep.subr.mxu0 0.0
    %1532 = vmatpush1.msra.mxu0 0.0
    %1533 = vmatprep.subr.mxu0 0.0
    %1534 = vmatpush1.msra.mxu0 0.0
    %1535 = vmatprep.subr.mxu0 0.0
    %1536 = vmatpush1.msra.mxu0 0.0
    %1537 = vmatprep.subr.mxu0 0.0
    %1538 = vmatpush1.msra.mxu0 0.0
    %1539 = vmatprep.subr.mxu0 0.0
    %1540 = vmatpush1.msra.mxu0 0.0
    %1541 = vmatprep.subr.mxu0 0.0
    %1542 = vmatpush1.msra.mxu0 0.0
    %1543 = vmatprep.subr.mxu0 0.0
    %1544 = vmatpush1.msra.mxu0 0.0
    %1545 = vmatprep.subr.mxu0 0.0
    %1546 = vmatpush1.msra.mxu0 0.0
    %1547 = vmatprep.subr.mxu0 0.0
    %1548 = vmatpush1.msra.mxu0 0.0
    %1549 = vmatprep.subr.mxu0 0.0
    %1550 = vmatpush1.msra.mxu0 0.0
    %1551 = vmatprep.subr.mxu0 0.0
    %1552 = vmatpush1.msra.mxu0 0.0
    %1553 = vmatprep.subr.mxu0 0.0
    %1554 = vmatpush1.msra.mxu0 0.0
    %1555 = vmatprep.subr.mxu0 0.0
    %1556 = vmatpush1.msra.mxu0 0.0
    %1557 = vmatprep.subr.mxu0 0.0
    %1558 = vmatpush1.msra.mxu0 0.0
    %1559 = vmatprep.mubr.f32.mxu0 0.0
    %1560 = vmatmul.mubr.f32.gmra.mrb[0].mxu0 %v1252
    %v1561 = vpop.f32.mrb[0].mxu0
    %v1562 = vadd.f32 0.0, %v1561
    %v1563 = vpop.f32.mrb[0].mxu0
    %v1564 = vadd.f32 0.0, %v1563
    %1565 = vdwg.mxu0
    %v1566 = vadd.f32 %v1420, %v1491
    %v1567 = vadd.f32 %v1421, %v1493
    %v1568 = vadd.f32 %v1422, %v1562
    %v1569 = vadd.f32 %v1423, %v1564
    %v1570 = vxor.u32 %v1566, 2147483648
    %v1571 = vmul.f32 %v1570, 1.442695
    %v1572 = vpow.pop %v1571
    %v1573 = vadd.f32 %v1572, 1.0
    %v1574 = vrcp.pop %v1573
    %v1575 = vmul.f32 1.0, %v1574
    %v1576 = vxor.u32 %v1567, 2147483648
    %v1577 = vmul.f32 %v1576, 1.442695
    %v1578 = vpow.pop %v1577
    %v1579 = vadd.f32 %v1578, 1.0
    %v1580 = vrcp.pop %v1579
    %v1581 = vmul.f32 1.0, %v1580
    %v1582 = vtanh.pop %v1568
    %v1583 = vxor.u32 %v1569, 2147483648
    %v1584 = vmul.f32 %v1583, 1.442695
    %v1585 = vpow.pop %v1584
    %v1586 = vadd.f32 %v1585, 1.0
    %v1587 = vrcp.pop %v1586
    %v1588 = vmul.f32 1.0, %v1587
    %v1589 = vmul.f32 %v1581, %v1250
    %v1590 = vmul.f32 %v1575, %v1582
    %v1591 = vadd.f32 %v1589, %v1590
    %v1592 = vtanh.pop %v1591
    %v1593 = vmul.f32 %v1588, %v1592
    %v1594 = vadd.f32 %v1593, %v1419
    %1595 = vmatprep.subr.mxu0 %v509
    %1596 = vmatpush1.msra.mxu0 %v508
    %1597 = vmatprep.subr.mxu0 %v513
    %1598 = vmatpush1.msra.mxu0 %v512
    %1599 = vmatprep.subr.mxu0 %v517
    %1600 = vmatpush1.msra.mxu0 %v516
    %1601 = vmatprep.subr.mxu0 %v521
    %1602 = vmatpush1.msra.mxu0 %v520
    %1603 = vmatprep.subr.mxu0 %v525
    %1604 = vmatpush1.msra.mxu0 %v524
    %1605 = vmatprep.subr.mxu0 %v529
    %1606 = vmatpush1.msra.mxu0 %v528
    %1607 = vmatprep.subr.mxu0 %v533
    %1608 = vmatpush1.msra.mxu0 %v532
    %1609 = vmatprep.subr.mxu0 %v537
    %1610 = vmatpush1.msra.mxu0 %v536
    %1611 = vmatprep.subr.mxu0 %v541
    %1612 = vmatpush1.msra.mxu0 %v540
    %1613 = vmatprep.subr.mxu0 %v545
    %1614 = vmatpush1.msra.mxu0 %v544
    %1615 = vmatprep.subr.mxu0 %v549
    %1616 = vmatpush1.msra.mxu0 %v548
    %1617 = vmatprep.subr.mxu0 %v553
    %1618 = vmatpush1.msra.mxu0 %v552
    %1619 = vmatprep.subr.mxu0 %v557
    %1620 = vmatpush1.msra.mxu0 %v556
    %1621 = vmatprep.subr.mxu0 %v561
    %1622 = vmatpush1.msra.mxu0 %v560
    %1623 = vmatprep.subr.mxu0 %v565
    %1624 = vmatpush1.msra.mxu0 %v564
    %1625 = vmatprep.subr.mxu0 %v569
    %1626 = vmatpush1.msra.mxu0 %v568
    %1627 = vmatprep.subr.mxu0 0.0
    %1628 = vmatpush1.msra.mxu0 0.0
    %1629 = vmatprep.subr.mxu0 0.0
    %1630 = vmatpush1.msra.mxu0 0.0
    %1631 = vmatprep.subr.mxu0 0.0
    %1632 = vmatpush1.msra.mxu0 0.0
    %1633 = vmatprep.subr.mxu0 0.0
    %1634 = vmatpush1.msra.mxu0 0.0
    %1635 = vmatprep.subr.mxu0 0.0
    %1636 = vmatpush1.msra.mxu0 0.0
    %1637 = vmatprep.subr.mxu0 0.0
    %1638 = vmatpush1.msra.mxu0 0.0
    %1639 = vmatprep.subr.mxu0 0.0
    %1640 = vmatpush1.msra.mxu0 0.0
    %1641 = vmatprep.subr.mxu0 0.0
    %1642 = vmatpush1.msra.mxu0 0.0
    %1643 = vmatprep.subr.mxu0 0.0
    %1644 = vmatpush1.msra.mxu0 0.0
    %1645 = vmatprep.subr.mxu0 0.0
    %1646 = vmatpush1.msra.mxu0 0.0
    %1647 = vmatprep.subr.mxu0 0.0
    %1648 = vmatpush1.msra.mxu0 0.0
    %1649 = vmatprep.subr.mxu0 0.0
    %1650 = vmatpush1.msra.mxu0 0.0
    %1651 = vmatprep.subr.mxu0 0.0
    %1652 = vmatpush1.msra.mxu0 0.0
    %1653 = vmatprep.subr.mxu0 0.0
    %1654 = vmatpush1.msra.mxu0 0.0
    %1655 = vmatprep.subr.mxu0 0.0
    %1656 = vmatpush1.msra.mxu0 0.0
    %1657 = vmatprep.subr.mxu0 0.0
    %1658 = vmatpush1.msra.mxu0 0.0
    %1659 = vmatprep.mubr.f32.mxu0 0.0
    %1660 = vmatmul.mubr.f32.gmra.mrb[0].mxu0 %v1594
    %v1661 = vpop.f32.mrb[0].mxu0
    %v1662 = vadd.f32 %v252, %v1661
    %v1663 = vpop.f32.mrb[0].mxu0
    %v1664 = vadd.f32 %v256, %v1663
    %1665 = vdwg.mxu0
    %1666 = vmatprep.subr.mxu0 %v511
    %1667 = vmatpush1.msra.mxu0 %v510
    %1668 = vmatprep.subr.mxu0 %v515
    %1669 = vmatpush1.msra.mxu0 %v514
    %1670 = vmatprep.subr.mxu0 %v519
    %1671 = vmatpush1.msra.mxu0 %v518
    %1672 = vmatprep.subr.mxu0 %v523
    %1673 = vmatpush1.msra.mxu0 %v522
    %1674 = vmatprep.subr.mxu0 %v527
    %1675 = vmatpush1.msra.mxu0 %v526
    %1676 = vmatprep.subr.mxu0 %v531
    %1677 = vmatpush1.msra.mxu0 %v530
    %1678 = vmatprep.subr.mxu0 %v535
    %1679 = vmatpush1.msra.mxu0 %v534
    %1680 = vmatprep.subr.mxu0 %v539
    %1681 = vmatpush1.msra.mxu0 %v538
    %1682 = vmatprep.subr.mxu0 %v543
    %1683 = vmatpush1.msra.mxu0 %v542
    %1684 = vmatprep.subr.mxu0 %v547
    %1685 = vmatpush1.msra.mxu0 %v546
    %1686 = vmatprep.subr.mxu0 %v551
    %1687 = vmatpush1.msra.mxu0 %v550
    %1688 = vmatprep.subr.mxu0 %v555
    %1689 = vmatpush1.msra.mxu0 %v554
    %1690 = vmatprep.subr.mxu0 %v559
    %1691 = vmatpush1.msra.mxu0 %v558
    %1692 = vmatprep.subr.mxu0 %v563
    %1693 = vmatpush1.msra.mxu0 %v562
    %1694 = vmatprep.subr.mxu0 %v567
    %1695 = vmatpush1.msra.mxu0 %v566
    %1696 = vmatprep.subr.mxu0 %v571
    %1697 = vmatpush1.msra.mxu0 %v570
    %1698 = vmatprep.subr.mxu0 0.0
    %1699 = vmatpush1.msra.mxu0 0.0
    %1700 = vmatprep.subr.mxu0 0.0
    %1701 = vmatpush1.msra.mxu0 0.0
    %1702 = vmatprep.subr.mxu0 0.0
    %1703 = vmatpush1.msra.mxu0 0.0
    %1704 = vmatprep.subr.mxu0 0.0
    %1705 = vmatpush1.msra.mxu0 0.0
    %1706 = vmatprep.subr.mxu0 0.0
    %1707 = vmatpush1.msra.mxu0 0.0
    %1708 = vmatprep.subr.mxu0 0.0
    %1709 = vmatpush1.msra.mxu0 0.0
    %1710 = vmatprep.subr.mxu0 0.0
    %1711 = vmatpush1.msra.mxu0 0.0
    %1712 = vmatprep.subr.mxu0 0.0
    %1713 = vmatpush1.msra.mxu0 0.0
    %1714 = vmatprep.subr.mxu0 0.0
    %1715 = vmatpush1.msra.mxu0 0.0
    %1716 = vmatprep.subr.mxu0 0.0
    %1717 = vmatpush1.msra.mxu0 0.0
    %1718 = vmatprep.subr.mxu0 0.0
    %1719 = vmatpush1.msra.mxu0 0.0
    %1720 = vmatprep.subr.mxu0 0.0
    %1721 = vmatpush1.msra.mxu0 0.0
    %1722 = vmatprep.subr.mxu0 0.0
    %1723 = vmatpush1.msra.mxu0 0.0
    %1724 = vmatprep.subr.mxu0 0.0
    %1725 = vmatpush1.msra.mxu0 0.0
    %1726 = vmatprep.subr.mxu0 0.0
    %1727 = vmatpush1.msra.mxu0 0.0
    %1728 = vmatprep.subr.mxu0 0.0
    %1729 = vmatpush1.msra.mxu0 0.0
    %1730 = vmatprep.mubr.f32.mxu0 0.0
    %1731 = vmatmul.mubr.f32.gmra.mrb[0].mxu0 %v1594
    %v1732 = vpop.f32.mrb[0].mxu0
    %v1733 = vadd.f32 %v260, %v1732
    %v1734 = vpop.f32.mrb[0].mxu0
    %v1735 = vadd.f32 %v264, %v1734
    %1736 = vdwg.mxu0
    %v1737 = vxor.u32 %v1662, 2147483648
    %v1738 = vmul.f32 %v1737, 1.442695
    %v1739 = vpow.pop %v1738
    %v1740 = vadd.f32 %v1739, 1.0
    %v1741 = vrcp.pop %v1740
    %v1742 = vmul.f32 1.0, %v1741
    %v1743 = vxor.u32 %v1664, 2147483648
    %v1744 = vmul.f32 %v1743, 1.442695
    %v1745 = vpow.pop %v1744
    %v1746 = vadd.f32 %v1745, 1.0
    %v1747 = vrcp.pop %v1746
    %v1748 = vmul.f32 1.0, %v1747
    %v1749 = vtanh.pop %v1733
    %v1750 = vxor.u32 %v1735, 2147483648
    %v1751 = vmul.f32 %v1750, 1.442695
    %v1752 = vpow.pop %v1751
    %v1753 = vadd.f32 %v1752, 1.0
    %v1754 = vrcp.pop %v1753
    %v1755 = vmul.f32 1.0, %v1754
    %v1756 = vmul.f32 %v1748, %v1417
    %v1757 = vmul.f32 %v1742, %v1749
    %v1758 = vadd.f32 %v1756, %v1757
    %v1759 = vtanh.pop %v1758
    %v1760 = vmul.f32 %v1755, %v1759
    %v1761 = vld [vmem:[#allocation2 + $0x80] sm:$0xff]
    %v1762 = vld [vmem:[#allocation2 + $0x88] sm:$0xff]
    %v1763 = vld [vmem:[#allocation2 + $0x90] sm:$0xff]
    %v1764 = vld [vmem:[#allocation2 + $0x98] sm:$0xff]
    %1765 = vmatprep.subr.mxu0 %v274
    %1766 = vmatpush1.msra.mxu0 %v273
    %1767 = vmatprep.subr.mxu0 %v278
    %1768 = vmatpush1.msra.mxu0 %v277
    %1769 = vmatprep.subr.mxu0 %v282
    %1770 = vmatpush1.msra.mxu0 %v281
    %1771 = vmatprep.subr.mxu0 %v286
    %1772 = vmatpush1.msra.mxu0 %v285
    %1773 = vmatprep.subr.mxu0 %v290
    %1774 = vmatpush1.msra.mxu0 %v289
    %1775 = vmatprep.subr.mxu0 %v294
    %1776 = vmatpush1.msra.mxu0 %v293
    %1777 = vmatprep.subr.mxu0 %v298
    %1778 = vmatpush1.msra.mxu0 %v297
    %1779 = vmatprep.subr.mxu0 %v302
    %1780 = vmatpush1.msra.mxu0 %v301
    %1781 = vmatprep.subr.mxu0 %v306
    %1782 = vmatpush1.msra.mxu0 %v305
    %1783 = vmatprep.subr.mxu0 %v310
    %1784 = vmatpush1.msra.mxu0 %v309
    %1785 = vmatprep.subr.mxu0 %v314
    %1786 = vmatpush1.msra.mxu0 %v313
    %1787 = vmatprep.subr.mxu0 %v318
    %1788 = vmatpush1.msra.mxu0 %v317
    %1789 = vmatprep.subr.mxu0 %v322
    %1790 = vmatpush1.msra.mxu0 %v321
    %1791 = vmatprep.subr.mxu0 %v326
    %1792 = vmatpush1.msra.mxu0 %v325
    %1793 = vmatprep.subr.mxu0 %v330
    %1794 = vmatpush1.msra.mxu0 %v329
    %1795 = vmatprep.subr.mxu0 %v334
    %1796 = vmatpush1.msra.mxu0 %v333
    %1797 = vmatprep.subr.mxu0 0.0
    %1798 = vmatpush1.msra.mxu0 0.0
    %1799 = vmatprep.subr.mxu0 0.0
    %1800 = vmatpush1.msra.mxu0 0.0
    %1801 = vmatprep.subr.mxu0 0.0
    %1802 = vmatpush1.msra.mxu0 0.0
    %1803 = vmatprep.subr.mxu0 0.0
    %1804 = vmatpush1.msra.mxu0 0.0
    %1805 = vmatprep.subr.mxu0 0.0
    %1806 = vmatpush1.msra.mxu0 0.0
    %1807 = vmatprep.subr.mxu0 0.0
    %1808 = vmatpush1.msra.mxu0 0.0
    %1809 = vmatprep.subr.mxu0 0.0
    %1810 = vmatpush1.msra.mxu0 0.0
    %1811 = vmatprep.subr.mxu0 0.0
    %1812 = vmatpush1.msra.mxu0 0.0
    %1813 = vmatprep.subr.mxu0 0.0
    %1814 = vmatpush1.msra.mxu0 0.0
    %1815 = vmatprep.subr.mxu0 0.0
    %1816 = vmatpush1.msra.mxu0 0.0
    %1817 = vmatprep.subr.mxu0 0.0
    %1818 = vmatpush1.msra.mxu0 0.0
    %1819 = vmatprep.subr.mxu0 0.0
    %1820 = vmatpush1.msra.mxu0 0.0
    %1821 = vmatprep.subr.mxu0 0.0
    %1822 = vmatpush1.msra.mxu0 0.0
    %1823 = vmatprep.subr.mxu0 0.0
    %1824 = vmatpush1.msra.mxu0 0.0
    %1825 = vmatprep.subr.mxu0 0.0
    %1826 = vmatpush1.msra.mxu0 0.0
    %1827 = vmatprep.subr.mxu0 0.0
    %1828 = vmatpush1.msra.mxu0 0.0
    %1829 = vmatprep.mubr.f32.mxu0 0.0
    %1830 = vmatmul.mubr.f32.gmra.mrb[0].mxu0 %v1593
    %v1831 = vpop.f32.mrb[0].mxu0
    %v1832 = vadd.f32 0.0, %v1831
    %v1833 = vpop.f32.mrb[0].mxu0
    %v1834 = vadd.f32 0.0, %v1833
    %1835 = vdwg.mxu0
    %1836 = vmatprep.subr.mxu0 %v276
    %1837 = vmatpush1.msra.mxu0 %v275
    %1838 = vmatprep.subr.mxu0 %v280
    %1839 = vmatpush1.msra.mxu0 %v279
    %1840 = vmatprep.subr.mxu0 %v284
    %1841 = vmatpush1.msra.mxu0 %v283
    %1842 = vmatprep.subr.mxu0 %v288
    %1843 = vmatpush1.msra.mxu0 %v287
    %1844 = vmatprep.subr.mxu0 %v292
    %1845 = vmatpush1.msra.mxu0 %v291
    %1846 = vmatprep.subr.mxu0 %v296
    %1847 = vmatpush1.msra.mxu0 %v295
    %1848 = vmatprep.subr.mxu0 %v300
    %1849 = vmatpush1.msra.mxu0 %v299
    %1850 = vmatprep.subr.mxu0 %v304
    %1851 = vmatpush1.msra.mxu0 %v303
    %1852 = vmatprep.subr.mxu0 %v308
    %1853 = vmatpush1.msra.mxu0 %v307
    %1854 = vmatprep.subr.mxu0 %v312
    %1855 = vmatpush1.msra.mxu0 %v311
    %1856 = vmatprep.subr.mxu0 %v316
    %1857 = vmatpush1.msra.mxu0 %v315
    %1858 = vmatprep.subr.mxu0 %v320
    %1859 = vmatpush1.msra.mxu0 %v319
    %1860 = vmatprep.subr.mxu0 %v324
    %1861 = vmatpush1.msra.mxu0 %v323
    %1862 = vmatprep.subr.mxu0 %v328
    %1863 = vmatpush1.msra.mxu0 %v327
    %1864 = vmatprep.subr.mxu0 %v332
    %1865 = vmatpush1.msra.mxu0 %v331
    %1866 = vmatprep.subr.mxu0 %v336
    %1867 = vmatpush1.msra.mxu0 %v335
    %1868 = vmatprep.subr.mxu0 0.0
    %1869 = vmatpush1.msra.mxu0 0.0
    %1870 = vmatprep.subr.mxu0 0.0
    %1871 = vmatpush1.msra.mxu0 0.0
    %1872 = vmatprep.subr.mxu0 0.0
    %1873 = vmatpush1.msra.mxu0 0.0
    %1874 = vmatprep.subr.mxu0 0.0
    %1875 = vmatpush1.msra.mxu0 0.0
    %1876 = vmatprep.subr.mxu0 0.0
    %1877 = vmatpush1.msra.mxu0 0.0
    %1878 = vmatprep.subr.mxu0 0.0
    %1879 = vmatpush1.msra.mxu0 0.0
    %1880 = vmatprep.subr.mxu0 0.0
    %1881 = vmatpush1.msra.mxu0 0.0
    %1882 = vmatprep.subr.mxu0 0.0
    %1883 = vmatpush1.msra.mxu0 0.0
    %1884 = vmatprep.subr.mxu0 0.0
    %1885 = vmatpush1.msra.mxu0 0.0
    %1886 = vmatprep.subr.mxu0 0.0
    %1887 = vmatpush1.msra.mxu0 0.0
    %1888 = vmatprep.subr.mxu0 0.0
    %1889 = vmatpush1.msra.mxu0 0.0
    %1890 = vmatprep.subr.mxu0 0.0
    %1891 = vmatpush1.msra.mxu0 0.0
    %1892 = vmatprep.subr.mxu0 0.0
    %1893 = vmatpush1.msra.mxu0 0.0
    %1894 = vmatprep.subr.mxu0 0.0
    %1895 = vmatpush1.msra.mxu0 0.0
    %1896 = vmatprep.subr.mxu0 0.0
    %1897 = vmatpush1.msra.mxu0 0.0
    %1898 = vmatprep.subr.mxu0 0.0
    %1899 = vmatpush1.msra.mxu0 0.0
    %1900 = vmatprep.mubr.f32.mxu0 0.0
    %1901 = vmatmul.mubr.f32.gmra.mrb[0].mxu0 %v1593
    %v1902 = vpop.f32.mrb[0].mxu0
    %v1903 = vadd.f32 0.0, %v1902
    %v1904 = vpop.f32.mrb[0].mxu0
    %v1905 = vadd.f32 0.0, %v1904
    %1906 = vdwg.mxu0
    %v1907 = vadd.f32 %v1761, %v1832
    %v1908 = vadd.f32 %v1762, %v1834
    %v1909 = vadd.f32 %v1763, %v1903
    %v1910 = vadd.f32 %v1764, %v1905
    %v1911 = vxor.u32 %v1907, 2147483648
    %v1912 = vmul.f32 %v1911, 1.442695
    %v1913 = vpow.pop %v1912
    %v1914 = vadd.f32 %v1913, 1.0
    %v1915 = vrcp.pop %v1914
    %v1916 = vmul.f32 1.0, %v1915
    %v1917 = vxor.u32 %v1908, 2147483648
    %v1918 = vmul.f32 %v1917, 1.442695
    %v1919 = vpow.pop %v1918
    %v1920 = vadd.f32 %v1919, 1.0
    %v1921 = vrcp.pop %v1920
    %v1922 = vmul.f32 1.0, %v1921
    %v1923 = vtanh.pop %v1909
    %v1924 = vxor.u32 %v1910, 2147483648
    %v1925 = vmul.f32 %v1924, 1.442695
    %v1926 = vpow.pop %v1925
    %v1927 = vadd.f32 %v1926, 1.0
    %v1928 = vrcp.pop %v1927
    %v1929 = vmul.f32 1.0, %v1928
    %v1930 = vmul.f32 %v1922, %v1591
    %v1931 = vmul.f32 %v1916, %v1923
    %v1932 = vadd.f32 %v1930, %v1931
    %v1933 = vtanh.pop %v1932
    %v1934 = vmul.f32 %v1929, %v1933
    %v1935 = vadd.f32 %v1934, %v1760
    %1936 = vmatprep.subr.mxu0 %v509
    %1937 = vmatpush1.msra.mxu0 %v508
    %1938 = vmatprep.subr.mxu0 %v513
    %1939 = vmatpush1.msra.mxu0 %v512
    %1940 = vmatprep.subr.mxu0 %v517
    %1941 = vmatpush1.msra.mxu0 %v516
    %1942 = vmatprep.subr.mxu0 %v521
    %1943 = vmatpush1.msra.mxu0 %v520
    %1944 = vmatprep.subr.mxu0 %v525
    %1945 = vmatpush1.msra.mxu0 %v524
    %1946 = vmatprep.subr.mxu0 %v529
    %1947 = vmatpush1.msra.mxu0 %v528
    %1948 = vmatprep.subr.mxu0 %v533
    %1949 = vmatpush1.msra.mxu0 %v532
    %1950 = vmatprep.subr.mxu0 %v537
    %1951 = vmatpush1.msra.mxu0 %v536
    %1952 = vmatprep.subr.mxu0 %v541
    %1953 = vmatpush1.msra.mxu0 %v540
    %1954 = vmatprep.subr.mxu0 %v545
    %1955 = vmatpush1.msra.mxu0 %v544
    %1956 = vmatprep.subr.mxu0 %v549
    %1957 = vmatpush1.msra.mxu0 %v548
    %1958 = vmatprep.subr.mxu0 %v553
    %1959 = vmatpush1.msra.mxu0 %v552
    %1960 = vmatprep.subr.mxu0 %v557
    %1961 = vmatpush1.msra.mxu0 %v556
    %1962 = vmatprep.subr.mxu0 %v561
    %1963 = vmatpush1.msra.mxu0 %v560
    %1964 = vmatprep.subr.mxu0 %v565
    %1965 = vmatpush1.msra.mxu0 %v564
    %1966 = vmatprep.subr.mxu0 %v569
    %1967 = vmatpush1.msra.mxu0 %v568
    %1968 = vmatprep.subr.mxu0 0.0
    %1969 = vmatpush1.msra.mxu0 0.0
    %1970 = vmatprep.subr.mxu0 0.0
    %1971 = vmatpush1.msra.mxu0 0.0
    %1972 = vmatprep.subr.mxu0 0.0
    %1973 = vmatpush1.msra.mxu0 0.0
    %1974 = vmatprep.subr.mxu0 0.0
    %1975 = vmatpush1.msra.mxu0 0.0
    %1976 = vmatprep.subr.mxu0 0.0
    %1977 = vmatpush1.msra.mxu0 0.0
    %1978 = vmatprep.subr.mxu0 0.0
    %1979 = vmatpush1.msra.mxu0 0.0
    %1980 = vmatprep.subr.mxu0 0.0
    %1981 = vmatpush1.msra.mxu0 0.0
    %1982 = vmatprep.subr.mxu0 0.0
    %1983 = vmatpush1.msra.mxu0 0.0
    %1984 = vmatprep.subr.mxu0 0.0
    %1985 = vmatpush1.msra.mxu0 0.0
    %1986 = vmatprep.subr.mxu0 0.0
    %1987 = vmatpush1.msra.mxu0 0.0
    %1988 = vmatprep.subr.mxu0 0.0
    %1989 = vmatpush1.msra.mxu0 0.0
    %1990 = vmatprep.subr.mxu0 0.0
    %1991 = vmatpush1.msra.mxu0 0.0
    %1992 = vmatprep.subr.mxu0 0.0
    %1993 = vmatpush1.msra.mxu0 0.0
    %1994 = vmatprep.subr.mxu0 0.0
    %1995 = vmatpush1.msra.mxu0 0.0
    %1996 = vmatprep.subr.mxu0 0.0
    %1997 = vmatpush1.msra.mxu0 0.0
    %1998 = vmatprep.subr.mxu0 0.0
    %1999 = vmatpush1.msra.mxu0 0.0
    %2000 = vmatprep.mubr.f32.mxu0 0.0
    %2001 = vmatmul.mubr.f32.gmra.mrb[0].mxu0 %v1935
    %v2002 = vpop.f32.mrb[0].mxu0
    %v2003 = vadd.f32 %v252, %v2002
    %v2004 = vpop.f32.mrb[0].mxu0
    %v2005 = vadd.f32 %v256, %v2004
    %2006 = vdwg.mxu0
    %2007 = vmatprep.subr.mxu0 %v511
    %2008 = vmatpush1.msra.mxu0 %v510
    %2009 = vmatprep.subr.mxu0 %v515
    %2010 = vmatpush1.msra.mxu0 %v514
    %2011 = vmatprep.subr.mxu0 %v519
    %2012 = vmatpush1.msra.mxu0 %v518
    %2013 = vmatprep.subr.mxu0 %v523
    %2014 = vmatpush1.msra.mxu0 %v522
    %2015 = vmatprep.subr.mxu0 %v527
    %2016 = vmatpush1.msra.mxu0 %v526
    %2017 = vmatprep.subr.mxu0 %v531
    %2018 = vmatpush1.msra.mxu0 %v530
    %2019 = vmatprep.subr.mxu0 %v535
    %2020 = vmatpush1.msra.mxu0 %v534
    %2021 = vmatprep.subr.mxu0 %v539
    %2022 = vmatpush1.msra.mxu0 %v538
    %2023 = vmatprep.subr.mxu0 %v543
    %2024 = vmatpush1.msra.mxu0 %v542
    %2025 = vmatprep.subr.mxu0 %v547
    %2026 = vmatpush1.msra.mxu0 %v546
    %2027 = vmatprep.subr.mxu0 %v551
    %2028 = vmatpush1.msra.mxu0 %v550
    %2029 = vmatprep.subr.mxu0 %v555
    %2030 = vmatpush1.msra.mxu0 %v554
    %2031 = vmatprep.subr.mxu0 %v559
    %2032 = vmatpush1.msra.mxu0 %v558
    %2033 = vmatprep.subr.mxu0 %v563
    %2034 = vmatpush1.msra.mxu0 %v562
    %2035 = vmatprep.subr.mxu0 %v567
    %2036 = vmatpush1.msra.mxu0 %v566
    %2037 = vmatprep.subr.mxu0 %v571
    %2038 = vmatpush1.msra.mxu0 %v570
    %2039 = vmatprep.subr.mxu0 0.0
    %2040 = vmatpush1.msra.mxu0 0.0
    %2041 = vmatprep.subr.mxu0 0.0
    %2042 = vmatpush1.msra.mxu0 0.0
    %2043 = vmatprep.subr.mxu0 0.0
    %2044 = vmatpush1.msra.mxu0 0.0
    %2045 = vmatprep.subr.mxu0 0.0
    %2046 = vmatpush1.msra.mxu0 0.0
    %2047 = vmatprep.subr.mxu0 0.0
    %2048 = vmatpush1.msra.mxu0 0.0
    %2049 = vmatprep.subr.mxu0 0.0
    %2050 = vmatpush1.msra.mxu0 0.0
    %2051 = vmatprep.subr.mxu0 0.0
    %2052 = vmatpush1.msra.mxu0 0.0
    %2053 = vmatprep.subr.mxu0 0.0
    %2054 = vmatpush1.msra.mxu0 0.0
    %2055 = vmatprep.subr.mxu0 0.0
    %2056 = vmatpush1.msra.mxu0 0.0
    %2057 = vmatprep.subr.mxu0 0.0
    %2058 = vmatpush1.msra.mxu0 0.0
    %2059 = vmatprep.subr.mxu0 0.0
    %2060 = vmatpush1.msra.mxu0 0.0
    %2061 = vmatprep.subr.mxu0 0.0
    %2062 = vmatpush1.msra.mxu0 0.0
    %2063 = vmatprep.subr.mxu0 0.0
    %2064 = vmatpush1.msra.mxu0 0.0
    %2065 = vmatprep.subr.mxu0 0.0
    %2066 = vmatpush1.msra.mxu0 0.0
    %2067 = vmatprep.subr.mxu0 0.0
    %2068 = vmatpush1.msra.mxu0 0.0
    %2069 = vmatprep.subr.mxu0 0.0
    %2070 = vmatpush1.msra.mxu0 0.0
    %2071 = vmatprep.mubr.f32.mxu0 0.0
    %2072 = vmatmul.mubr.f32.gmra.mrb[0].mxu0 %v1935
    %v2073 = vpop.f32.mrb[0].mxu0
    %v2074 = vadd.f32 %v260, %v2073
    %v2075 = vpop.f32.mrb[0].mxu0
    %v2076 = vadd.f32 %v264, %v2075
    %2077 = vdwg.mxu0
    %v2078 = vxor.u32 %v2003, 2147483648
    %v2079 = vmul.f32 %v2078, 1.442695
    %v2080 = vpow.pop %v2079
    %v2081 = vadd.f32 %v2080, 1.0
    %v2082 = vrcp.pop %v2081
    %v2083 = vmul.f32 1.0, %v2082
    %v2084 = vxor.u32 %v2005, 2147483648
    %v2085 = vmul.f32 %v2084, 1.442695
    %v2086 = vpow.pop %v2085
    %v2087 = vadd.f32 %v2086, 1.0
    %v2088 = vrcp.pop %v2087
    %v2089 = vmul.f32 1.0, %v2088
    %v2090 = vtanh.pop %v2074
    %v2091 = vxor.u32 %v2076, 2147483648
    %v2092 = vmul.f32 %v2091, 1.442695
    %v2093 = vpow.pop %v2092
    %v2094 = vadd.f32 %v2093, 1.0
    %v2095 = vrcp.pop %v2094
    %v2096 = vmul.f32 1.0, %v2095
    %v2097 = vmul.f32 %v2089, %v1758
    %v2098 = vmul.f32 %v2083, %v2090
    %v2099 = vadd.f32 %v2097, %v2098
    %v2100 = vtanh.pop %v2099
    %v2101 = vmul.f32 %v2096, %v2100
    %v2102 = vld [vmem:[#allocation2 + $0xa0] sm:$0xff]
    %v2103 = vld [vmem:[#allocation2 + $0xa8] sm:$0xff]
    %v2104 = vld [vmem:[#allocation2 + $0xb0] sm:$0xff]
    %v2105 = vld [vmem:[#allocation2 + $0xb8] sm:$0xff]
    %2106 = vmatprep.subr.mxu0 %v274
    %2107 = vmatpush1.msra.mxu0 %v273
    %2108 = vmatprep.subr.mxu0 %v278
    %2109 = vmatpush1.msra.mxu0 %v277
    %2110 = vmatprep.subr.mxu0 %v282
    %2111 = vmatpush1.msra.mxu0 %v281
    %2112 = vmatprep.subr.mxu0 %v286
    %2113 = vmatpush1.msra.mxu0 %v285
    %2114 = vmatprep.subr.mxu0 %v290
    %2115 = vmatpush1.msra.mxu0 %v289
    %2116 = vmatprep.subr.mxu0 %v294
    %2117 = vmatpush1.msra.mxu0 %v293
    %2118 = vmatprep.subr.mxu0 %v298
    %2119 = vmatpush1.msra.mxu0 %v297
    %2120 = vmatprep.subr.mxu0 %v302
    %2121 = vmatpush1.msra.mxu0 %v301
    %2122 = vmatprep.subr.mxu0 %v306
    %2123 = vmatpush1.msra.mxu0 %v305
    %2124 = vmatprep.subr.mxu0 %v310
    %2125 = vmatpush1.msra.mxu0 %v309
    %2126 = vmatprep.subr.mxu0 %v314
    %2127 = vmatpush1.msra.mxu0 %v313
    %2128 = vmatprep.subr.mxu0 %v318
    %2129 = vmatpush1.msra.mxu0 %v317
    %2130 = vmatprep.subr.mxu0 %v322
    %2131 = vmatpush1.msra.mxu0 %v321
    %2132 = vmatprep.subr.mxu0 %v326
    %2133 = vmatpush1.msra.mxu0 %v325
    %2134 = vmatprep.subr.mxu0 %v330
    %2135 = vmatpush1.msra.mxu0 %v329
    %2136 = vmatprep.subr.mxu0 %v334
    %2137 = vmatpush1.msra.mxu0 %v333
    %2138 = vmatprep.subr.mxu0 0.0
    %2139 = vmatpush1.msra.mxu0 0.0
    %2140 = vmatprep.subr.mxu0 0.0
    %2141 = vmatpush1.msra.mxu0 0.0
    %2142 = vmatprep.subr.mxu0 0.0
    %2143 = vmatpush1.msra.mxu0 0.0
    %2144 = vmatprep.subr.mxu0 0.0
    %2145 = vmatpush1.msra.mxu0 0.0
    %2146 = vmatprep.subr.mxu0 0.0
    %2147 = vmatpush1.msra.mxu0 0.0
    %2148 = vmatprep.subr.mxu0 0.0
    %2149 = vmatpush1.msra.mxu0 0.0
    %2150 = vmatprep.subr.mxu0 0.0
    %2151 = vmatpush1.msra.mxu0 0.0
    %2152 = vmatprep.subr.mxu0 0.0
    %2153 = vmatpush1.msra.mxu0 0.0
    %2154 = vmatprep.subr.mxu0 0.0
    %2155 = vmatpush1.msra.mxu0 0.0
    %2156 = vmatprep.subr.mxu0 0.0
    %2157 = vmatpush1.msra.mxu0 0.0
    %2158 = vmatprep.subr.mxu0 0.0
    %2159 = vmatpush1.msra.mxu0 0.0
    %2160 = vmatprep.subr.mxu0 0.0
    %2161 = vmatpush1.msra.mxu0 0.0
    %2162 = vmatprep.subr.mxu0 0.0
    %2163 = vmatpush1.msra.mxu0 0.0
    %2164 = vmatprep.subr.mxu0 0.0
    %2165 = vmatpush1.msra.mxu0 0.0
    %2166 = vmatprep.subr.mxu0 0.0
    %2167 = vmatpush1.msra.mxu0 0.0
    %2168 = vmatprep.subr.mxu0 0.0
    %2169 = vmatpush1.msra.mxu0 0.0
    %2170 = vmatprep.mubr.f32.mxu0 0.0
    %2171 = vmatmul.mubr.f32.gmra.mrb[0].mxu0 %v1934
    %v2172 = vpop.f32.mrb[0].mxu0
    %v2173 = vadd.f32 0.0, %v2172
    %v2174 = vpop.f32.mrb[0].mxu0
    %v2175 = vadd.f32 0.0, %v2174
    %2176 = vdwg.mxu0
    %2177 = vmatprep.subr.mxu0 %v276
    %2178 = vmatpush1.msra.mxu0 %v275
    %2179 = vmatprep.subr.mxu0 %v280
    %2180 = vmatpush1.msra.mxu0 %v279
    %2181 = vmatprep.subr.mxu0 %v284
    %2182 = vmatpush1.msra.mxu0 %v283
    %2183 = vmatprep.subr.mxu0 %v288
    %2184 = vmatpush1.msra.mxu0 %v287
    %2185 = vmatprep.subr.mxu0 %v292
    %2186 = vmatpush1.msra.mxu0 %v291
    %2187 = vmatprep.subr.mxu0 %v296
    %2188 = vmatpush1.msra.mxu0 %v295
    %2189 = vmatprep.subr.mxu0 %v300
    %2190 = vmatpush1.msra.mxu0 %v299
    %2191 = vmatprep.subr.mxu0 %v304
    %2192 = vmatpush1.msra.mxu0 %v303
    %2193 = vmatprep.subr.mxu0 %v308
    %2194 = vmatpush1.msra.mxu0 %v307
    %2195 = vmatprep.subr.mxu0 %v312
    %2196 = vmatpush1.msra.mxu0 %v311
    %2197 = vmatprep.subr.mxu0 %v316
    %2198 = vmatpush1.msra.mxu0 %v315
    %2199 = vmatprep.subr.mxu0 %v320
    %2200 = vmatpush1.msra.mxu0 %v319
    %2201 = vmatprep.subr.mxu0 %v324
    %2202 = vmatpush1.msra.mxu0 %v323
    %2203 = vmatprep.subr.mxu0 %v328
    %2204 = vmatpush1.msra.mxu0 %v327
    %2205 = vmatprep.subr.mxu0 %v332
    %2206 = vmatpush1.msra.mxu0 %v331
    %2207 = vmatprep.subr.mxu0 %v336
    %2208 = vmatpush1.msra.mxu0 %v335
    %2209 = vmatprep.subr.mxu0 0.0
    %2210 = vmatpush1.msra.mxu0 0.0
    %2211 = vmatprep.subr.mxu0 0.0
    %2212 = vmatpush1.msra.mxu0 0.0
    %2213 = vmatprep.subr.mxu0 0.0
    %2214 = vmatpush1.msra.mxu0 0.0
    %2215 = vmatprep.subr.mxu0 0.0
    %2216 = vmatpush1.msra.mxu0 0.0
    %2217 = vmatprep.subr.mxu0 0.0
    %2218 = vmatpush1.msra.mxu0 0.0
    %2219 = vmatprep.subr.mxu0 0.0
    %2220 = vmatpush1.msra.mxu0 0.0
    %2221 = vmatprep.subr.mxu0 0.0
    %2222 = vmatpush1.msra.mxu0 0.0
    %2223 = vmatprep.subr.mxu0 0.0
    %2224 = vmatpush1.msra.mxu0 0.0
    %2225 = vmatprep.subr.mxu0 0.0
    %2226 = vmatpush1.msra.mxu0 0.0
    %2227 = vmatprep.subr.mxu0 0.0
    %2228 = vmatpush1.msra.mxu0 0.0
    %2229 = vmatprep.subr.mxu0 0.0
    %2230 = vmatpush1.msra.mxu0 0.0
    %2231 = vmatprep.subr.mxu0 0.0
    %2232 = vmatpush1.msra.mxu0 0.0
    %2233 = vmatprep.subr.mxu0 0.0
    %2234 = vmatpush1.msra.mxu0 0.0
    %2235 = vmatprep.subr.mxu0 0.0
    %2236 = vmatpush1.msra.mxu0 0.0
    %2237 = vmatprep.subr.mxu0 0.0
    %2238 = vmatpush1.msra.mxu0 0.0
    %2239 = vmatprep.subr.mxu0 0.0
    %2240 = vmatpush1.msra.mxu0 0.0
    %2241 = vmatprep.mubr.f32.mxu0 0.0
    %2242 = vmatmul.mubr.f32.gmra.mrb[0].mxu0 %v1934
    %v2243 = vpop.f32.mrb[0].mxu0
    %v2244 = vadd.f32 0.0, %v2243
    %v2245 = vpop.f32.mrb[0].mxu0
    %v2246 = vadd.f32 0.0, %v2245
    %2247 = vdwg.mxu0
    %v2248 = vadd.f32 %v2102, %v2173
    %v2249 = vadd.f32 %v2103, %v2175
    %v2250 = vadd.f32 %v2104, %v2244
    %v2251 = vadd.f32 %v2105, %v2246
    %v2252 = vxor.u32 %v2248, 2147483648
    %v2253 = vmul.f32 %v2252, 1.442695
    %v2254 = vpow.pop %v2253
    %v2255 = vadd.f32 %v2254, 1.0
    %v2256 = vrcp.pop %v2255
    %v2257 = vmul.f32 1.0, %v2256
    %v2258 = vxor.u32 %v2249, 2147483648
    %v2259 = vmul.f32 %v2258, 1.442695
    %v2260 = vpow.pop %v2259
    %v2261 = vadd.f32 %v2260, 1.0
    %v2262 = vrcp.pop %v2261
    %v2263 = vmul.f32 1.0, %v2262
    %v2264 = vtanh.pop %v2250
    %v2265 = vxor.u32 %v2251, 2147483648
    %v2266 = vmul.f32 %v2265, 1.442695
    %v2267 = vpow.pop %v2266
    %v2268 = vadd.f32 %v2267, 1.0
    %v2269 = vrcp.pop %v2268
    %v2270 = vmul.f32 1.0, %v2269
    %v2271 = vmul.f32 %v2263, %v1932
    %v2272 = vmul.f32 %v2257, %v2264
    %v2273 = vadd.f32 %v2271, %v2272
    %v2274 = vtanh.pop %v2273
    %v2275 = vmul.f32 %v2270, %v2274
    %v2276 = vadd.f32 %v2275, %v2101
    %2277 = vmatprep.subr.mxu0 %v509
    %2278 = vmatpush1.msra.mxu0 %v508
    %2279 = vmatprep.subr.mxu0 %v513
    %2280 = vmatpush1.msra.mxu0 %v512
    %2281 = vmatprep.subr.mxu0 %v517
    %2282 = vmatpush1.msra.mxu0 %v516
    %2283 = vmatprep.subr.mxu0 %v521
    %2284 = vmatpush1.msra.mxu0 %v520
    %2285 = vmatprep.subr.mxu0 %v525
    %2286 = vmatpush1.msra.mxu0 %v524
    %2287 = vmatprep.subr.mxu0 %v529
    %2288 = vmatpush1.msra.mxu0 %v528
    %2289 = vmatprep.subr.mxu0 %v533
    %2290 = vmatpush1.msra.mxu0 %v532
    %2291 = vmatprep.subr.mxu0 %v537
    %2292 = vmatpush1.msra.mxu0 %v536
    %2293 = vmatprep.subr.mxu0 %v541
    %2294 = vmatpush1.msra.mxu0 %v540
    %2295 = vmatprep.subr.mxu0 %v545
    %2296 = vmatpush1.msra.mxu0 %v544
    %2297 = vmatprep.subr.mxu0 %v549
    %2298 = vmatpush1.msra.mxu0 %v548
    %2299 = vmatprep.subr.mxu0 %v553
    %2300 = vmatpush1.msra.mxu0 %v552
    %2301 = vmatprep.subr.mxu0 %v557
    %2302 = vmatpush1.msra.mxu0 %v556
    %2303 = vmatprep.subr.mxu0 %v561
    %2304 = vmatpush1.msra.mxu0 %v560
    %2305 = vmatprep.subr.mxu0 %v565
    %2306 = vmatpush1.msra.mxu0 %v564
    %2307 = vmatprep.subr.mxu0 %v569
    %2308 = vmatpush1.msra.mxu0 %v568
    %2309 = vmatprep.subr.mxu0 0.0
    %2310 = vmatpush1.msra.mxu0 0.0
    %2311 = vmatprep.subr.mxu0 0.0
    %2312 = vmatpush1.msra.mxu0 0.0
    %2313 = vmatprep.subr.mxu0 0.0
    %2314 = vmatpush1.msra.mxu0 0.0
    %2315 = vmatprep.subr.mxu0 0.0
    %2316 = vmatpush1.msra.mxu0 0.0
    %2317 = vmatprep.subr.mxu0 0.0
    %2318 = vmatpush1.msra.mxu0 0.0
    %2319 = vmatprep.subr.mxu0 0.0
    %2320 = vmatpush1.msra.mxu0 0.0
    %2321 = vmatprep.subr.mxu0 0.0
    %2322 = vmatpush1.msra.mxu0 0.0
    %2323 = vmatprep.subr.mxu0 0.0
    %2324 = vmatpush1.msra.mxu0 0.0
    %2325 = vmatprep.subr.mxu0 0.0
    %2326 = vmatpush1.msra.mxu0 0.0
    %2327 = vmatprep.subr.mxu0 0.0
    %2328 = vmatpush1.msra.mxu0 0.0
    %2329 = vmatprep.subr.mxu0 0.0
    %2330 = vmatpush1.msra.mxu0 0.0
    %2331 = vmatprep.subr.mxu0 0.0
    %2332 = vmatpush1.msra.mxu0 0.0
    %2333 = vmatprep.subr.mxu0 0.0
    %2334 = vmatpush1.msra.mxu0 0.0
    %2335 = vmatprep.subr.mxu0 0.0
    %2336 = vmatpush1.msra.mxu0 0.0
    %2337 = vmatprep.subr.mxu0 0.0
    %2338 = vmatpush1.msra.mxu0 0.0
    %2339 = vmatprep.subr.mxu0 0.0
    %2340 = vmatpush1.msra.mxu0 0.0
    %2341 = vmatprep.mubr.f32.mxu0 0.0
    %2342 = vmatmul.mubr.f32.gmra.mrb[0].mxu0 %v2276
    %v2343 = vpop.f32.mrb[0].mxu0
    %v2344 = vadd.f32 %v252, %v2343
    %v2345 = vpop.f32.mrb[0].mxu0
    %v2346 = vadd.f32 %v256, %v2345
    %2347 = vdwg.mxu0
    %2348 = vmatprep.subr.mxu0 %v511
    %2349 = vmatpush1.msra.mxu0 %v510
    %2350 = vmatprep.subr.mxu0 %v515
    %2351 = vmatpush1.msra.mxu0 %v514
    %2352 = vmatprep.subr.mxu0 %v519
    %2353 = vmatpush1.msra.mxu0 %v518
    %2354 = vmatprep.subr.mxu0 %v523
    %2355 = vmatpush1.msra.mxu0 %v522
    %2356 = vmatprep.subr.mxu0 %v527
    %2357 = vmatpush1.msra.mxu0 %v526
    %2358 = vmatprep.subr.mxu0 %v531
    %2359 = vmatpush1.msra.mxu0 %v530
    %2360 = vmatprep.subr.mxu0 %v535
    %2361 = vmatpush1.msra.mxu0 %v534
    %2362 = vmatprep.subr.mxu0 %v539
    %2363 = vmatpush1.msra.mxu0 %v538
    %2364 = vmatprep.subr.mxu0 %v543
    %2365 = vmatpush1.msra.mxu0 %v542
    %2366 = vmatprep.subr.mxu0 %v547
    %2367 = vmatpush1.msra.mxu0 %v546
    %2368 = vmatprep.subr.mxu0 %v551
    %2369 = vmatpush1.msra.mxu0 %v550
    %2370 = vmatprep.subr.mxu0 %v555
    %2371 = vmatpush1.msra.mxu0 %v554
    %2372 = vmatprep.subr.mxu0 %v559
    %2373 = vmatpush1.msra.mxu0 %v558
    %2374 = vmatprep.subr.mxu0 %v563
    %2375 = vmatpush1.msra.mxu0 %v562
    %2376 = vmatprep.subr.mxu0 %v567
    %2377 = vmatpush1.msra.mxu0 %v566
    %2378 = vmatprep.subr.mxu0 %v571
    %2379 = vmatpush1.msra.mxu0 %v570
    %2380 = vmatprep.subr.mxu0 0.0
    %2381 = vmatpush1.msra.mxu0 0.0
    %2382 = vmatprep.subr.mxu0 0.0
    %2383 = vmatpush1.msra.mxu0 0.0
    %2384 = vmatprep.subr.mxu0 0.0
    %2385 = vmatpush1.msra.mxu0 0.0
    %2386 = vmatprep.subr.mxu0 0.0
    %2387 = vmatpush1.msra.mxu0 0.0
    %2388 = vmatprep.subr.mxu0 0.0
    %2389 = vmatpush1.msra.mxu0 0.0
    %2390 = vmatprep.subr.mxu0 0.0
    %2391 = vmatpush1.msra.mxu0 0.0
    %2392 = vmatprep.subr.mxu0 0.0
    %2393 = vmatpush1.msra.mxu0 0.0
    %2394 = vmatprep.subr.mxu0 0.0
    %2395 = vmatpush1.msra.mxu0 0.0
    %2396 = vmatprep.subr.mxu0 0.0
    %2397 = vmatpush1.msra.mxu0 0.0
    %2398 = vmatprep.subr.mxu0 0.0
    %2399 = vmatpush1.msra.mxu0 0.0
    %2400 = vmatprep.subr.mxu0 0.0
    %2401 = vmatpush1.msra.mxu0 0.0
    %2402 = vmatprep.subr.mxu0 0.0
    %2403 = vmatpush1.msra.mxu0 0.0
    %2404 = vmatprep.subr.mxu0 0.0
    %2405 = vmatpush1.msra.mxu0 0.0
    %2406 = vmatprep.subr.mxu0 0.0
    %2407 = vmatpush1.msra.mxu0 0.0
    %2408 = vmatprep.subr.mxu0 0.0
    %2409 = vmatpush1.msra.mxu0 0.0
    %2410 = vmatprep.subr.mxu0 0.0
    %2411 = vmatpush1.msra.mxu0 0.0
    %2412 = vmatprep.mubr.f32.mxu0 0.0
    %2413 = vmatmul.mubr.f32.gmra.mrb[0].mxu0 %v2276
    %v2414 = vpop.f32.mrb[0].mxu0
    %v2415 = vadd.f32 %v260, %v2414
    %v2416 = vpop.f32.mrb[0].mxu0
    %v2417 = vadd.f32 %v264, %v2416
    %2418 = vdwg.mxu0
    %v2419 = vxor.u32 %v2344, 2147483648
    %v2420 = vmul.f32 %v2419, 1.442695
    %v2421 = vpow.pop %v2420
    %v2422 = vadd.f32 %v2421, 1.0
    %v2423 = vrcp.pop %v2422
    %v2424 = vmul.f32 1.0, %v2423
    %v2425 = vxor.u32 %v2346, 2147483648
    %v2426 = vmul.f32 %v2425, 1.442695
    %v2427 = vpow.pop %v2426
    %v2428 = vadd.f32 %v2427, 1.0
    %v2429 = vrcp.pop %v2428
    %v2430 = vmul.f32 1.0, %v2429
    %v2431 = vtanh.pop %v2415
    %v2432 = vxor.u32 %v2417, 2147483648
    %v2433 = vmul.f32 %v2432, 1.442695
    %v2434 = vpow.pop %v2433
    %v2435 = vadd.f32 %v2434, 1.0
    %v2436 = vrcp.pop %v2435
    %v2437 = vmul.f32 1.0, %v2436
    %v2438 = vmul.f32 %v2430, %v2099
    %v2439 = vmul.f32 %v2424, %v2431
    %v2440 = vadd.f32 %v2438, %v2439
    %v2441 = vtanh.pop %v2440
    %v2442 = vmul.f32 %v2437, %v2441
    %v2443 = vld [vmem:[#allocation2 + $0xc0] sm:$0xff]
    %v2444 = vld [vmem:[#allocation2 + $0xc8] sm:$0xff]
    %v2445 = vld [vmem:[#allocation2 + $0xd0] sm:$0xff]
    %v2446 = vld [vmem:[#allocation2 + $0xd8] sm:$0xff]
    %2447 = vmatprep.subr.mxu0 %v274
    %2448 = vmatpush1.msra.mxu0 %v273
    %2449 = vmatprep.subr.mxu0 %v278
    %2450 = vmatpush1.msra.mxu0 %v277
    %2451 = vmatprep.subr.mxu0 %v282
    %2452 = vmatpush1.msra.mxu0 %v281
    %2453 = vmatprep.subr.mxu0 %v286
    %2454 = vmatpush1.msra.mxu0 %v285
    %2455 = vmatprep.subr.mxu0 %v290
    %2456 = vmatpush1.msra.mxu0 %v289
    %2457 = vmatprep.subr.mxu0 %v294
    %2458 = vmatpush1.msra.mxu0 %v293
    %2459 = vmatprep.subr.mxu0 %v298
    %2460 = vmatpush1.msra.mxu0 %v297
    %2461 = vmatprep.subr.mxu0 %v302
    %2462 = vmatpush1.msra.mxu0 %v301
    %2463 = vmatprep.subr.mxu0 %v306
    %2464 = vmatpush1.msra.mxu0 %v305
    %2465 = vmatprep.subr.mxu0 %v310
    %2466 = vmatpush1.msra.mxu0 %v309
    %2467 = vmatprep.subr.mxu0 %v314
    %2468 = vmatpush1.msra.mxu0 %v313
    %2469 = vmatprep.subr.mxu0 %v318
    %2470 = vmatpush1.msra.mxu0 %v317
    %2471 = vmatprep.subr.mxu0 %v322
    %2472 = vmatpush1.msra.mxu0 %v321
    %2473 = vmatprep.subr.mxu0 %v326
    %2474 = vmatpush1.msra.mxu0 %v325
    %2475 = vmatprep.subr.mxu0 %v330
    %2476 = vmatpush1.msra.mxu0 %v329
    %2477 = vmatprep.subr.mxu0 %v334
    %2478 = vmatpush1.msra.mxu0 %v333
    %2479 = vmatprep.subr.mxu0 0.0
    %2480 = vmatpush1.msra.mxu0 0.0
    %2481 = vmatprep.subr.mxu0 0.0
    %2482 = vmatpush1.msra.mxu0 0.0
    %2483 = vmatprep.subr.mxu0 0.0
    %2484 = vmatpush1.msra.mxu0 0.0
    %2485 = vmatprep.subr.mxu0 0.0
    %2486 = vmatpush1.msra.mxu0 0.0
    %2487 = vmatprep.subr.mxu0 0.0
    %2488 = vmatpush1.msra.mxu0 0.0
    %2489 = vmatprep.subr.mxu0 0.0
    %2490 = vmatpush1.msra.mxu0 0.0
    %2491 = vmatprep.subr.mxu0 0.0
    %2492 = vmatpush1.msra.mxu0 0.0
    %2493 = vmatprep.subr.mxu0 0.0
    %2494 = vmatpush1.msra.mxu0 0.0
    %2495 = vmatprep.subr.mxu0 0.0
    %2496 = vmatpush1.msra.mxu0 0.0
    %2497 = vmatprep.subr.mxu0 0.0
    %2498 = vmatpush1.msra.mxu0 0.0
    %2499 = vmatprep.subr.mxu0 0.0
    %2500 = vmatpush1.msra.mxu0 0.0
    %2501 = vmatprep.subr.mxu0 0.0
    %2502 = vmatpush1.msra.mxu0 0.0
    %2503 = vmatprep.subr.mxu0 0.0
    %2504 = vmatpush1.msra.mxu0 0.0
    %2505 = vmatprep.subr.mxu0 0.0
    %2506 = vmatpush1.msra.mxu0 0.0
    %2507 = vmatprep.subr.mxu0 0.0
    %2508 = vmatpush1.msra.mxu0 0.0
    %2509 = vmatprep.subr.mxu0 0.0
    %2510 = vmatpush1.msra.mxu0 0.0
    %2511 = vmatprep.mubr.f32.mxu0 0.0
    %2512 = vmatmul.mubr.f32.gmra.mrb[0].mxu0 %v2275
    %v2513 = vpop.f32.mrb[0].mxu0
    %v2514 = vadd.f32 0.0, %v2513
    %v2515 = vpop.f32.mrb[0].mxu0
    %v2516 = vadd.f32 0.0, %v2515
    %2517 = vdwg.mxu0
    %2518 = vmatprep.subr.mxu0 %v276
    %2519 = vmatpush1.msra.mxu0 %v275
    %2520 = vmatprep.subr.mxu0 %v280
    %2521 = vmatpush1.msra.mxu0 %v279
    %2522 = vmatprep.subr.mxu0 %v284
    %2523 = vmatpush1.msra.mxu0 %v283
    %2524 = vmatprep.subr.mxu0 %v288
    %2525 = vmatpush1.msra.mxu0 %v287
    %2526 = vmatprep.subr.mxu0 %v292
    %2527 = vmatpush1.msra.mxu0 %v291
    %2528 = vmatprep.subr.mxu0 %v296
    %2529 = vmatpush1.msra.mxu0 %v295
    %2530 = vmatprep.subr.mxu0 %v300
    %2531 = vmatpush1.msra.mxu0 %v299
    %2532 = vmatprep.subr.mxu0 %v304
    %2533 = vmatpush1.msra.mxu0 %v303
    %2534 = vmatprep.subr.mxu0 %v308
    %2535 = vmatpush1.msra.mxu0 %v307
    %2536 = vmatprep.subr.mxu0 %v312
    %2537 = vmatpush1.msra.mxu0 %v311
    %2538 = vmatprep.subr.mxu0 %v316
    %2539 = vmatpush1.msra.mxu0 %v315
    %2540 = vmatprep.subr.mxu0 %v320
    %2541 = vmatpush1.msra.mxu0 %v319
    %2542 = vmatprep.subr.mxu0 %v324
    %2543 = vmatpush1.msra.mxu0 %v323
    %2544 = vmatprep.subr.mxu0 %v328
    %2545 = vmatpush1.msra.mxu0 %v327
    %2546 = vmatprep.subr.mxu0 %v332
    %2547 = vmatpush1.msra.mxu0 %v331
    %2548 = vmatprep.subr.mxu0 %v336
    %2549 = vmatpush1.msra.mxu0 %v335
    %2550 = vmatprep.subr.mxu0 0.0
    %2551 = vmatpush1.msra.mxu0 0.0
    %2552 = vmatprep.subr.mxu0 0.0
    %2553 = vmatpush1.msra.mxu0 0.0
    %2554 = vmatprep.subr.mxu0 0.0
    %2555 = vmatpush1.msra.mxu0 0.0
    %2556 = vmatprep.subr.mxu0 0.0
    %2557 = vmatpush1.msra.mxu0 0.0
    %2558 = vmatprep.subr.mxu0 0.0
    %2559 = vmatpush1.msra.mxu0 0.0
    %2560 = vmatprep.subr.mxu0 0.0
    %2561 = vmatpush1.msra.mxu0 0.0
    %2562 = vmatprep.subr.mxu0 0.0
    %2563 = vmatpush1.msra.mxu0 0.0
    %2564 = vmatprep.subr.mxu0 0.0
    %2565 = vmatpush1.msra.mxu0 0.0
    %2566 = vmatprep.subr.mxu0 0.0
    %2567 = vmatpush1.msra.mxu0 0.0
    %2568 = vmatprep.subr.mxu0 0.0
    %2569 = vmatpush1.msra.mxu0 0.0
    %2570 = vmatprep.subr.mxu0 0.0
    %2571 = vmatpush1.msra.mxu0 0.0
    %2572 = vmatprep.subr.mxu0 0.0
    %2573 = vmatpush1.msra.mxu0 0.0
    %2574 = vmatprep.subr.mxu0 0.0
    %2575 = vmatpush1.msra.mxu0 0.0
    %2576 = vmatprep.subr.mxu0 0.0
    %2577 = vmatpush1.msra.mxu0 0.0
    %2578 = vmatprep.subr.mxu0 0.0
    %2579 = vmatpush1.msra.mxu0 0.0
    %2580 = vmatprep.subr.mxu0 0.0
    %2581 = vmatpush1.msra.mxu0 0.0
    %2582 = vmatprep.mubr.f32.mxu0 0.0
    %2583 = vmatmul.mubr.f32.gmra.mrb[0].mxu0 %v2275
    %v2584 = vpop.f32.mrb[0].mxu0
    %v2585 = vadd.f32 0.0, %v2584
    %v2586 = vpop.f32.mrb[0].mxu0
    %v2587 = vadd.f32 0.0, %v2586
    %2588 = vdwg.mxu0
    %v2589 = vadd.f32 %v2443, %v2514
    %v2590 = vadd.f32 %v2444, %v2516
    %v2591 = vadd.f32 %v2445, %v2585
    %v2592 = vadd.f32 %v2446, %v2587
    %v2593 = vxor.u32 %v2589, 2147483648
    %v2594 = vmul.f32 %v2593, 1.442695
    %v2595 = vpow.pop %v2594
    %v2596 = vadd.f32 %v2595, 1.0
    %v2597 = vrcp.pop %v2596
    %v2598 = vmul.f32 1.0, %v2597
    %v2599 = vxor.u32 %v2590, 2147483648
    %v2600 = vmul.f32 %v2599, 1.442695
    %v2601 = vpow.pop %v2600
    %v2602 = vadd.f32 %v2601, 1.0
    %v2603 = vrcp.pop %v2602
    %v2604 = vmul.f32 1.0, %v2603
    %v2605 = vtanh.pop %v2591
    %v2606 = vxor.u32 %v2592, 2147483648
    %v2607 = vmul.f32 %v2606, 1.442695
    %v2608 = vpow.pop %v2607
    %v2609 = vadd.f32 %v2608, 1.0
    %v2610 = vrcp.pop %v2609
    %v2611 = vmul.f32 1.0, %v2610
    %v2612 = vmul.f32 %v2604, %v2273
    %v2613 = vmul.f32 %v2598, %v2605
    %v2614 = vadd.f32 %v2612, %v2613
    %v2615 = vtanh.pop %v2614
    %v2616 = vmul.f32 %v2611, %v2615
    %v2617 = vadd.f32 %v2616, %v2442
    %2618 = vmatprep.subr.mxu0 %v509
    %2619 = vmatpush1.msra.mxu0 %v508
    %2620 = vmatprep.subr.mxu0 %v513
    %2621 = vmatpush1.msra.mxu0 %v512
    %2622 = vmatprep.subr.mxu0 %v517
    %2623 = vmatpush1.msra.mxu0 %v516
    %2624 = vmatprep.subr.mxu0 %v521
    %2625 = vmatpush1.msra.mxu0 %v520
    %2626 = vmatprep.subr.mxu0 %v525
    %2627 = vmatpush1.msra.mxu0 %v524
    %2628 = vmatprep.subr.mxu0 %v529
    %2629 = vmatpush1.msra.mxu0 %v528
    %2630 = vmatprep.subr.mxu0 %v533
    %2631 = vmatpush1.msra.mxu0 %v532
    %2632 = vmatprep.subr.mxu0 %v537
    %2633 = vmatpush1.msra.mxu0 %v536
    %2634 = vmatprep.subr.mxu0 %v541
    %2635 = vmatpush1.msra.mxu0 %v540
    %2636 = vmatprep.subr.mxu0 %v545
    %2637 = vmatpush1.msra.mxu0 %v544
    %2638 = vmatprep.subr.mxu0 %v549
    %2639 = vmatpush1.msra.mxu0 %v548
    %2640 = vmatprep.subr.mxu0 %v553
    %2641 = vmatpush1.msra.mxu0 %v552
    %2642 = vmatprep.subr.mxu0 %v557
    %2643 = vmatpush1.msra.mxu0 %v556
    %2644 = vmatprep.subr.mxu0 %v561
    %2645 = vmatpush1.msra.mxu0 %v560
    %2646 = vmatprep.subr.mxu0 %v565
    %2647 = vmatpush1.msra.mxu0 %v564
    %2648 = vmatprep.subr.mxu0 %v569
    %2649 = vmatpush1.msra.mxu0 %v568
    %2650 = vmatprep.subr.mxu0 0.0
    %2651 = vmatpush1.msra.mxu0 0.0
    %2652 = vmatprep.subr.mxu0 0.0
    %2653 = vmatpush1.msra.mxu0 0.0
    %2654 = vmatprep.subr.mxu0 0.0
    %2655 = vmatpush1.msra.mxu0 0.0
    %2656 = vmatprep.subr.mxu0 0.0
    %2657 = vmatpush1.msra.mxu0 0.0
    %2658 = vmatprep.subr.mxu0 0.0
    %2659 = vmatpush1.msra.mxu0 0.0
    %2660 = vmatprep.subr.mxu0 0.0
    %2661 = vmatpush1.msra.mxu0 0.0
    %2662 = vmatprep.subr.mxu0 0.0
    %2663 = vmatpush1.msra.mxu0 0.0
    %2664 = vmatprep.subr.mxu0 0.0
    %2665 = vmatpush1.msra.mxu0 0.0
    %2666 = vmatprep.subr.mxu0 0.0
    %2667 = vmatpush1.msra.mxu0 0.0
    %2668 = vmatprep.subr.mxu0 0.0
    %2669 = vmatpush1.msra.mxu0 0.0
    %2670 = vmatprep.subr.mxu0 0.0
    %2671 = vmatpush1.msra.mxu0 0.0
    %2672 = vmatprep.subr.mxu0 0.0
    %2673 = vmatpush1.msra.mxu0 0.0
    %2674 = vmatprep.subr.mxu0 0.0
    %2675 = vmatpush1.msra.mxu0 0.0
    %2676 = vmatprep.subr.mxu0 0.0
    %2677 = vmatpush1.msra.mxu0 0.0
    %2678 = vmatprep.subr.mxu0 0.0
    %2679 = vmatpush1.msra.mxu0 0.0
    %2680 = vmatprep.subr.mxu0 0.0
    %2681 = vmatpush1.msra.mxu0 0.0
    %2682 = vmatprep.mubr.f32.mxu0 0.0
    %2683 = vmatmul.mubr.f32.gmra.mrb[0].mxu0 %v2617
    %v2684 = vpop.f32.mrb[0].mxu0
    %v2685 = vadd.f32 %v252, %v2684
    %v2686 = vpop.f32.mrb[0].mxu0
    %v2687 = vadd.f32 %v256, %v2686
    %2688 = vdwg.mxu0
    %2689 = vmatprep.subr.mxu0 %v511
    %2690 = vmatpush1.msra.mxu0 %v510
    %2691 = vmatprep.subr.mxu0 %v515
    %2692 = vmatpush1.msra.mxu0 %v514
    %2693 = vmatprep.subr.mxu0 %v519
    %2694 = vmatpush1.msra.mxu0 %v518
    %2695 = vmatprep.subr.mxu0 %v523
    %2696 = vmatpush1.msra.mxu0 %v522
    %2697 = vmatprep.subr.mxu0 %v527
    %2698 = vmatpush1.msra.mxu0 %v526
    %2699 = vmatprep.subr.mxu0 %v531
    %2700 = vmatpush1.msra.mxu0 %v530
    %2701 = vmatprep.subr.mxu0 %v535
    %2702 = vmatpush1.msra.mxu0 %v534
    %2703 = vmatprep.subr.mxu0 %v539
    %2704 = vmatpush1.msra.mxu0 %v538
    %2705 = vmatprep.subr.mxu0 %v543
    %2706 = vmatpush1.msra.mxu0 %v542
    %2707 = vmatprep.subr.mxu0 %v547
    %2708 = vmatpush1.msra.mxu0 %v546
    %2709 = vmatprep.subr.mxu0 %v551
    %2710 = vmatpush1.msra.mxu0 %v550
    %2711 = vmatprep.subr.mxu0 %v555
    %2712 = vmatpush1.msra.mxu0 %v554
    %2713 = vmatprep.subr.mxu0 %v559
    %2714 = vmatpush1.msra.mxu0 %v558
    %2715 = vmatprep.subr.mxu0 %v563
    %2716 = vmatpush1.msra.mxu0 %v562
    %2717 = vmatprep.subr.mxu0 %v567
    %2718 = vmatpush1.msra.mxu0 %v566
    %2719 = vmatprep.subr.mxu0 %v571
    %2720 = vmatpush1.msra.mxu0 %v570
    %2721 = vmatprep.subr.mxu0 0.0
    %2722 = vmatpush1.msra.mxu0 0.0
    %2723 = vmatprep.subr.mxu0 0.0
    %2724 = vmatpush1.msra.mxu0 0.0
    %2725 = vmatprep.subr.mxu0 0.0
    %2726 = vmatpush1.msra.mxu0 0.0
    %2727 = vmatprep.subr.mxu0 0.0
    %2728 = vmatpush1.msra.mxu0 0.0
    %2729 = vmatprep.subr.mxu0 0.0
    %2730 = vmatpush1.msra.mxu0 0.0
    %2731 = vmatprep.subr.mxu0 0.0
    %2732 = vmatpush1.msra.mxu0 0.0
    %2733 = vmatprep.subr.mxu0 0.0
    %2734 = vmatpush1.msra.mxu0 0.0
    %2735 = vmatprep.subr.mxu0 0.0
    %2736 = vmatpush1.msra.mxu0 0.0
    %2737 = vmatprep.subr.mxu0 0.0
    %2738 = vmatpush1.msra.mxu0 0.0
    %2739 = vmatprep.subr.mxu0 0.0
    %2740 = vmatpush1.msra.mxu0 0.0
    %2741 = vmatprep.subr.mxu0 0.0
    %2742 = vmatpush1.msra.mxu0 0.0
    %2743 = vmatprep.subr.mxu0 0.0
    %2744 = vmatpush1.msra.mxu0 0.0
    %2745 = vmatprep.subr.mxu0 0.0
    %2746 = vmatpush1.msra.mxu0 0.0
    %2747 = vmatprep.subr.mxu0 0.0
    %2748 = vmatpush1.msra.mxu0 0.0
    %2749 = vmatprep.subr.mxu0 0.0
    %2750 = vmatpush1.msra.mxu0 0.0
    %2751 = vmatprep.subr.mxu0 0.0
    %2752 = vmatpush1.msra.mxu0 0.0
    %2753 = vmatprep.mubr.f32.mxu0 0.0
    %2754 = vmatmul.mubr.f32.gmra.mrb[0].mxu0 %v2617
    %v2755 = vpop.f32.mrb[0].mxu0
    %v2756 = vadd.f32 %v260, %v2755
    %v2757 = vpop.f32.mrb[0].mxu0
    %v2758 = vadd.f32 %v264, %v2757
    %2759 = vdwg.mxu0
    %v2760 = vxor.u32 %v2685, 2147483648
    %v2761 = vmul.f32 %v2760, 1.442695
    %v2762 = vpow.pop %v2761
    %v2763 = vadd.f32 %v2762, 1.0
    %v2764 = vrcp.pop %v2763
    %v2765 = vmul.f32 1.0, %v2764
    %v2766 = vxor.u32 %v2687, 2147483648
    %v2767 = vmul.f32 %v2766, 1.442695
    %v2768 = vpow.pop %v2767
    %v2769 = vadd.f32 %v2768, 1.0
    %v2770 = vrcp.pop %v2769
    %v2771 = vmul.f32 1.0, %v2770
    %v2772 = vtanh.pop %v2756
    %v2773 = vxor.u32 %v2758, 2147483648
    %v2774 = vmul.f32 %v2773, 1.442695
    %v2775 = vpow.pop %v2774
    %v2776 = vadd.f32 %v2775, 1.0
    %v2777 = vrcp.pop %v2776
    %v2778 = vmul.f32 1.0, %v2777
    %v2779 = vmul.f32 %v2771, %v2440
    %v2780 = vmul.f32 %v2765, %v2772
    %v2781 = vadd.f32 %v2779, %v2780
    %v2782 = vtanh.pop %v2781
    %v2783 = vmul.f32 %v2778, %v2782
    %v2784 = vld [vmem:[#allocation2 + $0xe0] sm:$0xff]
    %v2785 = vld [vmem:[#allocation2 + $0xe8] sm:$0xff]
    %v2786 = vld [vmem:[#allocation2 + $0xf0] sm:$0xff]
    %v2787 = vld [vmem:[#allocation2 + $0xf8] sm:$0xff]
    %2788 = vmatprep.subr.mxu0 %v274
    %2789 = vmatpush1.msra.mxu0 %v273
    %2790 = vmatprep.subr.mxu0 %v278
    %2791 = vmatpush1.msra.mxu0 %v277
    %2792 = vmatprep.subr.mxu0 %v282
    %2793 = vmatpush1.msra.mxu0 %v281
    %2794 = vmatprep.subr.mxu0 %v286
    %2795 = vmatpush1.msra.mxu0 %v285
    %2796 = vmatprep.subr.mxu0 %v290
    %2797 = vmatpush1.msra.mxu0 %v289
    %2798 = vmatprep.subr.mxu0 %v294
    %2799 = vmatpush1.msra.mxu0 %v293
    %2800 = vmatprep.subr.mxu0 %v298
    %2801 = vmatpush1.msra.mxu0 %v297
    %2802 = vmatprep.subr.mxu0 %v302
    %2803 = vmatpush1.msra.mxu0 %v301
    %2804 = vmatprep.subr.mxu0 %v306
    %2805 = vmatpush1.msra.mxu0 %v305
    %2806 = vmatprep.subr.mxu0 %v310
    %2807 = vmatpush1.msra.mxu0 %v309
    %2808 = vmatprep.subr.mxu0 %v314
    %2809 = vmatpush1.msra.mxu0 %v313
    %2810 = vmatprep.subr.mxu0 %v318
    %2811 = vmatpush1.msra.mxu0 %v317
    %2812 = vmatprep.subr.mxu0 %v322
    %2813 = vmatpush1.msra.mxu0 %v321
    %2814 = vmatprep.subr.mxu0 %v326
    %2815 = vmatpush1.msra.mxu0 %v325
    %2816 = vmatprep.subr.mxu0 %v330
    %2817 = vmatpush1.msra.mxu0 %v329
    %2818 = vmatprep.subr.mxu0 %v334
    %2819 = vmatpush1.msra.mxu0 %v333
    %2820 = vmatprep.subr.mxu0 0.0
    %2821 = vmatpush1.msra.mxu0 0.0
    %2822 = vmatprep.subr.mxu0 0.0
    %2823 = vmatpush1.msra.mxu0 0.0
    %2824 = vmatprep.subr.mxu0 0.0
    %2825 = vmatpush1.msra.mxu0 0.0
    %2826 = vmatprep.subr.mxu0 0.0
    %2827 = vmatpush1.msra.mxu0 0.0
    %2828 = vmatprep.subr.mxu0 0.0
    %2829 = vmatpush1.msra.mxu0 0.0
    %2830 = vmatprep.subr.mxu0 0.0
    %2831 = vmatpush1.msra.mxu0 0.0
    %2832 = vmatprep.subr.mxu0 0.0
    %2833 = vmatpush1.msra.mxu0 0.0
    %2834 = vmatprep.subr.mxu0 0.0
    %2835 = vmatpush1.msra.mxu0 0.0
    %2836 = vmatprep.subr.mxu0 0.0
    %2837 = vmatpush1.msra.mxu0 0.0
    %2838 = vmatprep.subr.mxu0 0.0
    %2839 = vmatpush1.msra.mxu0 0.0
    %2840 = vmatprep.subr.mxu0 0.0
    %2841 = vmatpush1.msra.mxu0 0.0
    %2842 = vmatprep.subr.mxu0 0.0
    %2843 = vmatpush1.msra.mxu0 0.0
    %2844 = vmatprep.subr.mxu0 0.0
    %2845 = vmatpush1.msra.mxu0 0.0
    %2846 = vmatprep.subr.mxu0 0.0
    %2847 = vmatpush1.msra.mxu0 0.0
    %2848 = vmatprep.subr.mxu0 0.0
    %2849 = vmatpush1.msra.mxu0 0.0
    %2850 = vmatprep.subr.mxu0 0.0
    %2851 = vmatpush1.msra.mxu0 0.0
    %2852 = vmatprep.mubr.f32.mxu0 0.0
    %2853 = vmatmul.mubr.f32.gmra.mrb[0].mxu0 %v2616
    %v2854 = vpop.f32.mrb[0].mxu0
    %v2855 = vadd.f32 0.0, %v2854
    %v2856 = vpop.f32.mrb[0].mxu0
    %v2857 = vadd.f32 0.0, %v2856
    %2858 = vdwg.mxu0
    %2859 = vmatprep.subr.mxu0 %v276
    %2860 = vmatpush1.msra.mxu0 %v275
    %2861 = vmatprep.subr.mxu0 %v280
    %2862 = vmatpush1.msra.mxu0 %v279
    %2863 = vmatprep.subr.mxu0 %v284
    %2864 = vmatpush1.msra.mxu0 %v283
    %2865 = vmatprep.subr.mxu0 %v288
    %2866 = vmatpush1.msra.mxu0 %v287
    %2867 = vmatprep.subr.mxu0 %v292
    %2868 = vmatpush1.msra.mxu0 %v291
    %2869 = vmatprep.subr.mxu0 %v296
    %2870 = vmatpush1.msra.mxu0 %v295
    %2871 = vmatprep.subr.mxu0 %v300
    %2872 = vmatpush1.msra.mxu0 %v299
    %2873 = vmatprep.subr.mxu0 %v304
    %2874 = vmatpush1.msra.mxu0 %v303
    %2875 = vmatprep.subr.mxu0 %v308
    %2876 = vmatpush1.msra.mxu0 %v307
    %2877 = vmatprep.subr.mxu0 %v312
    %2878 = vmatpush1.msra.mxu0 %v311
    %2879 = vmatprep.subr.mxu0 %v316
    %2880 = vmatpush1.msra.mxu0 %v315
    %2881 = vmatprep.subr.mxu0 %v320
    %2882 = vmatpush1.msra.mxu0 %v319
    %2883 = vmatprep.subr.mxu0 %v324
    %2884 = vmatpush1.msra.mxu0 %v323
    %2885 = vmatprep.subr.mxu0 %v328
    %2886 = vmatpush1.msra.mxu0 %v327
    %2887 = vmatprep.subr.mxu0 %v332
    %2888 = vmatpush1.msra.mxu0 %v331
    %2889 = vmatprep.subr.mxu0 %v336
    %2890 = vmatpush1.msra.mxu0 %v335
    %2891 = vmatprep.subr.mxu0 0.0
    %2892 = vmatpush1.msra.mxu0 0.0
    %2893 = vmatprep.subr.mxu0 0.0
    %2894 = vmatpush1.msra.mxu0 0.0
    %2895 = vmatprep.subr.mxu0 0.0
    %2896 = vmatpush1.msra.mxu0 0.0
    %2897 = vmatprep.subr.mxu0 0.0
    %2898 = vmatpush1.msra.mxu0 0.0
    %2899 = vmatprep.subr.mxu0 0.0
    %2900 = vmatpush1.msra.mxu0 0.0
    %2901 = vmatprep.subr.mxu0 0.0
    %2902 = vmatpush1.msra.mxu0 0.0
    %2903 = vmatprep.subr.mxu0 0.0
    %2904 = vmatpush1.msra.mxu0 0.0
    %2905 = vmatprep.subr.mxu0 0.0
    %2906 = vmatpush1.msra.mxu0 0.0
    %2907 = vmatprep.subr.mxu0 0.0
    %2908 = vmatpush1.msra.mxu0 0.0
    %2909 = vmatprep.subr.mxu0 0.0
    %2910 = vmatpush1.msra.mxu0 0.0
    %2911 = vmatprep.subr.mxu0 0.0
    %2912 = vmatpush1.msra.mxu0 0.0
    %2913 = vmatprep.subr.mxu0 0.0
    %2914 = vmatpush1.msra.mxu0 0.0
    %2915 = vmatprep.subr.mxu0 0.0
    %2916 = vmatpush1.msra.mxu0 0.0
    %2917 = vmatprep.subr.mxu0 0.0
    %2918 = vmatpush1.msra.mxu0 0.0
    %2919 = vmatprep.subr.mxu0 0.0
    %2920 = vmatpush1.msra.mxu0 0.0
    %2921 = vmatprep.subr.mxu0 0.0
    %2922 = vmatpush1.msra.mxu0 0.0
    %2923 = vmatprep.mubr.f32.mxu0 0.0
    %2924 = vmatmul.mubr.f32.gmra.mrb[0].mxu0 %v2616
    %v2925 = vpop.f32.mrb[0].mxu0
    %v2926 = vadd.f32 0.0, %v2925
    %v2927 = vpop.f32.mrb[0].mxu0
    %v2928 = vadd.f32 0.0, %v2927
    %2929 = vdwg.mxu0
    %v2930 = vadd.f32 %v2784, %v2855
    %v2931 = vadd.f32 %v2785, %v2857
    %v2932 = vadd.f32 %v2786, %v2926
    %v2933 = vadd.f32 %v2787, %v2928
    %v2934 = vxor.u32 %v2930, 2147483648
    %v2935 = vmul.f32 %v2934, 1.442695
    %v2936 = vpow.pop %v2935
    %v2937 = vadd.f32 %v2936, 1.0
    %v2938 = vrcp.pop %v2937
    %v2939 = vmul.f32 1.0, %v2938
    %v2940 = vxor.u32 %v2931, 2147483648
    %v2941 = vmul.f32 %v2940, 1.442695
    %v2942 = vpow.pop %v2941
    %v2943 = vadd.f32 %v2942, 1.0
    %v2944 = vrcp.pop %v2943
    %v2945 = vmul.f32 1.0, %v2944
    %v2946 = vtanh.pop %v2932
    %v2947 = vxor.u32 %v2933, 2147483648
    %v2948 = vmul.f32 %v2947, 1.442695
    %v2949 = vpow.pop %v2948
    %v2950 = vadd.f32 %v2949, 1.0
    %v2951 = vrcp.pop %v2950
    %v2952 = vmul.f32 1.0, %v2951
    %v2953 = vmul.f32 %v2945, %v2614
    %v2954 = vmul.f32 %v2939, %v2946
    %v2955 = vadd.f32 %v2953, %v2954
    %v2956 = vtanh.pop %v2955
    %v2957 = vmul.f32 %v2952, %v2956
    %v2958 = vadd.f32 %v2957, %v2783
    %2959 = vmatprep.subr.mxu0 %v509
    %2960 = vmatpush1.msra.mxu0 %v508
    %2961 = vmatprep.subr.mxu0 %v513
    %2962 = vmatpush1.msra.mxu0 %v512
    %2963 = vmatprep.subr.mxu0 %v517
    %2964 = vmatpush1.msra.mxu0 %v516
    %2965 = vmatprep.subr.mxu0 %v521
    %2966 = vmatpush1.msra.mxu0 %v520
    %2967 = vmatprep.subr.mxu0 %v525
    %2968 = vmatpush1.msra.mxu0 %v524
    %2969 = vmatprep.subr.mxu0 %v529
    %2970 = vmatpush1.msra.mxu0 %v528
    %2971 = vmatprep.subr.mxu0 %v533
    %2972 = vmatpush1.msra.mxu0 %v532
    %2973 = vmatprep.subr.mxu0 %v537
    %2974 = vmatpush1.msra.mxu0 %v536
    %2975 = vmatprep.subr.mxu0 %v541
    %2976 = vmatpush1.msra.mxu0 %v540
    %2977 = vmatprep.subr.mxu0 %v545
    %2978 = vmatpush1.msra.mxu0 %v544
    %2979 = vmatprep.subr.mxu0 %v549
    %2980 = vmatpush1.msra.mxu0 %v548
    %2981 = vmatprep.subr.mxu0 %v553
    %2982 = vmatpush1.msra.mxu0 %v552
    %2983 = vmatprep.subr.mxu0 %v557
    %2984 = vmatpush1.msra.mxu0 %v556
    %2985 = vmatprep.subr.mxu0 %v561
    %2986 = vmatpush1.msra.mxu0 %v560
    %2987 = vmatprep.subr.mxu0 %v565
    %2988 = vmatpush1.msra.mxu0 %v564
    %2989 = vmatprep.subr.mxu0 %v569
    %2990 = vmatpush1.msra.mxu0 %v568
    %2991 = vmatprep.subr.mxu0 0.0
    %2992 = vmatpush1.msra.mxu0 0.0
    %2993 = vmatprep.subr.mxu0 0.0
    %2994 = vmatpush1.msra.mxu0 0.0
    %2995 = vmatprep.subr.mxu0 0.0
    %2996 = vmatpush1.msra.mxu0 0.0
    %2997 = vmatprep.subr.mxu0 0.0
    %2998 = vmatpush1.msra.mxu0 0.0
    %2999 = vmatprep.subr.mxu0 0.0
    %3000 = vmatpush1.msra.mxu0 0.0
    %3001 = vmatprep.subr.mxu0 0.0
    %3002 = vmatpush1.msra.mxu0 0.0
    %3003 = vmatprep.subr.mxu0 0.0
    %3004 = vmatpush1.msra.mxu0 0.0
    %3005 = vmatprep.subr.mxu0 0.0
    %3006 = vmatpush1.msra.mxu0 0.0
    %3007 = vmatprep.subr.mxu0 0.0
    %3008 = vmatpush1.msra.mxu0 0.0
    %3009 = vmatprep.subr.mxu0 0.0
    %3010 = vmatpush1.msra.mxu0 0.0
    %3011 = vmatprep.subr.mxu0 0.0
    %3012 = vmatpush1.msra.mxu0 0.0
    %3013 = vmatprep.subr.mxu0 0.0
    %3014 = vmatpush1.msra.mxu0 0.0
    %3015 = vmatprep.subr.mxu0 0.0
    %3016 = vmatpush1.msra.mxu0 0.0
    %3017 = vmatprep.subr.mxu0 0.0
    %3018 = vmatpush1.msra.mxu0 0.0
    %3019 = vmatprep.subr.mxu0 0.0
    %3020 = vmatpush1.msra.mxu0 0.0
    %3021 = vmatprep.subr.mxu0 0.0
    %3022 = vmatpush1.msra.mxu0 0.0
    %3023 = vmatprep.mubr.f32.mxu0 0.0
    %3024 = vmatmul.mubr.f32.gmra.mrb[0].mxu0 %v2958
    %v3025 = vpop.f32.mrb[0].mxu0
    %v3026 = vadd.f32 %v252, %v3025
    %v3027 = vpop.f32.mrb[0].mxu0
    %v3028 = vadd.f32 %v256, %v3027
    %3029 = vdwg.mxu0
    %3030 = vmatprep.subr.mxu0 %v511
    %3031 = vmatpush1.msra.mxu0 %v510
    %3032 = vmatprep.subr.mxu0 %v515
    %3033 = vmatpush1.msra.mxu0 %v514
    %3034 = vmatprep.subr.mxu0 %v519
    %3035 = vmatpush1.msra.mxu0 %v518
    %3036 = vmatprep.subr.mxu0 %v523
    %3037 = vmatpush1.msra.mxu0 %v522
    %3038 = vmatprep.subr.mxu0 %v527
    %3039 = vmatpush1.msra.mxu0 %v526
    %3040 = vmatprep.subr.mxu0 %v531
    %3041 = vmatpush1.msra.mxu0 %v530
    %3042 = vmatprep.subr.mxu0 %v535
    %3043 = vmatpush1.msra.mxu0 %v534
    %3044 = vmatprep.subr.mxu0 %v539
    %3045 = vmatpush1.msra.mxu0 %v538
    %3046 = vmatprep.subr.mxu0 %v543
    %3047 = vmatpush1.msra.mxu0 %v542
    %3048 = vmatprep.subr.mxu0 %v547
    %3049 = vmatpush1.msra.mxu0 %v546
    %3050 = vmatprep.subr.mxu0 %v551
    %3051 = vmatpush1.msra.mxu0 %v550
    %3052 = vmatprep.subr.mxu0 %v555
    %3053 = vmatpush1.msra.mxu0 %v554
    %3054 = vmatprep.subr.mxu0 %v559
    %3055 = vmatpush1.msra.mxu0 %v558
    %3056 = vmatprep.subr.mxu0 %v563
    %3057 = vmatpush1.msra.mxu0 %v562
    %3058 = vmatprep.subr.mxu0 %v567
    %3059 = vmatpush1.msra.mxu0 %v566
    %3060 = vmatprep.subr.mxu0 %v571
    %3061 = vmatpush1.msra.mxu0 %v570
    %3062 = vmatprep.subr.mxu0 0.0
    %3063 = vmatpush1.msra.mxu0 0.0
    %3064 = vmatprep.subr.mxu0 0.0
    %3065 = vmatpush1.msra.mxu0 0.0
    %3066 = vmatprep.subr.mxu0 0.0
    %3067 = vmatpush1.msra.mxu0 0.0
    %3068 = vmatprep.subr.mxu0 0.0
    %3069 = vmatpush1.msra.mxu0 0.0
    %3070 = vmatprep.subr.mxu0 0.0
    %3071 = vmatpush1.msra.mxu0 0.0
    %3072 = vmatprep.subr.mxu0 0.0
    %3073 = vmatpush1.msra.mxu0 0.0
    %3074 = vmatprep.subr.mxu0 0.0
    %3075 = vmatpush1.msra.mxu0 0.0
    %3076 = vmatprep.subr.mxu0 0.0
    %3077 = vmatpush1.msra.mxu0 0.0
    %3078 = vmatprep.subr.mxu0 0.0
    %3079 = vmatpush1.msra.mxu0 0.0
    %3080 = vmatprep.subr.mxu0 0.0
    %3081 = vmatpush1.msra.mxu0 0.0
    %3082 = vmatprep.subr.mxu0 0.0
    %3083 = vmatpush1.msra.mxu0 0.0
    %3084 = vmatprep.subr.mxu0 0.0
    %3085 = vmatpush1.msra.mxu0 0.0
    %3086 = vmatprep.subr.mxu0 0.0
    %3087 = vmatpush1.msra.mxu0 0.0
    %3088 = vmatprep.subr.mxu0 0.0
    %3089 = vmatpush1.msra.mxu0 0.0
    %3090 = vmatprep.subr.mxu0 0.0
    %3091 = vmatpush1.msra.mxu0 0.0
    %3092 = vmatprep.subr.mxu0 0.0
    %3093 = vmatpush1.msra.mxu0 0.0
    %3094 = vmatprep.mubr.f32.mxu0 0.0
    %3095 = vmatmul.mubr.f32.gmra.mrb[0].mxu0 %v2958
    %v3096 = vpop.f32.mrb[0].mxu0
    %v3097 = vadd.f32 %v260, %v3096
    %v3098 = vpop.f32.mrb[0].mxu0
    %v3099 = vadd.f32 %v264, %v3098
    %3100 = vdwg.mxu0
    %v3101 = vxor.u32 %v3026, 2147483648
    %v3102 = vmul.f32 %v3101, 1.442695
    %v3103 = vpow.pop %v3102
    %v3104 = vadd.f32 %v3103, 1.0
    %v3105 = vrcp.pop %v3104
    %v3106 = vmul.f32 1.0, %v3105
    %v3107 = vxor.u32 %v3028, 2147483648
    %v3108 = vmul.f32 %v3107, 1.442695
    %v3109 = vpow.pop %v3108
    %v3110 = vadd.f32 %v3109, 1.0
    %v3111 = vrcp.pop %v3110
    %v3112 = vmul.f32 1.0, %v3111
    %v3113 = vtanh.pop %v3097
    %v3114 = vxor.u32 %v3099, 2147483648
    %v3115 = vmul.f32 %v3114, 1.442695
    %v3116 = vpow.pop %v3115
    %v3117 = vadd.f32 %v3116, 1.0
    %v3118 = vrcp.pop %v3117
    %v3119 = vmul.f32 1.0, %v3118
    %v3120 = vmul.f32 %v3112, %v2781
    %v3121 = vmul.f32 %v3106, %v3113
    %v3122 = vadd.f32 %v3120, %v3121
    %v3123 = vtanh.pop %v3122
    %v3124 = vmul.f32 %v3119, %v3123
    %v3125 = vld [vmem:[%s6] sm:$0x1]
    %v3127 = vlaneseq
    %v3128 = vshrl.u32 %v3127, 7
    %v3129 = vsub.s32 0, %v3128
    %v3130 = vrot.slane %v3125, %v3129
    %v3132 = vmul.f32 %v3124, %v3130
    %3133 = vadd.xlane.f32.xlu0 %v3132
    %v3134 = vpop.xlane.xlu0 %3133
    %v3135 = vld [vmem:[#allocation3] sm:$0x1]
    %v3137 = vlaneseq
    %v3138 = vshrl.u32 %v3137, 7
    %v3139 = vsub.s32 0, %v3138
    %v3140 = vrot.slane %v3135, %v3139
    %v3142 = vadd.f32 %v3134, %v3140
    %vm3143 = vcmask 7168
    %3144 = vst.msk [vmem:[%s8] sm:$0xff] %vm3143, %v3142
    // Predicated region
    $region42: #{lstm_model_forward.1} parent=1 // pred_check
      _
    $region43: #{lstm_model_forward.1} parent=1 // pred_check_branch
      %3146 = sbr.rel (0) target = $region45
    $region44: #{lstm_model_forward.1} parent=1 // pred_region
      _
    $region45: #{lstm_model_forward.1} parent=1 // pred_fallthru
      _
    // Predicated region
    $region46: #{lstm_model_forward.1} parent=1 // pred_check
      _
    $region47: #{lstm_model_forward.1} parent=1 // pred_check_branch
      %3148 = sbr.rel (0) target = $region49
    $region48: #{lstm_model_forward.1} parent=1 // pred_region
      _
    $region49: #{lstm_model_forward.1} parent=1 // pred_fallthru
      _
    %3149 = vsyncpa [#allocation5], 1
    %3150 = vsyncpa [#allocation7], 1

</llo_original>
